<compile_context>
chip_gen: v7x
topology: tpu7x:2x2x1
jax: 0.10.0
libtpu: 0.0.40
codegen_flags: <defaults>
</compile_context>

<pallas_src>
import functools
import math

import jax
import jax.numpy as jnp
from jax import lax
from jax.experimental import pallas as pl
from jax.experimental.pallas import tpu as pltpu

# ----------------------------- config (small, synthetic) ---------------------
VOCAB = 100     # vocab size
B = 2           # batch
S = 8           # sequence length
H = 32          # hidden size
NH = 2          # attention heads
DH = H // NH    # head dim
FF = 64         # intermediate (FFN) size
L = 2           # number of encoder layers
C = 2           # num_labels = 2
MAX_POS = 16    # max position embeddings
LN_EPS = 1e-12  # BERT layernorm eps


class Attributes(object):
    """Wrapper class containing information about the classifier output."""

    def __init__(self, logits=None, loss=None, hidden_states=None, attentions=None):
        self.logits = logits
        self.loss = loss
        self.hidden_states = hidden_states
        self.attentions = attentions


# ----------------------------- helpers ----------------------------------------
def _layernorm(x, gamma, beta, eps):
    mu = jnp.mean(x, axis=-1, keepdims=True)
    var = jnp.mean((x - mu) * (x - mu), axis=-1, keepdims=True)
    return (x - mu) * lax.rsqrt(var + eps) * gamma + beta


def _gelu_tanh(y):
    c = math.sqrt(2.0 / math.pi)
    return 0.5 * y * (1.0 + jnp.tanh(c * (y + 0.044715 * y * y * y)))


# ----------------------------- fused forward kernel ---------------------------
def fused_forward_kernel(x_ref, emb_g_ref, emb_b_ref,
                         wqkv_ref, bqkv_ref, wo_ref, bo_ref,
                         ln1_g_ref, ln1_b_ref, w1_ref, b1_ref,
                         w2_ref, b2_ref, ln2_g_ref, ln2_b_ref,
                         wp_ref, bp_ref, wc_ref, bc_ref, lbl_ref,
                         logits_ref, loss_ref, cls_ref, probs_ref,
                         *, scale, eps):
    """Whole BERT classifier forward in one kernel invocation.

    x:[B*S,H] f32; stacked per-layer weights indexed with static ints; label in
    SMEM.  Outputs: logits [B,C], loss [1,1], cls [B,H], probs [L*B*NH,S,S].
    """
    # --- embedding layernorm ---------------------------------------------------
    x = _layernorm(x_ref[...], emb_g_ref[...], emb_b_ref[...], eps)

    # --- encoder layers (static unroll, weights stay resident) -----------------
    for l in range(L):
        xb = x.astype(jnp.bfloat16)
        qkv = jnp.dot(xb, wqkv_ref[l],
                      preferred_element_type=jnp.float32) + bqkv_ref[l]
        q = qkv[:, 0:H]
        k = qkv[:, H:2 * H]
        v = qkv[:, 2 * H:3 * H]

        # per-(batch, head) attention, context assembled in registers
        ctx_rows = []
        for b in range(B):
            r0 = b * S
            head_ctx = []
            for h in range(NH):
                c0 = h * DH
                qh = q[r0:r0 + S, c0:c0 + DH].astype(jnp.bfloat16)
                kh = k[r0:r0 + S, c0:c0 + DH].astype(jnp.bfloat16)
                vh = v[r0:r0 + S, c0:c0 + DH].astype(jnp.bfloat16)
                s = lax.dot_general(qh, kh, (((1,), (1,)), ((), ())),
                                    preferred_element_type=jnp.float32) * scale
                m = jnp.max(s, axis=-1, keepdims=True)
                e = jnp.exp(s - m)
                prob = e * pl.reciprocal(jnp.sum(e, axis=-1, keepdims=True),
                                         approx=True)                  # [S, S]
                probs_ref[(l * B + b) * NH + h] = prob
                head_ctx.append(jnp.dot(prob.astype(jnp.bfloat16), vh,
                                        preferred_element_type=jnp.float32))
            ctx_rows.append(jnp.concatenate(head_ctx, axis=1))          # [S, H]
        ctx = jnp.concatenate(ctx_rows, axis=0)                         # [B*S, H]

        # output projection + residual + layernorm 1
        attn_out = jnp.dot(ctx.astype(jnp.bfloat16), wo_ref[l],
                           preferred_element_type=jnp.float32) + bo_ref[l]
        x1 = _layernorm(attn_out + x, ln1_g_ref[l], ln1_b_ref[l], eps)

        # feed-forward + residual + layernorm 2
        h1 = _gelu_tanh(jnp.dot(x1.astype(jnp.bfloat16), w1_ref[l],
                                preferred_element_type=jnp.float32) + b1_ref[l])
        h2 = jnp.dot(h1.astype(jnp.bfloat16), w2_ref[l],
                     preferred_element_type=jnp.float32) + b2_ref[l]
        x = _layernorm(h2 + x1, ln2_g_ref[l], ln2_b_ref[l], eps)

    # --- CLS rows of the final hidden state (== out[2][-1][:, 0]) --------------
    cls = jnp.concatenate([x[b * S:b * S + 1, :] for b in range(B)], axis=0)  # [B,H]
    cls_ref[...] = cls

    # --- pooler -> classifier -> mean CrossEntropy loss -------------------------
    pooled = jnp.tanh(jnp.dot(cls.astype(jnp.bfloat16), wp_ref[...],
                              preferred_element_type=jnp.float32) + bp_ref[...])
    logits = jnp.dot(pooled.astype(jnp.bfloat16), wc_ref[...],
                     preferred_element_type=jnp.float32) + bc_ref[...]   # [B, C]
    logits_ref[...] = logits

    m = jnp.max(logits, axis=-1, keepdims=True)
    lse = m + jnp.log(jnp.sum(jnp.exp(logits - m), axis=-1, keepdims=True))
    logp = logits - lse                                                  # [B, C]

    # one-hot from iota vs. SMEM label scalars
    iota_c = lax.broadcasted_iota(jnp.int32, (B, C), 1)
    iota_b = lax.broadcasted_iota(jnp.int32, (B, C), 0)
    onehot = jnp.zeros((B, C), jnp.float32)
    for b in range(B):
        sel = jnp.logical_and(iota_b == b, iota_c == lbl_ref[b])
        onehot = jnp.where(sel, 1.0, onehot)

    nll = -jnp.sum(onehot * logp, axis=-1, keepdims=True)                # [B, 1]
    loss_ref[...] = jnp.sum(nll, axis=0, keepdims=True) * (1.0 / B)      # [1, 1]


# ----------------------------- Pallas wrapper ----------------------------------
def _full_spec(shape):
    n = len(shape)
    return pl.BlockSpec(shape, lambda i: (0,) * n)


def fused_forward(x_emb, p, label):
    """x_emb: [B*S, H] f32, label: [B] int32 -> (logits, loss, cls, probs)."""
    M = x_emb.shape[0]
    kernel = functools.partial(fused_forward_kernel,
                               scale=1.0 / math.sqrt(DH), eps=LN_EPS)
    return pl.pallas_call(
        kernel,
        out_shape=(jax.ShapeDtypeStruct((B, C), jnp.float32),
                   jax.ShapeDtypeStruct((1, 1), jnp.float32),
                   jax.ShapeDtypeStruct((B, H), jnp.float32),
                   jax.ShapeDtypeStruct((L * B * NH, S, S), jnp.float32)),
        grid=(1,),
        in_specs=[
            _full_spec((M, H)),                       # x (post-embedding sum)
            _full_spec((1, H)), _full_spec((1, H)),   # emb LN gamma / beta
            _full_spec((L, H, 3 * H)),                # wqkv (bf16)
            _full_spec((L, 1, 3 * H)),                # bqkv
            _full_spec((L, H, H)),                    # wo   (bf16)
            _full_spec((L, 1, H)),                    # bo
            _full_spec((L, 1, H)), _full_spec((L, 1, H)),   # ln1 g/b
            _full_spec((L, H, FF)),                   # w1   (bf16)
            _full_spec((L, 1, FF)),                   # b1
            _full_spec((L, FF, H)),                   # w2   (bf16)
            _full_spec((L, 1, H)),                    # b2
            _full_spec((L, 1, H)), _full_spec((L, 1, H)),   # ln2 g/b
            _full_spec((H, H)), _full_spec((1, H)),   # pooler w (bf16) / b
            _full_spec((H, C)), _full_spec((1, C)),   # classifier w (bf16) / b
            pl.BlockSpec(memory_space=pltpu.MemorySpace.SMEM),  # label (B,) int32
        ],
        out_specs=(_full_spec((B, C)),
                   _full_spec((1, 1)),
                   _full_spec((B, H)),
                   _full_spec((L * B * NH, S, S))),
        compiler_params=pltpu.CompilerParams(dimension_semantics=("arbitrary",)),
    )(x_emb, p["emb_ln_g"], p["emb_ln_b"],
      p["wqkv"], p["bqkv"], p["wo"], p["bo"],
      p["ln1_g"], p["ln1_b"], p["w1"], p["b1"], p["w2"], p["b2"],
      p["ln2_g"], p["ln2_b"],
      p["wp"], p["bp"], p["wc"], p["bc"], label)


# ----------------------------- parameter init ---------------------------------
def init_params(key):
    keys = iter(jax.random.split(key, 64))

    def nrm(shape):
        return 0.02 * jax.random.normal(next(keys), shape, dtype=jnp.float32)

    wqkv, bqkv, wo, bo = [], [], [], []
    ln1_g, ln1_b, w1, b1 = [], [], [], []
    w2, b2, ln2_g, ln2_b = [], [], [], []
    for _ in range(L):
        wq, wk, wv = nrm((H, H)), nrm((H, H)), nrm((H, H))
        wqkv.append(jnp.concatenate([wq, wk, wv], axis=1))     # fused [H, 3H]
        bqkv.append(jnp.zeros((1, 3 * H), jnp.float32))
        wo.append(nrm((H, H)));  bo.append(jnp.zeros((1, H), jnp.float32))
        ln1_g.append(jnp.ones((1, H), jnp.float32))
        ln1_b.append(jnp.zeros((1, H), jnp.float32))
        w1.append(nrm((H, FF))); b1.append(jnp.zeros((1, FF), jnp.float32))
        w2.append(nrm((FF, H))); b2.append(jnp.zeros((1, H), jnp.float32))
        ln2_g.append(jnp.ones((1, H), jnp.float32))
        ln2_b.append(jnp.zeros((1, H), jnp.float32))

    return {
        "word_emb": nrm((VOCAB, H)),
        "pos_emb": nrm((MAX_POS, H)),
        "type_emb": nrm((2, H)),
        "emb_ln_g": jnp.ones((1, H), jnp.float32),
        "emb_ln_b": jnp.zeros((1, H), jnp.float32),
        # stacked per-layer weights; matmul operands stored bf16 (MXU-native)
        "wqkv": jnp.stack(wqkv).astype(jnp.bfloat16),
        "bqkv": jnp.stack(bqkv),
        "wo": jnp.stack(wo).astype(jnp.bfloat16),
        "bo": jnp.stack(bo),
        "ln1_g": jnp.stack(ln1_g), "ln1_b": jnp.stack(ln1_b),
        "w1": jnp.stack(w1).astype(jnp.bfloat16), "b1": jnp.stack(b1),
        "w2": jnp.stack(w2).astype(jnp.bfloat16), "b2": jnp.stack(b2),
        "ln2_g": jnp.stack(ln2_g), "ln2_b": jnp.stack(ln2_b),
        "wp": nrm((H, H)).astype(jnp.bfloat16),
        "bp": jnp.zeros((1, H), jnp.float32),
        "wc": nrm((H, C)).astype(jnp.bfloat16),
        "bc": jnp.zeros((1, C), jnp.float32),
    }


# ----------------------------- forward pass ------------------------------------
@jax.jit
def _forward(params, input_ids, label):
    b, s = input_ids.shape

    # embeddings (gather is XLA glue); LN + everything else is the fused kernel
    x = (params["word_emb"][input_ids]
         + params["pos_emb"][:s][None, :, :]
         + params["type_emb"][0][None, None, :])                 # [B, S, H]
    x = x.reshape(b * s, H)

    logits, loss, cls_hidden, probs = fused_forward(x, params,
                                                    label.astype(jnp.int32))
    probs = probs.reshape(L, B, NH, S, S)
    attentions = [probs[l] for l in range(L)]
    return logits, loss[0, 0], cls_hidden, attentions


def classifier_forward(params, input_ids, label):
    logits, loss, cls_hidden, attentions = _forward(params, input_ids, label)
    return Attributes(logits=logits, loss=loss,
                      hidden_states=cls_hidden, attentions=attentions)


# ----------------------------- main ---------------------------------------------
if __name__ == "__main__":
    root = jax.random.PRNGKey(0)
    k_params, k_ids = jax.random.split(root, 2)

    params = init_params(k_params)
    input_ids = jax.random.randint(k_ids, (B, S), 0, VOCAB, dtype=jnp.int32)
    label = jnp.array([1, 0], dtype=jnp.int32)

    out = classifier_forward(params, input_ids, label)
    jax.block_until_ready((out.logits, out.loss, out.hidden_states, out.attentions))

    assert out.logits.shape == (B, C)
    assert out.loss.shape == ()
    assert out.hidden_states.shape == (B, H)
    assert len(out.attentions) == L and out.attentions[0].shape == (B, NH, S, S)
    assert bool(jnp.isfinite(out.loss))
    print("KERNEL_OK")
</pallas_src>

<mosaic_0001>
module attributes {stable_mosaic.version = 11 : i64} {
  func.func @fused_forward_kernel(%arg0: i32, %arg1: memref<16x32xf32, #tpu.memory_space<vmem>>, %arg2: memref<1x32xf32, #tpu.memory_space<vmem>>, %arg3: memref<1x32xf32, #tpu.memory_space<vmem>>, %arg4: memref<2x32x96xbf16, #tpu.memory_space<vmem>>, %arg5: memref<2x1x96xf32, #tpu.memory_space<vmem>>, %arg6: memref<2x32x32xbf16, #tpu.memory_space<vmem>>, %arg7: memref<2x1x32xf32, #tpu.memory_space<vmem>>, %arg8: memref<2x1x32xf32, #tpu.memory_space<vmem>>, %arg9: memref<2x1x32xf32, #tpu.memory_space<vmem>>, %arg10: memref<2x32x64xbf16, #tpu.memory_space<vmem>>, %arg11: memref<2x1x64xf32, #tpu.memory_space<vmem>>, %arg12: memref<2x64x32xbf16, #tpu.memory_space<vmem>>, %arg13: memref<2x1x32xf32, #tpu.memory_space<vmem>>, %arg14: memref<2x1x32xf32, #tpu.memory_space<vmem>>, %arg15: memref<2x1x32xf32, #tpu.memory_space<vmem>>, %arg16: memref<32x32xbf16, #tpu.memory_space<vmem>>, %arg17: memref<1x32xf32, #tpu.memory_space<vmem>>, %arg18: memref<32x2xbf16, #tpu.memory_space<vmem>>, %arg19: memref<1x2xf32, #tpu.memory_space<vmem>>, %arg20: memref<2xi32, #tpu.memory_space<smem>>, %arg21: memref<2x2xf32, #tpu.memory_space<vmem>>, %arg22: memref<1x1xf32, #tpu.memory_space<vmem>>, %arg23: memref<2x32xf32, #tpu.memory_space<vmem>>, %arg24: memref<8x8x8xf32, #tpu.memory_space<vmem>>) attributes {dimension_semantics = [#tpu.dimension_semantics<arbitrary>], iteration_bounds = array<i64: 1>, scalar_prefetch = 0 : i64, scratch_operands = 0 : i64, tpu.core_type = #tpu.core_type<tc>, window_params = [{pipeline_mode = #tpu.pipeline_mode<synchronous>, transform_indices = @transform_0, window_bounds = array<i64: 16, 32>}, {pipeline_mode = #tpu.pipeline_mode<synchronous>, transform_indices = @transform_1, window_bounds = array<i64: 1, 32>}, {pipeline_mode = #tpu.pipeline_mode<synchronous>, transform_indices = @transform_2, window_bounds = array<i64: 1, 32>}, {pipeline_mode = #tpu.pipeline_mode<synchronous>, transform_indices = @transform_3, window_bounds = array<i64: 2, 32, 96>}, {pipeline_mode = #tpu.pipeline_mode<synchronous>, transform_indices = @transform_4, window_bounds = array<i64: 2, 1, 96>}, {pipeline_mode = #tpu.pipeline_mode<synchronous>, transform_indices = @transform_5, window_bounds = array<i64: 2, 32, 32>}, {pipeline_mode = #tpu.pipeline_mode<synchronous>, transform_indices = @transform_6, window_bounds = array<i64: 2, 1, 32>}, {pipeline_mode = #tpu.pipeline_mode<synchronous>, transform_indices = @transform_7, window_bounds = array<i64: 2, 1, 32>}, {pipeline_mode = #tpu.pipeline_mode<synchronous>, transform_indices = @transform_8, window_bounds = array<i64: 2, 1, 32>}, {pipeline_mode = #tpu.pipeline_mode<synchronous>, transform_indices = @transform_9, window_bounds = array<i64: 2, 32, 64>}, {pipeline_mode = #tpu.pipeline_mode<synchronous>, transform_indices = @transform_10, window_bounds = array<i64: 2, 1, 64>}, {pipeline_mode = #tpu.pipeline_mode<synchronous>, transform_indices = @transform_11, window_bounds = array<i64: 2, 64, 32>}, {pipeline_mode = #tpu.pipeline_mode<synchronous>, transform_indices = @transform_12, window_bounds = array<i64: 2, 1, 32>}, {pipeline_mode = #tpu.pipeline_mode<synchronous>, transform_indices = @transform_13, window_bounds = array<i64: 2, 1, 32>}, {pipeline_mode = #tpu.pipeline_mode<synchronous>, transform_indices = @transform_14, window_bounds = array<i64: 2, 1, 32>}, {pipeline_mode = #tpu.pipeline_mode<synchronous>, transform_indices = @transform_15, window_bounds = array<i64: 32, 32>}, {pipeline_mode = #tpu.pipeline_mode<synchronous>, transform_indices = @transform_16, window_bounds = array<i64: 1, 32>}, {pipeline_mode = #tpu.pipeline_mode<synchronous>, transform_indices = @transform_17, window_bounds = array<i64: 32, 2>}, {pipeline_mode = #tpu.pipeline_mode<synchronous>, transform_indices = @transform_18, window_bounds = array<i64: 1, 2>}, {transform_indices = @transform_19, window_bounds = array<i64: 2>}, {pipeline_mode = #tpu.pipeline_mode<synchronous>, transform_indices = @transform_20, window_bounds = array<i64: 2, 2>}, {pipeline_mode = #tpu.pipeline_mode<synchronous>, transform_indices = @transform_21, window_bounds = array<i64: 1, 1>}, {pipeline_mode = #tpu.pipeline_mode<synchronous>, transform_indices = @transform_22, window_bounds = array<i64: 2, 32>}, {pipeline_mode = #tpu.pipeline_mode<synchronous>, transform_indices = @transform_23, window_bounds = array<i64: 8, 8, 8>}]} {
    %c0 = arith.constant 0 : index
    %c0_0 = arith.constant 0 : index
    %0 = vector.load %arg1[%c0, %c0_0] : memref<16x32xf32, #tpu.memory_space<vmem>>, vector<16x32xf32>
    %c0_1 = arith.constant 0 : index
    %c0_2 = arith.constant 0 : index
    %1 = vector.load %arg2[%c0_1, %c0_2] : memref<1x32xf32, #tpu.memory_space<vmem>>, vector<1x32xf32>
    %c0_3 = arith.constant 0 : index
    %c0_4 = arith.constant 0 : index
    %2 = vector.load %arg3[%c0_3, %c0_4] : memref<1x32xf32, #tpu.memory_space<vmem>>, vector<1x32xf32>
    %cst = arith.constant dense<0.000000e+00> : vector<16xf32>
    %3 = vector.multi_reduction <add>, %0, %cst [1] : vector<16x32xf32> to vector<16xf32>
    %4 = vector.shape_cast %3 : vector<16xf32> to vector<16x1xf32>
    %cst_5 = arith.constant 3.200000e+01 : f32
    %5 = vector.broadcast %cst_5 : f32 to vector<16x1xf32>
    %6 = arith.divf %4, %5 : vector<16x1xf32>
    %7 = vector.broadcast %6 : vector<16x1xf32> to vector<16x32xf32>
    %8 = arith.subf %0, %7 : vector<16x32xf32>
    %9 = vector.broadcast %6 : vector<16x1xf32> to vector<16x32xf32>
    %10 = arith.subf %0, %9 : vector<16x32xf32>
    %11 = arith.mulf %8, %10 : vector<16x32xf32>
    %cst_6 = arith.constant dense<0.000000e+00> : vector<16xf32>
    %12 = vector.multi_reduction <add>, %11, %cst_6 [1] : vector<16x32xf32> to vector<16xf32>
    %13 = vector.shape_cast %12 : vector<16xf32> to vector<16x1xf32>
    %cst_7 = arith.constant 3.200000e+01 : f32
    %14 = vector.broadcast %cst_7 : f32 to vector<16x1xf32>
    %15 = arith.divf %13, %14 : vector<16x1xf32>
    %16 = vector.broadcast %6 : vector<16x1xf32> to vector<16x32xf32>
    %17 = arith.subf %0, %16 : vector<16x32xf32>
    %cst_8 = arith.constant 9.99999996E-13 : f32
    %18 = vector.broadcast %cst_8 : f32 to vector<16x1xf32>
    %19 = arith.addf %15, %18 : vector<16x1xf32>
    %20 = math.rsqrt %19 : vector<16x1xf32>
    %21 = vector.broadcast %20 : vector<16x1xf32> to vector<16x32xf32>
    %22 = arith.mulf %17, %21 : vector<16x32xf32>
    %23 = vector.broadcast %1 : vector<1x32xf32> to vector<16x32xf32>
    %24 = arith.mulf %22, %23 : vector<16x32xf32>
    %25 = vector.broadcast %2 : vector<1x32xf32> to vector<16x32xf32>
    %26 = arith.addf %24, %25 : vector<16x32xf32>
    %27 = arith.truncf %26 : vector<16x32xf32> to vector<16x32xbf16>
    %c0_9 = arith.constant 0 : index
    %c0_10 = arith.constant 0 : index
    %c0_11 = arith.constant 0 : index
    %28 = vector.load %arg4[%c0_9, %c0_10, %c0_11] : memref<2x32x96xbf16, #tpu.memory_space<vmem>>, vector<1x32x96xbf16>
    %29 = vector.shape_cast %28 : vector<1x32x96xbf16> to vector<32x96xbf16>
    %cst_12 = arith.constant dense<0.000000e+00> : vector<16x96xf32>
    %30 = tpu.matmul %27, %29, %cst_12 {dimension_numbers = #tpu.dot_dimension_numbers<[1], [0], [0], [1], [0, 0, 1, 1], [], []>} : vector<16x32xbf16>, vector<32x96xbf16>, vector<16x96xf32> -> vector<16x96xf32>
    %c0_13 = arith.constant 0 : index
    %c0_14 = arith.constant 0 : index
    %c0_15 = arith.constant 0 : index
    %31 = vector.load %arg5[%c0_13, %c0_14, %c0_15] : memref<2x1x96xf32, #tpu.memory_space<vmem>>, vector<1x1x96xf32>
    %32 = vector.shape_cast %31 : vector<1x1x96xf32> to vector<1x96xf32>
    %33 = vector.broadcast %32 : vector<1x96xf32> to vector<16x96xf32>
    %34 = arith.addf %30, %33 : vector<16x96xf32>
    %35 = vector.extract_strided_slice %34 {offsets = [0, 0], sizes = [16, 32], strides = [1, 1]} : vector<16x96xf32> to vector<16x32xf32>
    %36 = vector.extract_strided_slice %34 {offsets = [0, 32], sizes = [16, 32], strides = [1, 1]} : vector<16x96xf32> to vector<16x32xf32>
    %37 = vector.extract_strided_slice %34 {offsets = [0, 64], sizes = [16, 32], strides = [1, 1]} : vector<16x96xf32> to vector<16x32xf32>
    %38 = vector.extract_strided_slice %35 {offsets = [0, 0], sizes = [8, 16], strides = [1, 1]} : vector<16x32xf32> to vector<8x16xf32>
    %39 = arith.truncf %38 : vector<8x16xf32> to vector<8x16xbf16>
    %40 = vector.extract_strided_slice %36 {offsets = [0, 0], sizes = [8, 16], strides = [1, 1]} : vector<16x32xf32> to vector<8x16xf32>
    %41 = arith.truncf %40 : vector<8x16xf32> to vector<8x16xbf16>
    %42 = vector.extract_strided_slice %37 {offsets = [0, 0], sizes = [8, 16], strides = [1, 1]} : vector<16x32xf32> to vector<8x16xf32>
    %43 = arith.truncf %42 : vector<8x16xf32> to vector<8x16xbf16>
    %cst_16 = arith.constant dense<0.000000e+00> : vector<8x8xf32>
    %44 = tpu.matmul %39, %41, %cst_16 {dimension_numbers = #tpu.dot_dimension_numbers<[1], [1], [0], [0], [0, 0, 1, 0], [], []>} : vector<8x16xbf16>, vector<8x16xbf16>, vector<8x8xf32> -> vector<8x8xf32>
    %cst_17 = arith.constant 2.500000e-01 : f32
    %45 = vector.broadcast %cst_17 : f32 to vector<8x8xf32>
    %46 = arith.mulf %44, %45 : vector<8x8xf32>
    %cst_18 = arith.constant dense<0xFF800000> : vector<8xf32>
    %47 = vector.multi_reduction <maximumf>, %46, %cst_18 [1] : vector<8x8xf32> to vector<8xf32>
    %48 = vector.shape_cast %47 : vector<8xf32> to vector<8x1xf32>
    %49 = vector.broadcast %48 : vector<8x1xf32> to vector<8x8xf32>
    %50 = arith.subf %46, %49 : vector<8x8xf32>
    %51 = math.exp %50 : vector<8x8xf32>
    %cst_19 = arith.constant dense<0.000000e+00> : vector<8xf32>
    %52 = vector.multi_reduction <add>, %51, %cst_19 [1] : vector<8x8xf32> to vector<8xf32>
    %53 = vector.shape_cast %52 : vector<8xf32> to vector<8x1xf32>
    %54 = tpu.reciprocal %53 {approx = true} : vector<8x1xf32> -> vector<8x1xf32>
    %55 = vector.broadcast %54 : vector<8x1xf32> to vector<8x8xf32>
    %56 = arith.mulf %51, %55 : vector<8x8xf32>
    %c0_20 = arith.constant 0 : index
    %c0_21 = arith.constant 0 : index
    %c0_22 = arith.constant 0 : index
    %57 = vector.load %arg24[%c0_20, %c0_21, %c0_22] : memref<8x8x8xf32, #tpu.memory_space<vmem>>, vector<1x8x8xf32>
    %58 = vector.shape_cast %57 : vector<1x8x8xf32> to vector<8x8xf32>
    %59 = vector.shape_cast %56 : vector<8x8xf32> to vector<1x8x8xf32>
    tpu.vector_store %arg24[%c0_20, %c0_21, %c0_22], %59 {strides = array<i32>} : memref<8x8x8xf32, #tpu.memory_space<vmem>>, vector<1x8x8xf32>,
    %60 = arith.truncf %56 : vector<8x8xf32> to vector<8x8xbf16>
    %cst_23 = arith.constant dense<0.000000e+00> : vector<8x16xf32>
    %61 = tpu.matmul %60, %43, %cst_23 {dimension_numbers = #tpu.dot_dimension_numbers<[1], [0], [0], [1], [0, 0, 1, 1], [], []>} : vector<8x8xbf16>, vector<8x16xbf16>, vector<8x16xf32> -> vector<8x16xf32>
    %62 = vector.extract_strided_slice %35 {offsets = [0, 16], sizes = [8, 16], strides = [1, 1]} : vector<16x32xf32> to vector<8x16xf32>
    %63 = arith.truncf %62 : vector<8x16xf32> to vector<8x16xbf16>
    %64 = vector.extract_strided_slice %36 {offsets = [0, 16], sizes = [8, 16], strides = [1, 1]} : vector<16x32xf32> to vector<8x16xf32>
    %65 = arith.truncf %64 : vector<8x16xf32> to vector<8x16xbf16>
    %66 = vector.extract_strided_slice %37 {offsets = [0, 16], sizes = [8, 16], strides = [1, 1]} : vector<16x32xf32> to vector<8x16xf32>
    %67 = arith.truncf %66 : vector<8x16xf32> to vector<8x16xbf16>
    %cst_24 = arith.constant dense<0.000000e+00> : vector<8x8xf32>
    %68 = tpu.matmul %63, %65, %cst_24 {dimension_numbers = #tpu.dot_dimension_numbers<[1], [1], [0], [0], [0, 0, 1, 0], [], []>} : vector<8x16xbf16>, vector<8x16xbf16>, vector<8x8xf32> -> vector<8x8xf32>
    %cst_25 = arith.constant 2.500000e-01 : f32
    %69 = vector.broadcast %cst_25 : f32 to vector<8x8xf32>
    %70 = arith.mulf %68, %69 : vector<8x8xf32>
    %cst_26 = arith.constant dense<0xFF800000> : vector<8xf32>
    %71 = vector.multi_reduction <maximumf>, %70, %cst_26 [1] : vector<8x8xf32> to vector<8xf32>
    %72 = vector.shape_cast %71 : vector<8xf32> to vector<8x1xf32>
    %73 = vector.broadcast %72 : vector<8x1xf32> to vector<8x8xf32>
    %74 = arith.subf %70, %73 : vector<8x8xf32>
    %75 = math.exp %74 : vector<8x8xf32>
    %cst_27 = arith.constant dense<0.000000e+00> : vector<8xf32>
    %76 = vector.multi_reduction <add>, %75, %cst_27 [1] : vector<8x8xf32> to vector<8xf32>
    %77 = vector.shape_cast %76 : vector<8xf32> to vector<8x1xf32>
    %78 = tpu.reciprocal %77 {approx = true} : vector<8x1xf32> -> vector<8x1xf32>
    %79 = vector.broadcast %78 : vector<8x1xf32> to vector<8x8xf32>
    %80 = arith.mulf %75, %79 : vector<8x8xf32>
    %c1 = arith.constant 1 : index
    %c0_28 = arith.constant 0 : index
    %c0_29 = arith.constant 0 : index
    %81 = vector.load %arg24[%c1, %c0_28, %c0_29] : memref<8x8x8xf32, #tpu.memory_space<vmem>>, vector<1x8x8xf32>
    %82 = vector.shape_cast %81 : vector<1x8x8xf32> to vector<8x8xf32>
    %83 = vector.shape_cast %80 : vector<8x8xf32> to vector<1x8x8xf32>
    tpu.vector_store %arg24[%c1, %c0_28, %c0_29], %83 {strides = array<i32>} : memref<8x8x8xf32, #tpu.memory_space<vmem>>, vector<1x8x8xf32>,
    %84 = arith.truncf %80 : vector<8x8xf32> to vector<8x8xbf16>
    %cst_30 = arith.constant dense<0.000000e+00> : vector<8x16xf32>
    %85 = tpu.matmul %84, %67, %cst_30 {dimension_numbers = #tpu.dot_dimension_numbers<[1], [0], [0], [1], [0, 0, 1, 1], [], []>} : vector<8x8xbf16>, vector<8x16xbf16>, vector<8x16xf32> -> vector<8x16xf32>
    %86 = tpu.concatenate %61, %85 in 1 : vector<8x16xf32>, vector<8x16xf32> -> vector<8x32xf32>
    %87 = vector.extract_strided_slice %35 {offsets = [8, 0], sizes = [8, 16], strides = [1, 1]} : vector<16x32xf32> to vector<8x16xf32>
    %88 = arith.truncf %87 : vector<8x16xf32> to vector<8x16xbf16>
    %89 = vector.extract_strided_slice %36 {offsets = [8, 0], sizes = [8, 16], strides = [1, 1]} : vector<16x32xf32> to vector<8x16xf32>
    %90 = arith.truncf %89 : vector<8x16xf32> to vector<8x16xbf16>
    %91 = vector.extract_strided_slice %37 {offsets = [8, 0], sizes = [8, 16], strides = [1, 1]} : vector<16x32xf32> to vector<8x16xf32>
    %92 = arith.truncf %91 : vector<8x16xf32> to vector<8x16xbf16>
    %cst_31 = arith.constant dense<0.000000e+00> : vector<8x8xf32>
    %93 = tpu.matmul %88, %90, %cst_31 {dimension_numbers = #tpu.dot_dimension_numbers<[1], [1], [0], [0], [0, 0, 1, 0], [], []>} : vector<8x16xbf16>, vector<8x16xbf16>, vector<8x8xf32> -> vector<8x8xf32>
    %cst_32 = arith.constant 2.500000e-01 : f32
    %94 = vector.broadcast %cst_32 : f32 to vector<8x8xf32>
    %95 = arith.mulf %93, %94 : vector<8x8xf32>
    %cst_33 = arith.constant dense<0xFF800000> : vector<8xf32>
    %96 = vector.multi_reduction <maximumf>, %95, %cst_33 [1] : vector<8x8xf32> to vector<8xf32>
    %97 = vector.shape_cast %96 : vector<8xf32> to vector<8x1xf32>
    %98 = vector.broadcast %97 : vector<8x1xf32> to vector<8x8xf32>
    %99 = arith.subf %95, %98 : vector<8x8xf32>
    %100 = math.exp %99 : vector<8x8xf32>
    %cst_34 = arith.constant dense<0.000000e+00> : vector<8xf32>
    %101 = vector.multi_reduction <add>, %100, %cst_34 [1] : vector<8x8xf32> to vector<8xf32>
    %102 = vector.shape_cast %101 : vector<8xf32> to vector<8x1xf32>
    %103 = tpu.reciprocal %102 {approx = true} : vector<8x1xf32> -> vector<8x1xf32>
    %104 = vector.broadcast %103 : vector<8x1xf32> to vector<8x8xf32>
    %105 = arith.mulf %100, %104 : vector<8x8xf32>
    %c2 = arith.constant 2 : index
    %c0_35 = arith.constant 0 : index
    %c0_36 = arith.constant 0 : index
    %106 = vector.load %arg24[%c2, %c0_35, %c0_36] : memref<8x8x8xf32, #tpu.memory_space<vmem>>, vector<1x8x8xf32>
    %107 = vector.shape_cast %106 : vector<1x8x8xf32> to vector<8x8xf32>
    %108 = vector.shape_cast %105 : vector<8x8xf32> to vector<1x8x8xf32>
    tpu.vector_store %arg24[%c2, %c0_35, %c0_36], %108 {strides = array<i32>} : memref<8x8x8xf32, #tpu.memory_space<vmem>>, vector<1x8x8xf32>,
    %109 = arith.truncf %105 : vector<8x8xf32> to vector<8x8xbf16>
    %cst_37 = arith.constant dense<0.000000e+00> : vector<8x16xf32>
    %110 = tpu.matmul %109, %92, %cst_37 {dimension_numbers = #tpu.dot_dimension_numbers<[1], [0], [0], [1], [0, 0, 1, 1], [], []>} : vector<8x8xbf16>, vector<8x16xbf16>, vector<8x16xf32> -> vector<8x16xf32>
    %111 = vector.extract_strided_slice %35 {offsets = [8, 16], sizes = [8, 16], strides = [1, 1]} : vector<16x32xf32> to vector<8x16xf32>
    %112 = arith.truncf %111 : vector<8x16xf32> to vector<8x16xbf16>
    %113 = vector.extract_strided_slice %36 {offsets = [8, 16], sizes = [8, 16], strides = [1, 1]} : vector<16x32xf32> to vector<8x16xf32>
    %114 = arith.truncf %113 : vector<8x16xf32> to vector<8x16xbf16>
    %115 = vector.extract_strided_slice %37 {offsets = [8, 16], sizes = [8, 16], strides = [1, 1]} : vector<16x32xf32> to vector<8x16xf32>
    %116 = arith.truncf %115 : vector<8x16xf32> to vector<8x16xbf16>
    %cst_38 = arith.constant dense<0.000000e+00> : vector<8x8xf32>
    %117 = tpu.matmul %112, %114, %cst_38 {dimension_numbers = #tpu.dot_dimension_numbers<[1], [1], [0], [0], [0, 0, 1, 0], [], []>} : vector<8x16xbf16>, vector<8x16xbf16>, vector<8x8xf32> -> vector<8x8xf32>
    %cst_39 = arith.constant 2.500000e-01 : f32
    %118 = vector.broadcast %cst_39 : f32 to vector<8x8xf32>
    %119 = arith.mulf %117, %118 : vector<8x8xf32>
    %cst_40 = arith.constant dense<0xFF800000> : vector<8xf32>
    %120 = vector.multi_reduction <maximumf>, %119, %cst_40 [1] : vector<8x8xf32> to vector<8xf32>
    %121 = vector.shape_cast %120 : vector<8xf32> to vector<8x1xf32>
    %122 = vector.broadcast %121 : vector<8x1xf32> to vector<8x8xf32>
    %123 = arith.subf %119, %122 : vector<8x8xf32>
    %124 = math.exp %123 : vector<8x8xf32>
    %cst_41 = arith.constant dense<0.000000e+00> : vector<8xf32>
    %125 = vector.multi_reduction <add>, %124, %cst_41 [1] : vector<8x8xf32> to vector<8xf32>
    %126 = vector.shape_cast %125 : vector<8xf32> to vector<8x1xf32>
    %127 = tpu.reciprocal %126 {approx = true} : vector<8x1xf32> -> vector<8x1xf32>
    %128 = vector.broadcast %127 : vector<8x1xf32> to vector<8x8xf32>
    %129 = arith.mulf %124, %128 : vector<8x8xf32>
    %c3 = arith.constant 3 : index
    %c0_42 = arith.constant 0 : index
    %c0_43 = arith.constant 0 : index
    %130 = vector.load %arg24[%c3, %c0_42, %c0_43] : memref<8x8x8xf32, #tpu.memory_space<vmem>>, vector<1x8x8xf32>
    %131 = vector.shape_cast %130 : vector<1x8x8xf32> to vector<8x8xf32>
    %132 = vector.shape_cast %129 : vector<8x8xf32> to vector<1x8x8xf32>
    tpu.vector_store %arg24[%c3, %c0_42, %c0_43], %132 {strides = array<i32>} : memref<8x8x8xf32, #tpu.memory_space<vmem>>, vector<1x8x8xf32>,
    %133 = arith.truncf %129 : vector<8x8xf32> to vector<8x8xbf16>
    %cst_44 = arith.constant dense<0.000000e+00> : vector<8x16xf32>
    %134 = tpu.matmul %133, %116, %cst_44 {dimension_numbers = #tpu.dot_dimension_numbers<[1], [0], [0], [1], [0, 0, 1, 1], [], []>} : vector<8x8xbf16>, vector<8x16xbf16>, vector<8x16xf32> -> vector<8x16xf32>
    %135 = tpu.concatenate %110, %134 in 1 : vector<8x16xf32>, vector<8x16xf32> -> vector<8x32xf32>
    %136 = tpu.concatenate %86, %135 in 0 : vector<8x32xf32>, vector<8x32xf32> -> vector<16x32xf32>
    %137 = arith.truncf %136 : vector<16x32xf32> to vector<16x32xbf16>
    %c0_45 = arith.constant 0 : index
    %c0_46 = arith.constant 0 : index
    %c0_47 = arith.constant 0 : index
    %138 = vector.load %arg6[%c0_45, %c0_46, %c0_47] : memref<2x32x32xbf16, #tpu.memory_space<vmem>>, vector<1x32x32xbf16>
    %139 = vector.shape_cast %138 : vector<1x32x32xbf16> to vector<32x32xbf16>
    %cst_48 = arith.constant dense<0.000000e+00> : vector<16x32xf32>
    %140 = tpu.matmul %137, %139, %cst_48 {dimension_numbers = #tpu.dot_dimension_numbers<[1], [0], [0], [1], [0, 0, 1, 1], [], []>} : vector<16x32xbf16>, vector<32x32xbf16>, vector<16x32xf32> -> vector<16x32xf32>
    %c0_49 = arith.constant 0 : index
    %c0_50 = arith.constant 0 : index
    %c0_51 = arith.constant 0 : index
    %141 = vector.load %arg7[%c0_49, %c0_50, %c0_51] : memref<2x1x32xf32, #tpu.memory_space<vmem>>, vector<1x1x32xf32>
    %142 = vector.shape_cast %141 : vector<1x1x32xf32> to vector<1x32xf32>
    %143 = vector.broadcast %142 : vector<1x32xf32> to vector<16x32xf32>
    %144 = arith.addf %140, %143 : vector<16x32xf32>
    %145 = arith.addf %144, %26 : vector<16x32xf32>
    %c0_52 = arith.constant 0 : index
    %c0_53 = arith.constant 0 : index
    %c0_54 = arith.constant 0 : index
    %146 = vector.load %arg8[%c0_52, %c0_53, %c0_54] : memref<2x1x32xf32, #tpu.memory_space<vmem>>, vector<1x1x32xf32>
    %147 = vector.shape_cast %146 : vector<1x1x32xf32> to vector<1x32xf32>
    %c0_55 = arith.constant 0 : index
    %c0_56 = arith.constant 0 : index
    %c0_57 = arith.constant 0 : index
    %148 = vector.load %arg9[%c0_55, %c0_56, %c0_57] : memref<2x1x32xf32, #tpu.memory_space<vmem>>, vector<1x1x32xf32>
    %149 = vector.shape_cast %148 : vector<1x1x32xf32> to vector<1x32xf32>
    %cst_58 = arith.constant dense<0.000000e+00> : vector<16xf32>
    %150 = vector.multi_reduction <add>, %145, %cst_58 [1] : vector<16x32xf32> to vector<16xf32>
    %151 = vector.shape_cast %150 : vector<16xf32> to vector<16x1xf32>
    %cst_59 = arith.constant 3.200000e+01 : f32
    %152 = vector.broadcast %cst_59 : f32 to vector<16x1xf32>
    %153 = arith.divf %151, %152 : vector<16x1xf32>
    %154 = vector.broadcast %153 : vector<16x1xf32> to vector<16x32xf32>
    %155 = arith.subf %145, %154 : vector<16x32xf32>
    %156 = vector.broadcast %153 : vector<16x1xf32> to vector<16x32xf32>
    %157 = arith.subf %145, %156 : vector<16x32xf32>
    %158 = arith.mulf %155, %157 : vector<16x32xf32>
    %cst_60 = arith.constant dense<0.000000e+00> : vector<16xf32>
    %159 = vector.multi_reduction <add>, %158, %cst_60 [1] : vector<16x32xf32> to vector<16xf32>
    %160 = vector.shape_cast %159 : vector<16xf32> to vector<16x1xf32>
    %cst_61 = arith.constant 3.200000e+01 : f32
    %161 = vector.broadcast %cst_61 : f32 to vector<16x1xf32>
    %162 = arith.divf %160, %161 : vector<16x1xf32>
    %163 = vector.broadcast %153 : vector<16x1xf32> to vector<16x32xf32>
    %164 = arith.subf %145, %163 : vector<16x32xf32>
    %cst_62 = arith.constant 9.99999996E-13 : f32
    %165 = vector.broadcast %cst_62 : f32 to vector<16x1xf32>
    %166 = arith.addf %162, %165 : vector<16x1xf32>
    %167 = math.rsqrt %166 : vector<16x1xf32>
    %168 = vector.broadcast %167 : vector<16x1xf32> to vector<16x32xf32>
    %169 = arith.mulf %164, %168 : vector<16x32xf32>
    %170 = vector.broadcast %147 : vector<1x32xf32> to vector<16x32xf32>
    %171 = arith.mulf %169, %170 : vector<16x32xf32>
    %172 = vector.broadcast %149 : vector<1x32xf32> to vector<16x32xf32>
    %173 = arith.addf %171, %172 : vector<16x32xf32>
    %174 = arith.truncf %173 : vector<16x32xf32> to vector<16x32xbf16>
    %c0_63 = arith.constant 0 : index
    %c0_64 = arith.constant 0 : index
    %c0_65 = arith.constant 0 : index
    %175 = vector.load %arg10[%c0_63, %c0_64, %c0_65] : memref<2x32x64xbf16, #tpu.memory_space<vmem>>, vector<1x32x64xbf16>
    %176 = vector.shape_cast %175 : vector<1x32x64xbf16> to vector<32x64xbf16>
    %cst_66 = arith.constant dense<0.000000e+00> : vector<16x64xf32>
    %177 = tpu.matmul %174, %176, %cst_66 {dimension_numbers = #tpu.dot_dimension_numbers<[1], [0], [0], [1], [0, 0, 1, 1], [], []>} : vector<16x32xbf16>, vector<32x64xbf16>, vector<16x64xf32> -> vector<16x64xf32>
    %c0_67 = arith.constant 0 : index
    %c0_68 = arith.constant 0 : index
    %c0_69 = arith.constant 0 : index
    %178 = vector.load %arg11[%c0_67, %c0_68, %c0_69] : memref<2x1x64xf32, #tpu.memory_space<vmem>>, vector<1x1x64xf32>
    %179 = vector.shape_cast %178 : vector<1x1x64xf32> to vector<1x64xf32>
    %180 = vector.broadcast %179 : vector<1x64xf32> to vector<16x64xf32>
    %181 = arith.addf %177, %180 : vector<16x64xf32>
    %cst_70 = arith.constant 5.000000e-01 : f32
    %182 = vector.broadcast %cst_70 : f32 to vector<16x64xf32>
    %183 = arith.mulf %182, %181 : vector<16x64xf32>
    %cst_71 = arith.constant 4.471500e-02 : f32
    %184 = vector.broadcast %cst_71 : f32 to vector<16x64xf32>
    %185 = arith.mulf %184, %181 : vector<16x64xf32>
    %186 = arith.mulf %185, %181 : vector<16x64xf32>
    %187 = arith.mulf %186, %181 : vector<16x64xf32>
    %188 = arith.addf %181, %187 : vector<16x64xf32>
    %cst_72 = arith.constant 0.797884583 : f32
    %189 = vector.broadcast %cst_72 : f32 to vector<16x64xf32>
    %190 = arith.mulf %189, %188 : vector<16x64xf32>
    %191 = math.tanh %190 : vector<16x64xf32>
    %cst_73 = arith.constant 1.000000e+00 : f32
    %192 = vector.broadcast %cst_73 : f32 to vector<16x64xf32>
    %193 = arith.addf %192, %191 : vector<16x64xf32>
    %194 = arith.mulf %183, %193 : vector<16x64xf32>
    %195 = arith.truncf %194 : vector<16x64xf32> to vector<16x64xbf16>
    %c0_74 = arith.constant 0 : index
    %c0_75 = arith.constant 0 : index
    %c0_76 = arith.constant 0 : index
    %196 = vector.load %arg12[%c0_74, %c0_75, %c0_76] : memref<2x64x32xbf16, #tpu.memory_space<vmem>>, vector<1x64x32xbf16>
    %197 = vector.shape_cast %196 : vector<1x64x32xbf16> to vector<64x32xbf16>
    %cst_77 = arith.constant dense<0.000000e+00> : vector<16x32xf32>
    %198 = tpu.matmul %195, %197, %cst_77 {dimension_numbers = #tpu.dot_dimension_numbers<[1], [0], [0], [1], [0, 0, 1, 1], [], []>} : vector<16x64xbf16>, vector<64x32xbf16>, vector<16x32xf32> -> vector<16x32xf32>
    %c0_78 = arith.constant 0 : index
    %c0_79 = arith.constant 0 : index
    %c0_80 = arith.constant 0 : index
    %199 = vector.load %arg13[%c0_78, %c0_79, %c0_80] : memref<2x1x32xf32, #tpu.memory_space<vmem>>, vector<1x1x32xf32>
    %200 = vector.shape_cast %199 : vector<1x1x32xf32> to vector<1x32xf32>
    %201 = vector.broadcast %200 : vector<1x32xf32> to vector<16x32xf32>
    %202 = arith.addf %198, %201 : vector<16x32xf32>
    %203 = arith.addf %202, %173 : vector<16x32xf32>
    %c0_81 = arith.constant 0 : index
    %c0_82 = arith.constant 0 : index
    %c0_83 = arith.constant 0 : index
    %204 = vector.load %arg14[%c0_81, %c0_82, %c0_83] : memref<2x1x32xf32, #tpu.memory_space<vmem>>, vector<1x1x32xf32>
    %205 = vector.shape_cast %204 : vector<1x1x32xf32> to vector<1x32xf32>
    %c0_84 = arith.constant 0 : index
    %c0_85 = arith.constant 0 : index
    %c0_86 = arith.constant 0 : index
    %206 = vector.load %arg15[%c0_84, %c0_85, %c0_86] : memref<2x1x32xf32, #tpu.memory_space<vmem>>, vector<1x1x32xf32>
    %207 = vector.shape_cast %206 : vector<1x1x32xf32> to vector<1x32xf32>
    %cst_87 = arith.constant dense<0.000000e+00> : vector<16xf32>
    %208 = vector.multi_reduction <add>, %203, %cst_87 [1] : vector<16x32xf32> to vector<16xf32>
    %209 = vector.shape_cast %208 : vector<16xf32> to vector<16x1xf32>
    %cst_88 = arith.constant 3.200000e+01 : f32
    %210 = vector.broadcast %cst_88 : f32 to vector<16x1xf32>
    %211 = arith.divf %209, %210 : vector<16x1xf32>
    %212 = vector.broadcast %211 : vector<16x1xf32> to vector<16x32xf32>
    %213 = arith.subf %203, %212 : vector<16x32xf32>
    %214 = vector.broadcast %211 : vector<16x1xf32> to vector<16x32xf32>
    %215 = arith.subf %203, %214 : vector<16x32xf32>
    %216 = arith.mulf %213, %215 : vector<16x32xf32>
    %cst_89 = arith.constant dense<0.000000e+00> : vector<16xf32>
    %217 = vector.multi_reduction <add>, %216, %cst_89 [1] : vector<16x32xf32> to vector<16xf32>
    %218 = vector.shape_cast %217 : vector<16xf32> to vector<16x1xf32>
    %cst_90 = arith.constant 3.200000e+01 : f32
    %219 = vector.broadcast %cst_90 : f32 to vector<16x1xf32>
    %220 = arith.divf %218, %219 : vector<16x1xf32>
    %221 = vector.broadcast %211 : vector<16x1xf32> to vector<16x32xf32>
    %222 = arith.subf %203, %221 : vector<16x32xf32>
    %cst_91 = arith.constant 9.99999996E-13 : f32
    %223 = vector.broadcast %cst_91 : f32 to vector<16x1xf32>
    %224 = arith.addf %220, %223 : vector<16x1xf32>
    %225 = math.rsqrt %224 : vector<16x1xf32>
    %226 = vector.broadcast %225 : vector<16x1xf32> to vector<16x32xf32>
    %227 = arith.mulf %222, %226 : vector<16x32xf32>
    %228 = vector.broadcast %205 : vector<1x32xf32> to vector<16x32xf32>
    %229 = arith.mulf %227, %228 : vector<16x32xf32>
    %230 = vector.broadcast %207 : vector<1x32xf32> to vector<16x32xf32>
    %231 = arith.addf %229, %230 : vector<16x32xf32>
    %232 = arith.truncf %231 : vector<16x32xf32> to vector<16x32xbf16>
    %c1_92 = arith.constant 1 : index
    %c0_93 = arith.constant 0 : index
    %c0_94 = arith.constant 0 : index
    %233 = vector.load %arg4[%c1_92, %c0_93, %c0_94] : memref<2x32x96xbf16, #tpu.memory_space<vmem>>, vector<1x32x96xbf16>
    %234 = vector.shape_cast %233 : vector<1x32x96xbf16> to vector<32x96xbf16>
    %cst_95 = arith.constant dense<0.000000e+00> : vector<16x96xf32>
    %235 = tpu.matmul %232, %234, %cst_95 {dimension_numbers = #tpu.dot_dimension_numbers<[1], [0], [0], [1], [0, 0, 1, 1], [], []>} : vector<16x32xbf16>, vector<32x96xbf16>, vector<16x96xf32> -> vector<16x96xf32>
    %c1_96 = arith.constant 1 : index
    %c0_97 = arith.constant 0 : index
    %c0_98 = arith.constant 0 : index
    %236 = vector.load %arg5[%c1_96, %c0_97, %c0_98] : memref<2x1x96xf32, #tpu.memory_space<vmem>>, vector<1x1x96xf32>
    %237 = vector.shape_cast %236 : vector<1x1x96xf32> to vector<1x96xf32>
    %238 = vector.broadcast %237 : vector<1x96xf32> to vector<16x96xf32>
    %239 = arith.addf %235, %238 : vector<16x96xf32>
    %240 = vector.extract_strided_slice %239 {offsets = [0, 0], sizes = [16, 32], strides = [1, 1]} : vector<16x96xf32> to vector<16x32xf32>
    %241 = vector.extract_strided_slice %239 {offsets = [0, 32], sizes = [16, 32], strides = [1, 1]} : vector<16x96xf32> to vector<16x32xf32>
    %242 = vector.extract_strided_slice %239 {offsets = [0, 64], sizes = [16, 32], strides = [1, 1]} : vector<16x96xf32> to vector<16x32xf32>
    %243 = vector.extract_strided_slice %240 {offsets = [0, 0], sizes = [8, 16], strides = [1, 1]} : vector<16x32xf32> to vector<8x16xf32>
    %244 = arith.truncf %243 : vector<8x16xf32> to vector<8x16xbf16>
    %245 = vector.extract_strided_slice %241 {offsets = [0, 0], sizes = [8, 16], strides = [1, 1]} : vector<16x32xf32> to vector<8x16xf32>
    %246 = arith.truncf %245 : vector<8x16xf32> to vector<8x16xbf16>
    %247 = vector.extract_strided_slice %242 {offsets = [0, 0], sizes = [8, 16], strides = [1, 1]} : vector<16x32xf32> to vector<8x16xf32>
    %248 = arith.truncf %247 : vector<8x16xf32> to vector<8x16xbf16>
    %cst_99 = arith.constant dense<0.000000e+00> : vector<8x8xf32>
    %249 = tpu.matmul %244, %246, %cst_99 {dimension_numbers = #tpu.dot_dimension_numbers<[1], [1], [0], [0], [0, 0, 1, 0], [], []>} : vector<8x16xbf16>, vector<8x16xbf16>, vector<8x8xf32> -> vector<8x8xf32>
    %cst_100 = arith.constant 2.500000e-01 : f32
    %250 = vector.broadcast %cst_100 : f32 to vector<8x8xf32>
    %251 = arith.mulf %249, %250 : vector<8x8xf32>
    %cst_101 = arith.constant dense<0xFF800000> : vector<8xf32>
    %252 = vector.multi_reduction <maximumf>, %251, %cst_101 [1] : vector<8x8xf32> to vector<8xf32>
    %253 = vector.shape_cast %252 : vector<8xf32> to vector<8x1xf32>
    %254 = vector.broadcast %253 : vector<8x1xf32> to vector<8x8xf32>
    %255 = arith.subf %251, %254 : vector<8x8xf32>
    %256 = math.exp %255 : vector<8x8xf32>
    %cst_102 = arith.constant dense<0.000000e+00> : vector<8xf32>
    %257 = vector.multi_reduction <add>, %256, %cst_102 [1] : vector<8x8xf32> to vector<8xf32>
    %258 = vector.shape_cast %257 : vector<8xf32> to vector<8x1xf32>
    %259 = tpu.reciprocal %258 {approx = true} : vector<8x1xf32> -> vector<8x1xf32>
    %260 = vector.broadcast %259 : vector<8x1xf32> to vector<8x8xf32>
    %261 = arith.mulf %256, %260 : vector<8x8xf32>
    %c4 = arith.constant 4 : index
    %c0_103 = arith.constant 0 : index
    %c0_104 = arith.constant 0 : index
    %262 = vector.load %arg24[%c4, %c0_103, %c0_104] : memref<8x8x8xf32, #tpu.memory_space<vmem>>, vector<1x8x8xf32>
    %263 = vector.shape_cast %262 : vector<1x8x8xf32> to vector<8x8xf32>
    %264 = vector.shape_cast %261 : vector<8x8xf32> to vector<1x8x8xf32>
    tpu.vector_store %arg24[%c4, %c0_103, %c0_104], %264 {strides = array<i32>} : memref<8x8x8xf32, #tpu.memory_space<vmem>>, vector<1x8x8xf32>,
    %265 = arith.truncf %261 : vector<8x8xf32> to vector<8x8xbf16>
    %cst_105 = arith.constant dense<0.000000e+00> : vector<8x16xf32>
    %266 = tpu.matmul %265, %248, %cst_105 {dimension_numbers = #tpu.dot_dimension_numbers<[1], [0], [0], [1], [0, 0, 1, 1], [], []>} : vector<8x8xbf16>, vector<8x16xbf16>, vector<8x16xf32> -> vector<8x16xf32>
    %267 = vector.extract_strided_slice %240 {offsets = [0, 16], sizes = [8, 16], strides = [1, 1]} : vector<16x32xf32> to vector<8x16xf32>
    %268 = arith.truncf %267 : vector<8x16xf32> to vector<8x16xbf16>
    %269 = vector.extract_strided_slice %241 {offsets = [0, 16], sizes = [8, 16], strides = [1, 1]} : vector<16x32xf32> to vector<8x16xf32>
    %270 = arith.truncf %269 : vector<8x16xf32> to vector<8x16xbf16>
    %271 = vector.extract_strided_slice %242 {offsets = [0, 16], sizes = [8, 16], strides = [1, 1]} : vector<16x32xf32> to vector<8x16xf32>
    %272 = arith.truncf %271 : vector<8x16xf32> to vector<8x16xbf16>
    %cst_106 = arith.constant dense<0.000000e+00> : vector<8x8xf32>
    %273 = tpu.matmul %268, %270, %cst_106 {dimension_numbers = #tpu.dot_dimension_numbers<[1], [1], [0], [0], [0, 0, 1, 0], [], []>} : vector<8x16xbf16>, vector<8x16xbf16>, vector<8x8xf32> -> vector<8x8xf32>
    %cst_107 = arith.constant 2.500000e-01 : f32
    %274 = vector.broadcast %cst_107 : f32 to vector<8x8xf32>
    %275 = arith.mulf %273, %274 : vector<8x8xf32>
    %cst_108 = arith.constant dense<0xFF800000> : vector<8xf32>
    %276 = vector.multi_reduction <maximumf>, %275, %cst_108 [1] : vector<8x8xf32> to vector<8xf32>
    %277 = vector.shape_cast %276 : vector<8xf32> to vector<8x1xf32>
    %278 = vector.broadcast %277 : vector<8x1xf32> to vector<8x8xf32>
    %279 = arith.subf %275, %278 : vector<8x8xf32>
    %280 = math.exp %279 : vector<8x8xf32>
    %cst_109 = arith.constant dense<0.000000e+00> : vector<8xf32>
    %281 = vector.multi_reduction <add>, %280, %cst_109 [1] : vector<8x8xf32> to vector<8xf32>
    %282 = vector.shape_cast %281 : vector<8xf32> to vector<8x1xf32>
    %283 = tpu.reciprocal %282 {approx = true} : vector<8x1xf32> -> vector<8x1xf32>
    %284 = vector.broadcast %283 : vector<8x1xf32> to vector<8x8xf32>
    %285 = arith.mulf %280, %284 : vector<8x8xf32>
    %c5 = arith.constant 5 : index
    %c0_110 = arith.constant 0 : index
    %c0_111 = arith.constant 0 : index
    %286 = vector.load %arg24[%c5, %c0_110, %c0_111] : memref<8x8x8xf32, #tpu.memory_space<vmem>>, vector<1x8x8xf32>
    %287 = vector.shape_cast %286 : vector<1x8x8xf32> to vector<8x8xf32>
    %288 = vector.shape_cast %285 : vector<8x8xf32> to vector<1x8x8xf32>
    tpu.vector_store %arg24[%c5, %c0_110, %c0_111], %288 {strides = array<i32>} : memref<8x8x8xf32, #tpu.memory_space<vmem>>, vector<1x8x8xf32>,
    %289 = arith.truncf %285 : vector<8x8xf32> to vector<8x8xbf16>
    %cst_112 = arith.constant dense<0.000000e+00> : vector<8x16xf32>
    %290 = tpu.matmul %289, %272, %cst_112 {dimension_numbers = #tpu.dot_dimension_numbers<[1], [0], [0], [1], [0, 0, 1, 1], [], []>} : vector<8x8xbf16>, vector<8x16xbf16>, vector<8x16xf32> -> vector<8x16xf32>
    %291 = tpu.concatenate %266, %290 in 1 : vector<8x16xf32>, vector<8x16xf32> -> vector<8x32xf32>
    %292 = vector.extract_strided_slice %240 {offsets = [8, 0], sizes = [8, 16], strides = [1, 1]} : vector<16x32xf32> to vector<8x16xf32>
    %293 = arith.truncf %292 : vector<8x16xf32> to vector<8x16xbf16>
    %294 = vector.extract_strided_slice %241 {offsets = [8, 0], sizes = [8, 16], strides = [1, 1]} : vector<16x32xf32> to vector<8x16xf32>
    %295 = arith.truncf %294 : vector<8x16xf32> to vector<8x16xbf16>
    %296 = vector.extract_strided_slice %242 {offsets = [8, 0], sizes = [8, 16], strides = [1, 1]} : vector<16x32xf32> to vector<8x16xf32>
    %297 = arith.truncf %296 : vector<8x16xf32> to vector<8x16xbf16>
    %cst_113 = arith.constant dense<0.000000e+00> : vector<8x8xf32>
    %298 = tpu.matmul %293, %295, %cst_113 {dimension_numbers = #tpu.dot_dimension_numbers<[1], [1], [0], [0], [0, 0, 1, 0], [], []>} : vector<8x16xbf16>, vector<8x16xbf16>, vector<8x8xf32> -> vector<8x8xf32>
    %cst_114 = arith.constant 2.500000e-01 : f32
    %299 = vector.broadcast %cst_114 : f32 to vector<8x8xf32>
    %300 = arith.mulf %298, %299 : vector<8x8xf32>
    %cst_115 = arith.constant dense<0xFF800000> : vector<8xf32>
    %301 = vector.multi_reduction <maximumf>, %300, %cst_115 [1] : vector<8x8xf32> to vector<8xf32>
    %302 = vector.shape_cast %301 : vector<8xf32> to vector<8x1xf32>
    %303 = vector.broadcast %302 : vector<8x1xf32> to vector<8x8xf32>
    %304 = arith.subf %300, %303 : vector<8x8xf32>
    %305 = math.exp %304 : vector<8x8xf32>
    %cst_116 = arith.constant dense<0.000000e+00> : vector<8xf32>
    %306 = vector.multi_reduction <add>, %305, %cst_116 [1] : vector<8x8xf32> to vector<8xf32>
    %307 = vector.shape_cast %306 : vector<8xf32> to vector<8x1xf32>
    %308 = tpu.reciprocal %307 {approx = true} : vector<8x1xf32> -> vector<8x1xf32>
    %309 = vector.broadcast %308 : vector<8x1xf32> to vector<8x8xf32>
    %310 = arith.mulf %305, %309 : vector<8x8xf32>
    %c6 = arith.constant 6 : index
    %c0_117 = arith.constant 0 : index
    %c0_118 = arith.constant 0 : index
    %311 = vector.load %arg24[%c6, %c0_117, %c0_118] : memref<8x8x8xf32, #tpu.memory_space<vmem>>, vector<1x8x8xf32>
    %312 = vector.shape_cast %311 : vector<1x8x8xf32> to vector<8x8xf32>
    %313 = vector.shape_cast %310 : vector<8x8xf32> to vector<1x8x8xf32>
    tpu.vector_store %arg24[%c6, %c0_117, %c0_118], %313 {strides = array<i32>} : memref<8x8x8xf32, #tpu.memory_space<vmem>>, vector<1x8x8xf32>,
    %314 = arith.truncf %310 : vector<8x8xf32> to vector<8x8xbf16>
    %cst_119 = arith.constant dense<0.000000e+00> : vector<8x16xf32>
    %315 = tpu.matmul %314, %297, %cst_119 {dimension_numbers = #tpu.dot_dimension_numbers<[1], [0], [0], [1], [0, 0, 1, 1], [], []>} : vector<8x8xbf16>, vector<8x16xbf16>, vector<8x16xf32> -> vector<8x16xf32>
    %316 = vector.extract_strided_slice %240 {offsets = [8, 16], sizes = [8, 16], strides = [1, 1]} : vector<16x32xf32> to vector<8x16xf32>
    %317 = arith.truncf %316 : vector<8x16xf32> to vector<8x16xbf16>
    %318 = vector.extract_strided_slice %241 {offsets = [8, 16], sizes = [8, 16], strides = [1, 1]} : vector<16x32xf32> to vector<8x16xf32>
    %319 = arith.truncf %318 : vector<8x16xf32> to vector<8x16xbf16>
    %320 = vector.extract_strided_slice %242 {offsets = [8, 16], sizes = [8, 16], strides = [1, 1]} : vector<16x32xf32> to vector<8x16xf32>
    %321 = arith.truncf %320 : vector<8x16xf32> to vector<8x16xbf16>
    %cst_120 = arith.constant dense<0.000000e+00> : vector<8x8xf32>
    %322 = tpu.matmul %317, %319, %cst_120 {dimension_numbers = #tpu.dot_dimension_numbers<[1], [1], [0], [0], [0, 0, 1, 0], [], []>} : vector<8x16xbf16>, vector<8x16xbf16>, vector<8x8xf32> -> vector<8x8xf32>
    %cst_121 = arith.constant 2.500000e-01 : f32
    %323 = vector.broadcast %cst_121 : f32 to vector<8x8xf32>
    %324 = arith.mulf %322, %323 : vector<8x8xf32>
    %cst_122 = arith.constant dense<0xFF800000> : vector<8xf32>
    %325 = vector.multi_reduction <maximumf>, %324, %cst_122 [1] : vector<8x8xf32> to vector<8xf32>
    %326 = vector.shape_cast %325 : vector<8xf32> to vector<8x1xf32>
    %327 = vector.broadcast %326 : vector<8x1xf32> to vector<8x8xf32>
    %328 = arith.subf %324, %327 : vector<8x8xf32>
    %329 = math.exp %328 : vector<8x8xf32>
    %cst_123 = arith.constant dense<0.000000e+00> : vector<8xf32>
    %330 = vector.multi_reduction <add>, %329, %cst_123 [1] : vector<8x8xf32> to vector<8xf32>
    %331 = vector.shape_cast %330 : vector<8xf32> to vector<8x1xf32>
    %332 = tpu.reciprocal %331 {approx = true} : vector<8x1xf32> -> vector<8x1xf32>
    %333 = vector.broadcast %332 : vector<8x1xf32> to vector<8x8xf32>
    %334 = arith.mulf %329, %333 : vector<8x8xf32>
    %c7 = arith.constant 7 : index
    %c0_124 = arith.constant 0 : index
    %c0_125 = arith.constant 0 : index
    %335 = vector.load %arg24[%c7, %c0_124, %c0_125] : memref<8x8x8xf32, #tpu.memory_space<vmem>>, vector<1x8x8xf32>
    %336 = vector.shape_cast %335 : vector<1x8x8xf32> to vector<8x8xf32>
    %337 = vector.shape_cast %334 : vector<8x8xf32> to vector<1x8x8xf32>
    tpu.vector_store %arg24[%c7, %c0_124, %c0_125], %337 {strides = array<i32>} : memref<8x8x8xf32, #tpu.memory_space<vmem>>, vector<1x8x8xf32>,
    %338 = arith.truncf %334 : vector<8x8xf32> to vector<8x8xbf16>
    %cst_126 = arith.constant dense<0.000000e+00> : vector<8x16xf32>
    %339 = tpu.matmul %338, %321, %cst_126 {dimension_numbers = #tpu.dot_dimension_numbers<[1], [0], [0], [1], [0, 0, 1, 1], [], []>} : vector<8x8xbf16>, vector<8x16xbf16>, vector<8x16xf32> -> vector<8x16xf32>
    %340 = tpu.concatenate %315, %339 in 1 : vector<8x16xf32>, vector<8x16xf32> -> vector<8x32xf32>
    %341 = tpu.concatenate %291, %340 in 0 : vector<8x32xf32>, vector<8x32xf32> -> vector<16x32xf32>
    %342 = arith.truncf %341 : vector<16x32xf32> to vector<16x32xbf16>
    %c1_127 = arith.constant 1 : index
    %c0_128 = arith.constant 0 : index
    %c0_129 = arith.constant 0 : index
    %343 = vector.load %arg6[%c1_127, %c0_128, %c0_129] : memref<2x32x32xbf16, #tpu.memory_space<vmem>>, vector<1x32x32xbf16>
    %344 = vector.shape_cast %343 : vector<1x32x32xbf16> to vector<32x32xbf16>
    %cst_130 = arith.constant dense<0.000000e+00> : vector<16x32xf32>
    %345 = tpu.matmul %342, %344, %cst_130 {dimension_numbers = #tpu.dot_dimension_numbers<[1], [0], [0], [1], [0, 0, 1, 1], [], []>} : vector<16x32xbf16>, vector<32x32xbf16>, vector<16x32xf32> -> vector<16x32xf32>
    %c1_131 = arith.constant 1 : index
    %c0_132 = arith.constant 0 : index
    %c0_133 = arith.constant 0 : index
    %346 = vector.load %arg7[%c1_131, %c0_132, %c0_133] : memref<2x1x32xf32, #tpu.memory_space<vmem>>, vector<1x1x32xf32>
    %347 = vector.shape_cast %346 : vector<1x1x32xf32> to vector<1x32xf32>
    %348 = vector.broadcast %347 : vector<1x32xf32> to vector<16x32xf32>
    %349 = arith.addf %345, %348 : vector<16x32xf32>
    %350 = arith.addf %349, %231 : vector<16x32xf32>
    %c1_134 = arith.constant 1 : index
    %c0_135 = arith.constant 0 : index
    %c0_136 = arith.constant 0 : index
    %351 = vector.load %arg8[%c1_134, %c0_135, %c0_136] : memref<2x1x32xf32, #tpu.memory_space<vmem>>, vector<1x1x32xf32>
    %352 = vector.shape_cast %351 : vector<1x1x32xf32> to vector<1x32xf32>
    %c1_137 = arith.constant 1 : index
    %c0_138 = arith.constant 0 : index
    %c0_139 = arith.constant 0 : index
    %353 = vector.load %arg9[%c1_137, %c0_138, %c0_139] : memref<2x1x32xf32, #tpu.memory_space<vmem>>, vector<1x1x32xf32>
    %354 = vector.shape_cast %353 : vector<1x1x32xf32> to vector<1x32xf32>
    %cst_140 = arith.constant dense<0.000000e+00> : vector<16xf32>
    %355 = vector.multi_reduction <add>, %350, %cst_140 [1] : vector<16x32xf32> to vector<16xf32>
    %356 = vector.shape_cast %355 : vector<16xf32> to vector<16x1xf32>
    %cst_141 = arith.constant 3.200000e+01 : f32
    %357 = vector.broadcast %cst_141 : f32 to vector<16x1xf32>
    %358 = arith.divf %356, %357 : vector<16x1xf32>
    %359 = vector.broadcast %358 : vector<16x1xf32> to vector<16x32xf32>
    %360 = arith.subf %350, %359 : vector<16x32xf32>
    %361 = vector.broadcast %358 : vector<16x1xf32> to vector<16x32xf32>
    %362 = arith.subf %350, %361 : vector<16x32xf32>
    %363 = arith.mulf %360, %362 : vector<16x32xf32>
    %cst_142 = arith.constant dense<0.000000e+00> : vector<16xf32>
    %364 = vector.multi_reduction <add>, %363, %cst_142 [1] : vector<16x32xf32> to vector<16xf32>
    %365 = vector.shape_cast %364 : vector<16xf32> to vector<16x1xf32>
    %cst_143 = arith.constant 3.200000e+01 : f32
    %366 = vector.broadcast %cst_143 : f32 to vector<16x1xf32>
    %367 = arith.divf %365, %366 : vector<16x1xf32>
    %368 = vector.broadcast %358 : vector<16x1xf32> to vector<16x32xf32>
    %369 = arith.subf %350, %368 : vector<16x32xf32>
    %cst_144 = arith.constant 9.99999996E-13 : f32
    %370 = vector.broadcast %cst_144 : f32 to vector<16x1xf32>
    %371 = arith.addf %367, %370 : vector<16x1xf32>
    %372 = math.rsqrt %371 : vector<16x1xf32>
    %373 = vector.broadcast %372 : vector<16x1xf32> to vector<16x32xf32>
    %374 = arith.mulf %369, %373 : vector<16x32xf32>
    %375 = vector.broadcast %352 : vector<1x32xf32> to vector<16x32xf32>
    %376 = arith.mulf %374, %375 : vector<16x32xf32>
    %377 = vector.broadcast %354 : vector<1x32xf32> to vector<16x32xf32>
    %378 = arith.addf %376, %377 : vector<16x32xf32>
    %379 = arith.truncf %378 : vector<16x32xf32> to vector<16x32xbf16>
    %c1_145 = arith.constant 1 : index
    %c0_146 = arith.constant 0 : index
    %c0_147 = arith.constant 0 : index
    %380 = vector.load %arg10[%c1_145, %c0_146, %c0_147] : memref<2x32x64xbf16, #tpu.memory_space<vmem>>, vector<1x32x64xbf16>
    %381 = vector.shape_cast %380 : vector<1x32x64xbf16> to vector<32x64xbf16>
    %cst_148 = arith.constant dense<0.000000e+00> : vector<16x64xf32>
    %382 = tpu.matmul %379, %381, %cst_148 {dimension_numbers = #tpu.dot_dimension_numbers<[1], [0], [0], [1], [0, 0, 1, 1], [], []>} : vector<16x32xbf16>, vector<32x64xbf16>, vector<16x64xf32> -> vector<16x64xf32>
    %c1_149 = arith.constant 1 : index
    %c0_150 = arith.constant 0 : index
    %c0_151 = arith.constant 0 : index
    %383 = vector.load %arg11[%c1_149, %c0_150, %c0_151] : memref<2x1x64xf32, #tpu.memory_space<vmem>>, vector<1x1x64xf32>
    %384 = vector.shape_cast %383 : vector<1x1x64xf32> to vector<1x64xf32>
    %385 = vector.broadcast %384 : vector<1x64xf32> to vector<16x64xf32>
    %386 = arith.addf %382, %385 : vector<16x64xf32>
    %cst_152 = arith.constant 5.000000e-01 : f32
    %387 = vector.broadcast %cst_152 : f32 to vector<16x64xf32>
    %388 = arith.mulf %387, %386 : vector<16x64xf32>
    %cst_153 = arith.constant 4.471500e-02 : f32
    %389 = vector.broadcast %cst_153 : f32 to vector<16x64xf32>
    %390 = arith.mulf %389, %386 : vector<16x64xf32>
    %391 = arith.mulf %390, %386 : vector<16x64xf32>
    %392 = arith.mulf %391, %386 : vector<16x64xf32>
    %393 = arith.addf %386, %392 : vector<16x64xf32>
    %cst_154 = arith.constant 0.797884583 : f32
    %394 = vector.broadcast %cst_154 : f32 to vector<16x64xf32>
    %395 = arith.mulf %394, %393 : vector<16x64xf32>
    %396 = math.tanh %395 : vector<16x64xf32>
    %cst_155 = arith.constant 1.000000e+00 : f32
    %397 = vector.broadcast %cst_155 : f32 to vector<16x64xf32>
    %398 = arith.addf %397, %396 : vector<16x64xf32>
    %399 = arith.mulf %388, %398 : vector<16x64xf32>
    %400 = arith.truncf %399 : vector<16x64xf32> to vector<16x64xbf16>
    %c1_156 = arith.constant 1 : index
    %c0_157 = arith.constant 0 : index
    %c0_158 = arith.constant 0 : index
    %401 = vector.load %arg12[%c1_156, %c0_157, %c0_158] : memref<2x64x32xbf16, #tpu.memory_space<vmem>>, vector<1x64x32xbf16>
    %402 = vector.shape_cast %401 : vector<1x64x32xbf16> to vector<64x32xbf16>
    %cst_159 = arith.constant dense<0.000000e+00> : vector<16x32xf32>
    %403 = tpu.matmul %400, %402, %cst_159 {dimension_numbers = #tpu.dot_dimension_numbers<[1], [0], [0], [1], [0, 0, 1, 1], [], []>} : vector<16x64xbf16>, vector<64x32xbf16>, vector<16x32xf32> -> vector<16x32xf32>
    %c1_160 = arith.constant 1 : index
    %c0_161 = arith.constant 0 : index
    %c0_162 = arith.constant 0 : index
    %404 = vector.load %arg13[%c1_160, %c0_161, %c0_162] : memref<2x1x32xf32, #tpu.memory_space<vmem>>, vector<1x1x32xf32>
    %405 = vector.shape_cast %404 : vector<1x1x32xf32> to vector<1x32xf32>
    %406 = vector.broadcast %405 : vector<1x32xf32> to vector<16x32xf32>
    %407 = arith.addf %403, %406 : vector<16x32xf32>
    %408 = arith.addf %407, %378 : vector<16x32xf32>
    %c1_163 = arith.constant 1 : index
    %c0_164 = arith.constant 0 : index
    %c0_165 = arith.constant 0 : index
    %409 = vector.load %arg14[%c1_163, %c0_164, %c0_165] : memref<2x1x32xf32, #tpu.memory_space<vmem>>, vector<1x1x32xf32>
    %410 = vector.shape_cast %409 : vector<1x1x32xf32> to vector<1x32xf32>
    %c1_166 = arith.constant 1 : index
    %c0_167 = arith.constant 0 : index
    %c0_168 = arith.constant 0 : index
    %411 = vector.load %arg15[%c1_166, %c0_167, %c0_168] : memref<2x1x32xf32, #tpu.memory_space<vmem>>, vector<1x1x32xf32>
    %412 = vector.shape_cast %411 : vector<1x1x32xf32> to vector<1x32xf32>
    %cst_169 = arith.constant dense<0.000000e+00> : vector<16xf32>
    %413 = vector.multi_reduction <add>, %408, %cst_169 [1] : vector<16x32xf32> to vector<16xf32>
    %414 = vector.shape_cast %413 : vector<16xf32> to vector<16x1xf32>
    %cst_170 = arith.constant 3.200000e+01 : f32
    %415 = vector.broadcast %cst_170 : f32 to vector<16x1xf32>
    %416 = arith.divf %414, %415 : vector<16x1xf32>
    %417 = vector.broadcast %416 : vector<16x1xf32> to vector<16x32xf32>
    %418 = arith.subf %408, %417 : vector<16x32xf32>
    %419 = vector.broadcast %416 : vector<16x1xf32> to vector<16x32xf32>
    %420 = arith.subf %408, %419 : vector<16x32xf32>
    %421 = arith.mulf %418, %420 : vector<16x32xf32>
    %cst_171 = arith.constant dense<0.000000e+00> : vector<16xf32>
    %422 = vector.multi_reduction <add>, %421, %cst_171 [1] : vector<16x32xf32> to vector<16xf32>
    %423 = vector.shape_cast %422 : vector<16xf32> to vector<16x1xf32>
    %cst_172 = arith.constant 3.200000e+01 : f32
    %424 = vector.broadcast %cst_172 : f32 to vector<16x1xf32>
    %425 = arith.divf %423, %424 : vector<16x1xf32>
    %426 = vector.broadcast %416 : vector<16x1xf32> to vector<16x32xf32>
    %427 = arith.subf %408, %426 : vector<16x32xf32>
    %cst_173 = arith.constant 9.99999996E-13 : f32
    %428 = vector.broadcast %cst_173 : f32 to vector<16x1xf32>
    %429 = arith.addf %425, %428 : vector<16x1xf32>
    %430 = math.rsqrt %429 : vector<16x1xf32>
    %431 = vector.broadcast %430 : vector<16x1xf32> to vector<16x32xf32>
    %432 = arith.mulf %427, %431 : vector<16x32xf32>
    %433 = vector.broadcast %410 : vector<1x32xf32> to vector<16x32xf32>
    %434 = arith.mulf %432, %433 : vector<16x32xf32>
    %435 = vector.broadcast %412 : vector<1x32xf32> to vector<16x32xf32>
    %436 = arith.addf %434, %435 : vector<16x32xf32>
    %437 = vector.extract_strided_slice %436 {offsets = [0, 0], sizes = [1, 32], strides = [1, 1]} : vector<16x32xf32> to vector<1x32xf32>
    %438 = vector.extract_strided_slice %436 {offsets = [8, 0], sizes = [1, 32], strides = [1, 1]} : vector<16x32xf32> to vector<1x32xf32>
    %439 = tpu.concatenate %437, %438 in 0 : vector<1x32xf32>, vector<1x32xf32> -> vector<2x32xf32>
    %c0_174 = arith.constant 0 : index
    %c0_175 = arith.constant 0 : index
    %440 = vector.load %arg23[%c0_174, %c0_175] : memref<2x32xf32, #tpu.memory_space<vmem>>, vector<2x32xf32>
    tpu.vector_store %arg23[%c0_174, %c0_175], %439 {strides = array<i32>} : memref<2x32xf32, #tpu.memory_space<vmem>>, vector<2x32xf32>,
    %441 = arith.truncf %439 : vector<2x32xf32> to vector<2x32xbf16>
    %c0_176 = arith.constant 0 : index
    %c0_177 = arith.constant 0 : index
    %442 = vector.load %arg16[%c0_176, %c0_177] : memref<32x32xbf16, #tpu.memory_space<vmem>>, vector<32x32xbf16>
    %cst_178 = arith.constant dense<0.000000e+00> : vector<2x32xf32>
    %443 = tpu.matmul %441, %442, %cst_178 {dimension_numbers = #tpu.dot_dimension_numbers<[1], [0], [0], [1], [0, 0, 1, 1], [], []>} : vector<2x32xbf16>, vector<32x32xbf16>, vector<2x32xf32> -> vector<2x32xf32>
    %c0_179 = arith.constant 0 : index
    %c0_180 = arith.constant 0 : index
    %444 = vector.load %arg17[%c0_179, %c0_180] : memref<1x32xf32, #tpu.memory_space<vmem>>, vector<1x32xf32>
    %445 = vector.broadcast %444 : vector<1x32xf32> to vector<2x32xf32>
    %446 = arith.addf %443, %445 : vector<2x32xf32>
    %447 = math.tanh %446 : vector<2x32xf32>
    %448 = arith.truncf %447 : vector<2x32xf32> to vector<2x32xbf16>
    %c0_181 = arith.constant 0 : index
    %c0_182 = arith.constant 0 : index
    %449 = vector.load %arg18[%c0_181, %c0_182] : memref<32x2xbf16, #tpu.memory_space<vmem>>, vector<32x2xbf16>
    %cst_183 = arith.constant dense<0.000000e+00> : vector<2x2xf32>
    %450 = tpu.matmul %448, %449, %cst_183 {dimension_numbers = #tpu.dot_dimension_numbers<[1], [0], [0], [1], [0, 0, 1, 1], [], []>} : vector<2x32xbf16>, vector<32x2xbf16>, vector<2x2xf32> -> vector<2x2xf32>
    %c0_184 = arith.constant 0 : index
    %c0_185 = arith.constant 0 : index
    %451 = vector.load %arg19[%c0_184, %c0_185] : memref<1x2xf32, #tpu.memory_space<vmem>>, vector<1x2xf32>
    %452 = vector.broadcast %451 : vector<1x2xf32> to vector<2x2xf32>
    %453 = arith.addf %450, %452 : vector<2x2xf32>
    %c0_186 = arith.constant 0 : index
    %c0_187 = arith.constant 0 : index
    %454 = vector.load %arg21[%c0_186, %c0_187] : memref<2x2xf32, #tpu.memory_space<vmem>>, vector<2x2xf32>
    tpu.vector_store %arg21[%c0_186, %c0_187], %453 {strides = array<i32>} : memref<2x2xf32, #tpu.memory_space<vmem>>, vector<2x2xf32>,
    %cst_188 = arith.constant dense<0xFF800000> : vector<2xf32>
    %455 = vector.multi_reduction <maximumf>, %453, %cst_188 [1] : vector<2x2xf32> to vector<2xf32>
    %456 = vector.shape_cast %455 : vector<2xf32> to vector<2x1xf32>
    %457 = vector.broadcast %456 : vector<2x1xf32> to vector<2x2xf32>
    %458 = arith.subf %453, %457 : vector<2x2xf32>
    %459 = math.exp %458 : vector<2x2xf32>
    %cst_189 = arith.constant dense<0.000000e+00> : vector<2xf32>
    %460 = vector.multi_reduction <add>, %459, %cst_189 [1] : vector<2x2xf32> to vector<2xf32>
    %461 = vector.shape_cast %460 : vector<2xf32> to vector<2x1xf32>
    %462 = math.log %461 : vector<2x1xf32>
    %463 = arith.addf %456, %462 : vector<2x1xf32>
    %464 = vector.broadcast %463 : vector<2x1xf32> to vector<2x2xf32>
    %465 = arith.subf %453, %464 : vector<2x2xf32>
    %466 = tpu.iota {dimensions = array<i32: 1>} : vector<2x2xi32>
    %467 = tpu.iota {dimensions = array<i32: 0>} : vector<2x2xi32>
    %cst_190 = arith.constant 0.000000e+00 : f32
    %468 = vector.broadcast %cst_190 : f32 to vector<2x2xf32>
    %c0_i32 = arith.constant 0 : i32
    %469 = vector.broadcast %c0_i32 : i32 to vector<2x2xi32>
    %470 = arith.cmpi eq, %467, %469 : vector<2x2xi32>
    %c0_191 = arith.constant 0 : index
    %471 = memref.load %arg20[%c0_191] : memref<2xi32, #tpu.memory_space<smem>>
    %472 = vector.broadcast %471 : i32 to vector<2x2xi32>
    %473 = arith.cmpi eq, %466, %472 : vector<2x2xi32>
    %474 = arith.andi %470, %473 : vector<2x2xi1>
    %cst_192 = arith.constant 1.000000e+00 : f32
    %475 = vector.broadcast %cst_192 : f32 to vector<2x2xf32>
    %476 = arith.select %474, %475, %468 : vector<2x2xi1>, vector<2x2xf32>
    %c1_i32 = arith.constant 1 : i32
    %477 = vector.broadcast %c1_i32 : i32 to vector<2x2xi32>
    %478 = arith.cmpi eq, %467, %477 : vector<2x2xi32>
    %c1_193 = arith.constant 1 : index
    %479 = memref.load %arg20[%c1_193] : memref<2xi32, #tpu.memory_space<smem>>
    %480 = vector.broadcast %479 : i32 to vector<2x2xi32>
    %481 = arith.cmpi eq, %466, %480 : vector<2x2xi32>
    %482 = arith.andi %478, %481 : vector<2x2xi1>
    %cst_194 = arith.constant 1.000000e+00 : f32
    %483 = vector.broadcast %cst_194 : f32 to vector<2x2xf32>
    %484 = arith.select %482, %483, %476 : vector<2x2xi1>, vector<2x2xf32>
    %485 = arith.mulf %484, %465 : vector<2x2xf32>
    %cst_195 = arith.constant dense<0.000000e+00> : vector<2xf32>
    %486 = vector.multi_reduction <add>, %485, %cst_195 [1] : vector<2x2xf32> to vector<2xf32>
    %487 = vector.shape_cast %486 : vector<2xf32> to vector<2x1xf32>
    %cst_196 = arith.constant 0.000000e+00 : f32
    %488 = vector.broadcast %cst_196 : f32 to vector<2x1xf32>
    %489 = arith.subf %488, %487 : vector<2x1xf32>
    %cst_197 = arith.constant dense<0.000000e+00> : vector<1xf32>
    %490 = vector.multi_reduction <add>, %489, %cst_197 [0] : vector<2x1xf32> to vector<1xf32>
    %491 = vector.shape_cast %490 : vector<1xf32> to vector<1x1xf32>
    %cst_198 = arith.constant 5.000000e-01 : f32
    %492 = vector.broadcast %cst_198 : f32 to vector<1x1xf32>
    %493 = arith.mulf %491, %492 : vector<1x1xf32>
    %c0_199 = arith.constant 0 : index
    %c0_200 = arith.constant 0 : index
    %494 = vector.load %arg22[%c0_199, %c0_200] : memref<1x1xf32, #tpu.memory_space<vmem>>, vector<1x1xf32>
    tpu.vector_store %arg22[%c0_199, %c0_200], %493 {strides = array<i32>} : memref<1x1xf32, #tpu.memory_space<vmem>>, vector<1x1xf32>,
    return
  }
  func.func @transform_0(%arg0: i32) -> (i32, i32) {
    %c0_i32 = arith.constant 0 : i32
    %c0_i32_0 = arith.constant 0 : i32
    %c0_i32_1 = arith.constant 0 : i32
    return %c0_i32, %c0_i32_0 : i32, i32
  }
  func.func @transform_1(%arg0: i32) -> (i32, i32) {
    %c0_i32 = arith.constant 0 : i32
    %c0_i32_0 = arith.constant 0 : i32
    %c0_i32_1 = arith.constant 0 : i32
    return %c0_i32, %c0_i32_0 : i32, i32
  }
  func.func @transform_2(%arg0: i32) -> (i32, i32) {
    %c0_i32 = arith.constant 0 : i32
    %c0_i32_0 = arith.constant 0 : i32
    %c0_i32_1 = arith.constant 0 : i32
    return %c0_i32, %c0_i32_0 : i32, i32
  }
  func.func @transform_3(%arg0: i32) -> (i32, i32, i32) {
    %c0_i32 = arith.constant 0 : i32
    %c0_i32_0 = arith.constant 0 : i32
    %c0_i32_1 = arith.constant 0 : i32
    %c0_i32_2 = arith.constant 0 : i32
    return %c0_i32, %c0_i32_0, %c0_i32_1 : i32, i32, i32
  }
  func.func @transform_4(%arg0: i32) -> (i32, i32, i32) {
    %c0_i32 = arith.constant 0 : i32
    %c0_i32_0 = arith.constant 0 : i32
    %c0_i32_1 = arith.constant 0 : i32
    %c0_i32_2 = arith.constant 0 : i32
    return %c0_i32, %c0_i32_0, %c0_i32_1 : i32, i32, i32
  }
  func.func @transform_5(%arg0: i32) -> (i32, i32, i32) {
    %c0_i32 = arith.constant 0 : i32
    %c0_i32_0 = arith.constant 0 : i32
    %c0_i32_1 = arith.constant 0 : i32
    %c0_i32_2 = arith.constant 0 : i32
    return %c0_i32, %c0_i32_0, %c0_i32_1 : i32, i32, i32
  }
  func.func @transform_6(%arg0: i32) -> (i32, i32, i32) {
    %c0_i32 = arith.constant 0 : i32
    %c0_i32_0 = arith.constant 0 : i32
    %c0_i32_1 = arith.constant 0 : i32
    %c0_i32_2 = arith.constant 0 : i32
    return %c0_i32, %c0_i32_0, %c0_i32_1 : i32, i32, i32
  }
  func.func @transform_7(%arg0: i32) -> (i32, i32, i32) {
    %c0_i32 = arith.constant 0 : i32
    %c0_i32_0 = arith.constant 0 : i32
    %c0_i32_1 = arith.constant 0 : i32
    %c0_i32_2 = arith.constant 0 : i32
    return %c0_i32, %c0_i32_0, %c0_i32_1 : i32, i32, i32
  }
  func.func @transform_8(%arg0: i32) -> (i32, i32, i32) {
    %c0_i32 = arith.constant 0 : i32
    %c0_i32_0 = arith.constant 0 : i32
    %c0_i32_1 = arith.constant 0 : i32
    %c0_i32_2 = arith.constant 0 : i32
    return %c0_i32, %c0_i32_0, %c0_i32_1 : i32, i32, i32
  }
  func.func @transform_9(%arg0: i32) -> (i32, i32, i32) {
    %c0_i32 = arith.constant 0 : i32
    %c0_i32_0 = arith.constant 0 : i32
    %c0_i32_1 = arith.constant 0 : i32
    %c0_i32_2 = arith.constant 0 : i32
    return %c0_i32, %c0_i32_0, %c0_i32_1 : i32, i32, i32
  }
  func.func @transform_10(%arg0: i32) -> (i32, i32, i32) {
    %c0_i32 = arith.constant 0 : i32
    %c0_i32_0 = arith.constant 0 : i32
    %c0_i32_1 = arith.constant 0 : i32
    %c0_i32_2 = arith.constant 0 : i32
    return %c0_i32, %c0_i32_0, %c0_i32_1 : i32, i32, i32
  }
  func.func @transform_11(%arg0: i32) -> (i32, i32, i32) {
    %c0_i32 = arith.constant 0 : i32
    %c0_i32_0 = arith.constant 0 : i32
    %c0_i32_1 = arith.constant 0 : i32
    %c0_i32_2 = arith.constant 0 : i32
    return %c0_i32, %c0_i32_0, %c0_i32_1 : i32, i32, i32
  }
  func.func @transform_12(%arg0: i32) -> (i32, i32, i32) {
    %c0_i32 = arith.constant 0 : i32
    %c0_i32_0 = arith.constant 0 : i32
    %c0_i32_1 = arith.constant 0 : i32
    %c0_i32_2 = arith.constant 0 : i32
    return %c0_i32, %c0_i32_0, %c0_i32_1 : i32, i32, i32
  }
  func.func @transform_13(%arg0: i32) -> (i32, i32, i32) {
    %c0_i32 = arith.constant 0 : i32
    %c0_i32_0 = arith.constant 0 : i32
    %c0_i32_1 = arith.constant 0 : i32
    %c0_i32_2 = arith.constant 0 : i32
    return %c0_i32, %c0_i32_0, %c0_i32_1 : i32, i32, i32
  }
  func.func @transform_14(%arg0: i32) -> (i32, i32, i32) {
    %c0_i32 = arith.constant 0 : i32
    %c0_i32_0 = arith.constant 0 : i32
    %c0_i32_1 = arith.constant 0 : i32
    %c0_i32_2 = arith.constant 0 : i32
    return %c0_i32, %c0_i32_0, %c0_i32_1 : i32, i32, i32
  }
  func.func @transform_15(%arg0: i32) -> (i32, i32) {
    %c0_i32 = arith.constant 0 : i32
    %c0_i32_0 = arith.constant 0 : i32
    %c0_i32_1 = arith.constant 0 : i32
    return %c0_i32, %c0_i32_0 : i32, i32
  }
  func.func @transform_16(%arg0: i32) -> (i32, i32) {
    %c0_i32 = arith.constant 0 : i32
    %c0_i32_0 = arith.constant 0 : i32
    %c0_i32_1 = arith.constant 0 : i32
    return %c0_i32, %c0_i32_0 : i32, i32
  }
  func.func @transform_17(%arg0: i32) -> (i32, i32) {
    %c0_i32 = arith.constant 0 : i32
    %c0_i32_0 = arith.constant 0 : i32
    %c0_i32_1 = arith.constant 0 : i32
    return %c0_i32, %c0_i32_0 : i32, i32
  }
  func.func @transform_18(%arg0: i32) -> (i32, i32) {
    %c0_i32 = arith.constant 0 : i32
    %c0_i32_0 = arith.constant 0 : i32
    %c0_i32_1 = arith.constant 0 : i32
    return %c0_i32, %c0_i32_0 : i32, i32
  }
  func.func @transform_19(%arg0: i32) -> i32 {
    %c0_i32 = arith.constant 0 : i32
    %c0_i32_0 = arith.constant 0 : i32
    return %c0_i32 : i32
  }
  func.func @transform_20(%arg0: i32) -> (i32, i32) {
    %c0_i32 = arith.constant 0 : i32
    %c0_i32_0 = arith.constant 0 : i32
    %c0_i32_1 = arith.constant 0 : i32
    return %c0_i32, %c0_i32_0 : i32, i32
  }
  func.func @transform_21(%arg0: i32) -> (i32, i32) {
    %c0_i32 = arith.constant 0 : i32
    %c0_i32_0 = arith.constant 0 : i32
    %c0_i32_1 = arith.constant 0 : i32
    return %c0_i32, %c0_i32_0 : i32, i32
  }
  func.func @transform_22(%arg0: i32) -> (i32, i32) {
    %c0_i32 = arith.constant 0 : i32
    %c0_i32_0 = arith.constant 0 : i32
    %c0_i32_1 = arith.constant 0 : i32
    return %c0_i32, %c0_i32_0 : i32, i32
  }
  func.func @transform_23(%arg0: i32) -> (i32, i32, i32) {
    %c0_i32 = arith.constant 0 : i32
    %c0_i32_0 = arith.constant 0 : i32
    %c0_i32_1 = arith.constant 0 : i32
    %c0_i32_2 = arith.constant 0 : i32
    return %c0_i32, %c0_i32_0, %c0_i32_1 : i32, i32, i32
  }
}

</mosaic_0001>

<llo_original>
// kernel: _forward.1
$region0: #{_forward.1}
  #allocation0 [shape = 'u32[]', space=smem, size = 0x4, offset = 0x4, fixed_abs, tag = 'smem constant byte address 0x4 - core index']
  #allocation1 [shape = 'u32[144,128]{1,0:T(1,128)}', space=vmem, size = 0x12000, scoped, tag = 'internal scratch']
  %s0 = inlined_call_operand.vmem [shape: f32[16,32], index: 0, kind: input, shape index: {}]
  %s1 = inlined_call_operand.vmem [shape: f32[1,32], index: 1, kind: input, shape index: {}]
  %s2 = inlined_call_operand.vmem [shape: f32[1,32], index: 2, kind: input, shape index: {}]
  %s3 = inlined_call_operand.vmem [shape: bf16[2,32,96], index: 3, kind: input, shape index: {}]
  %s4 = inlined_call_operand.vmem [shape: f32[2,1,96], index: 4, kind: input, shape index: {}]
  %s5 = inlined_call_operand.vmem [shape: bf16[2,32,32], index: 5, kind: input, shape index: {}]
  %s6 = inlined_call_operand.vmem [shape: f32[2,1,32], index: 6, kind: input, shape index: {}]
  %s7 = inlined_call_operand.vmem [shape: f32[2,1,32], index: 7, kind: input, shape index: {}]
  %s8 = inlined_call_operand.vmem [shape: f32[2,1,32], index: 8, kind: input, shape index: {}]
  %s9 = inlined_call_operand.vmem [shape: bf16[2,32,64], index: 9, kind: input, shape index: {}]
  %s10 = inlined_call_operand.vmem [shape: f32[2,1,64], index: 10, kind: input, shape index: {}]
  %s11 = inlined_call_operand.vmem [shape: bf16[2,64,32], index: 11, kind: input, shape index: {}]
  %s12 = inlined_call_operand.vmem [shape: f32[2,1,32], index: 12, kind: input, shape index: {}]
  %s13 = inlined_call_operand.vmem [shape: f32[2,1,32], index: 13, kind: input, shape index: {}]
  %s14 = inlined_call_operand.vmem [shape: f32[2,1,32], index: 14, kind: input, shape index: {}]
  %s15 = inlined_call_operand.vmem [shape: bf16[32,32], index: 15, kind: input, shape index: {}]
  %s16 = inlined_call_operand.vmem [shape: f32[1,32], index: 16, kind: input, shape index: {}]
  %s17 = inlined_call_operand.vmem [shape: bf16[32,2], index: 17, kind: input, shape index: {}]
  %s18 = inlined_call_operand.vmem [shape: f32[1,2], index: 18, kind: input, shape index: {}]
  %s19 = inlined_call_operand.vmem [shape: s32[2], index: 19, kind: input, shape index: {}]
  %s20 = inlined_call_operand.hbm [shape: f32[2,2], index: 20, kind: output, shape index: {0}]
  %s21 = inlined_call_operand.hbm [shape: f32[1,1], index: 21, kind: output, shape index: {1}]
  %s22 = inlined_call_operand.hbm [shape: f32[2,32], index: 22, kind: output, shape index: {2}]
  %s23 = inlined_call_operand.vmem [shape: f32[8,8,8], index: 23, kind: output, shape index: {3}]
  %24 = xla_tuple %s20, %s21, %s22, %s23
  %s25 = sld [smem:[#allocation0]]
  $region118: #{_forward.1} parent=0
    _
  %s27 = ssub.s32 1, %s25
  %s28 = scalar_select 0, %s27, %s25
  $region1: #{_forward.1} parent=0
    #allocation2 [shape = 'u8[512]{0}', space=smem, size = 0x200, scoped, tag = 'input window, operand 19, single buffered']
    #allocation3 [shape = 's32[1]{0}', space=sflag, size = 0x4, scoped, tag = 'scoped memory for _forward.1']
    #allocation4 [shape = 's32[1]{0}', space=sflag, size = 0x4, scoped, tag = 'scoped memory for _forward.1']
    #allocation5 [shape = 'u8[1024]{0}', space=vmem, size = 0x400, scoped, tag = 'output window, operand 0, single buffered']
    #allocation6 [shape = 'u8[512]{0}', space=vmem, size = 0x400, scoped, tag = 'output window, operand 1, single buffered']
    #allocation7 [shape = 's32[1]{0}', space=sflag, size = 0x4, scoped, tag = 'scoped memory for _forward.1']
    #allocation8 [shape = 'u8[1024]{0}', space=vmem, size = 0x400, scoped, tag = 'output window, operand 2, single buffered']
    %29 = vsyncpa [#allocation4], 0
    %30 = vsyncpa [#allocation3], 0
    %31 = vsyncpa [#allocation7], 0
    // Predicated region
    $region2: #{_forward.1} parent=1 // pred_check
      _
    $region3: #{_forward.1} parent=1 // pred_check_branch
      %33 = sbr.rel (0) target = $region5
    $region4: #{_forward.1} parent=1 // pred_region
      _
    $region5: #{_forward.1} parent=1 // pred_fallthru
      _
    // Predicated region
    $region6: #{_forward.1} parent=1 // pred_check
      _
    $region7: #{_forward.1} parent=1 // pred_check_branch
      %35 = sbr.rel (0) target = $region9
    $region8: #{_forward.1} parent=1 // pred_region
      _
    $region9: #{_forward.1} parent=1 // pred_fallthru
      _
    // Predicated region
    $region10: #{_forward.1} parent=1 // pred_check
      _
    $region11: #{_forward.1} parent=1 // pred_check_branch
      %37 = sbr.rel (0) target = $region13
    $region12: #{_forward.1} parent=1 // pred_region
      _
    $region13: #{_forward.1} parent=1 // pred_fallthru
      _
    // Predicated region
    $region14: #{_forward.1} parent=1 // pred_check
      _
    $region15: #{_forward.1} parent=1 // pred_check_branch
      %39 = sbr.rel (0) target = $region17
    $region16: #{_forward.1} parent=1 // pred_region
      _
    $region17: #{_forward.1} parent=1 // pred_fallthru
      _
    // Predicated region
    $region18: #{_forward.1} parent=1 // pred_check
      _
    $region19: #{_forward.1} parent=1 // pred_check_branch
      %41 = sbr.rel (0) target = $region21
    $region20: #{_forward.1} parent=1 // pred_region
      _
    $region21: #{_forward.1} parent=1 // pred_fallthru
      _
    // Predicated region
    $region22: #{_forward.1} parent=1 // pred_check
      _
    $region23: #{_forward.1} parent=1 // pred_check_branch
      %43 = sbr.rel (0) target = $region25
    $region24: #{_forward.1} parent=1 // pred_region
      _
    $region25: #{_forward.1} parent=1 // pred_fallthru
      _
    // Predicated region
    $region26: #{_forward.1} parent=1 // pred_check
      _
    $region27: #{_forward.1} parent=1 // pred_check_branch
      %45 = sbr.rel (0) target = $region29
    $region28: #{_forward.1} parent=1 // pred_region
      _
    $region29: #{_forward.1} parent=1 // pred_fallthru
      _
    // Predicated region
    $region30: #{_forward.1} parent=1 // pred_check
      _
    $region31: #{_forward.1} parent=1 // pred_check_branch
      %47 = sbr.rel (0) target = $region33
    $region32: #{_forward.1} parent=1 // pred_region
      _
    $region33: #{_forward.1} parent=1 // pred_fallthru
      _
    // Predicated region
    $region34: #{_forward.1} parent=1 // pred_check
      _
    $region35: #{_forward.1} parent=1 // pred_check_branch
      %49 = sbr.rel (0) target = $region37
    $region36: #{_forward.1} parent=1 // pred_region
      _
    $region37: #{_forward.1} parent=1 // pred_fallthru
      _
    // Predicated region
    $region38: #{_forward.1} parent=1 // pred_check
      _
    $region39: #{_forward.1} parent=1 // pred_check_branch
      %51 = sbr.rel (0) target = $region41
    $region40: #{_forward.1} parent=1 // pred_region
      _
    $region41: #{_forward.1} parent=1 // pred_fallthru
      _
    // Predicated region
    $region42: #{_forward.1} parent=1 // pred_check
      _
    $region43: #{_forward.1} parent=1 // pred_check_branch
      %53 = sbr.rel (0) target = $region45
    $region44: #{_forward.1} parent=1 // pred_region
      _
    $region45: #{_forward.1} parent=1 // pred_fallthru
      _
    // Predicated region
    $region46: #{_forward.1} parent=1 // pred_check
      _
    $region47: #{_forward.1} parent=1 // pred_check_branch
      %55 = sbr.rel (0) target = $region49
    $region48: #{_forward.1} parent=1 // pred_region
      _
    $region49: #{_forward.1} parent=1 // pred_fallthru
      _
    // Predicated region
    $region50: #{_forward.1} parent=1 // pred_check
      _
    $region51: #{_forward.1} parent=1 // pred_check_branch
      %57 = sbr.rel (0) target = $region53
    $region52: #{_forward.1} parent=1 // pred_region
      _
    $region53: #{_forward.1} parent=1 // pred_fallthru
      _
    // Predicated region
    $region54: #{_forward.1} parent=1 // pred_check
      _
    $region55: #{_forward.1} parent=1 // pred_check_branch
      %59 = sbr.rel (0) target = $region57
    $region56: #{_forward.1} parent=1 // pred_region
      _
    $region57: #{_forward.1} parent=1 // pred_fallthru
      _
    // Predicated region
    $region58: #{_forward.1} parent=1 // pred_check
      _
    $region59: #{_forward.1} parent=1 // pred_check_branch
      %61 = sbr.rel (0) target = $region61
    $region60: #{_forward.1} parent=1 // pred_region
      _
    $region61: #{_forward.1} parent=1 // pred_fallthru
      _
    // Predicated region
    $region62: #{_forward.1} parent=1 // pred_check
      _
    $region63: #{_forward.1} parent=1 // pred_check_branch
      %63 = sbr.rel (0) target = $region65
    $region64: #{_forward.1} parent=1 // pred_region
      _
    $region65: #{_forward.1} parent=1 // pred_fallthru
      _
    // Predicated region
    $region66: #{_forward.1} parent=1 // pred_check
      _
    $region67: #{_forward.1} parent=1 // pred_check_branch
      %65 = sbr.rel (0) target = $region69
    $region68: #{_forward.1} parent=1 // pred_region
      _
    $region69: #{_forward.1} parent=1 // pred_fallthru
      _
    // Predicated region
    $region70: #{_forward.1} parent=1 // pred_check
      _
    $region71: #{_forward.1} parent=1 // pred_check_branch
      %67 = sbr.rel (0) target = $region73
    $region72: #{_forward.1} parent=1 // pred_region
      _
    $region73: #{_forward.1} parent=1 // pred_fallthru
      _
    // Predicated region
    $region74: #{_forward.1} parent=1 // pred_check
      _
    $region75: #{_forward.1} parent=1 // pred_check_branch
      %69 = sbr.rel (0) target = $region77
    $region76: #{_forward.1} parent=1 // pred_region
      _
    $region77: #{_forward.1} parent=1 // pred_fallthru
      _
    // Predicated region
    $region78: #{_forward.1} parent=1 // pred_check
      _
    $region79: #{_forward.1} parent=1 // pred_check_branch
      %71 = sbr.rel (0) target = $region81
    $region80: #{_forward.1} parent=1 // pred_region
      %s73 = ssub.s32 16, 16
      %74 = vsyncadd [#allocation4], %s73
      %s76 = sshll.u32 %s19, 4
      %s77 = int_to_ptr.vmem [resolvable:$true] %s76
      %79 = dma.vmem_to_smem %s77, 16, [#allocation2], [#allocation4]
    $region81: #{_forward.1} parent=1 // pred_fallthru
      _
    // Predicated region
    $region82: #{_forward.1} parent=1 // pred_check
      _
    $region83: #{_forward.1} parent=1 // pred_check_branch
      %81 = sbr.rel (0) target = $region85
    $region84: #{_forward.1} parent=1 // pred_region
      %82 = dma.done [#allocation4], 16
    $region85: #{_forward.1} parent=1 // pred_fallthru
      _
    %83 = sfence
    %v85 = vld [vmem:[%s0] sm:$0xff]
    %v86 = vld [vmem:[%s0 + $0x8] sm:$0xff]
    %v87 = vld [vmem:[%s1] sm:$0x1]
    %v88 = vld [vmem:[%s2] sm:$0x1]
    %vm89 = vcmask 261120
    %v90 = vsel %vm89, %v85, 0.0
    %91 = vadd.xlane.f32.xlu0 %v90
    %v92 = vpop.xlane.xlu0 %91
    %v93 = vsel %vm89, %v86, 0.0
    %94 = vadd.xlane.f32.xlu0 %v93
    %v95 = vpop.xlane.xlu0 %94
    %v96 = vrcp.pop 32.0
    %v97 = vmul.f32 %v92, %v96
    %v98 = vmul.f32 %v95, %v96
    %v99 = vsub.f32 %v85, %v97
    %v100 = vsub.f32 %v86, %v98
    %v101 = vmul.f32 %v99, %v99
    %v102 = vmul.f32 %v100, %v100
    %v103 = vsel %vm89, %v101, 0.0
    %104 = vadd.xlane.f32.xlu0 %v103
    %v105 = vpop.xlane.xlu0 %104
    %v106 = vsel %vm89, %v102, 0.0
    %107 = vadd.xlane.f32.xlu0 %v106
    %v108 = vpop.xlane.xlu0 %107
    %v109 = vmul.f32 %v105, %v96
    %v110 = vmul.f32 %v108, %v96
    %v111 = vadd.f32 %v109, 1e-12
    %v112 = vadd.f32 %v110, 1e-12
    %v113 = vrsqrt.pop %v111
    %v114 = vrsqrt.pop %v112
    %v115 = vmul.f32 %v99, %v113
    %v116 = vmul.f32 %v100, %v114
    %v118 = vlaneseq
    %v119 = vshrl.u32 %v118, 7
    %v120 = vsub.s32 0, %v119
    %v121 = vrot.slane %v87, %v120
    %v123 = vmul.f32 %v115, %v121
    %v124 = vmul.f32 %v116, %v121
    %v126 = vlaneseq
    %v127 = vshrl.u32 %v126, 7
    %v128 = vsub.s32 0, %v127
    %v129 = vrot.slane %v88, %v128
    %v131 = vadd.f32 %v123, %v129
    %v132 = vadd.f32 %v124, %v129
    %v133 = vpack.c.bf16 %v132, %v131
    %v134 = vld [vmem:[%s3] sm:$0xf]
    %v135 = vld [vmem:[%s3 + $0x4] sm:$0xf]
    %v136 = vld [vmem:[%s3 + $0x8] sm:$0xf]
    %v137 = vld [vmem:[%s3 + $0xc] sm:$0xf]
    %v138 = vld [vmem:[%s4] sm:$0x1]
    %v140 = vlaneseq
    %v141 = vshrl.u32 %v140, 7
    %v142 = vsub.s32 0, %v141
    %v143 = vrot.slane %v138, %v142
    %v149 = vunpack.c.l.b16 %v134
    %v150 = vunpack.c.l.b16 %v135
    %v151 = vunpack.c.l.b16 %v136
    %v152 = vunpack.c.l.b16 %v137
    %v153 = vpack.c.b16 %v150, %v149
    %v154 = vpack.c.b16 %v152, %v151
    %v158 = vsel %vm89, %v133, 0
    %160 = vmatprep.subr.bf16.mxu0 0
    %161 = vmatpush1.bf16.msra.mxu0 %v153
    %162 = vmatprep.subr.bf16.mxu0 0
    %163 = vmatpush1.bf16.msra.mxu0 %v154
    %164 = vmatprep.subr.bf16.mxu0 0
    %165 = vmatpush1.bf16.msra.mxu0 0
    %166 = vmatprep.subr.bf16.mxu0 0
    %167 = vmatpush1.bf16.msra.mxu0 0
    %168 = vmatprep.subr.bf16.mxu0 0
    %169 = vmatpush1.bf16.msra.mxu0 0
    %170 = vmatprep.subr.bf16.mxu0 0
    %171 = vmatpush1.bf16.msra.mxu0 0
    %172 = vmatprep.subr.bf16.mxu0 0
    %173 = vmatpush1.bf16.msra.mxu0 0
    %174 = vmatprep.subr.bf16.mxu0 0
    %175 = vmatpush1.bf16.msra.mxu0 0
    %176 = vmatprep.subr.bf16.mxu0 0
    %177 = vmatpush1.bf16.msra.mxu0 0
    %178 = vmatprep.subr.bf16.mxu0 0
    %179 = vmatpush1.bf16.msra.mxu0 0
    %180 = vmatprep.subr.bf16.mxu0 0
    %181 = vmatpush1.bf16.msra.mxu0 0
    %182 = vmatprep.subr.bf16.mxu0 0
    %183 = vmatpush1.bf16.msra.mxu0 0
    %184 = vmatprep.subr.bf16.mxu0 0
    %185 = vmatpush1.bf16.msra.mxu0 0
    %186 = vmatprep.subr.bf16.mxu0 0
    %187 = vmatpush1.bf16.msra.mxu0 0
    %188 = vmatprep.subr.bf16.mxu0 0
    %189 = vmatpush1.bf16.msra.mxu0 0
    %190 = vmatprep.subr.bf16.mxu0 0
    %191 = vmatpush1.bf16.msra.mxu0 0
    %192 = vmatprep.mubr.bf16.mxu0 0
    %193 = vmatmul.mubr.bf16.gmra.mrb[0].mxu0 %v158
    %v194 = vpop.f32.mrb[0].mxu0
    %v195 = vadd.f32 %v143, %v194
    %v196 = vpop.f32.mrb[0].mxu0
    %v197 = vpop.f32.mrb[0].mxu0
    %v198 = vadd.f32 %v143, %v197
    %v199 = vpop.f32.mrb[0].mxu0
    %200 = vdwg.mxu0
    %v201 = vpack.c.bf16 %v195, %v195
    %203 = vrot.lane.b32.xlu0 %v201, 96
    %v204 = vpop.permute.xlu0 %203
    %vm205 = vcmask 130048
    %v207 = vsel %vm205, %v201, 0
    %v210 = vsel %vm205, %v204, 0
    %212 = vmatprep.subr.bf16.mxu0 0
    %213 = vmatpush1.bf16.xpose.msra.mxu0 %v210
    %214 = vmatprep.subr.bf16.mxu0 0
    %215 = vmatpush1.bf16.xpose.msra.mxu0 0
    %216 = vmatprep.subr.bf16.mxu0 0
    %217 = vmatpush1.bf16.xpose.msra.mxu0 0
    %218 = vmatprep.subr.bf16.mxu0 0
    %219 = vmatpush1.bf16.xpose.msra.mxu0 0
    %220 = vmatprep.subr.bf16.mxu0 0
    %221 = vmatpush1.bf16.xpose.msra.mxu0 0
    %222 = vmatprep.subr.bf16.mxu0 0
    %223 = vmatpush1.bf16.xpose.msra.mxu0 0
    %224 = vmatprep.subr.bf16.mxu0 0
    %225 = vmatpush1.bf16.xpose.msra.mxu0 0
    %226 = vmatprep.subr.bf16.mxu0 0
    %227 = vmatpush1.bf16.xpose.msra.mxu0 0
    %228 = vmatprep.subr.bf16.mxu0 0
    %229 = vmatpush1.bf16.xpose.msra.mxu0 0
    %230 = vmatprep.subr.bf16.mxu0 0
    %231 = vmatpush1.bf16.xpose.msra.mxu0 0
    %232 = vmatprep.subr.bf16.mxu0 0
    %233 = vmatpush1.bf16.xpose.msra.mxu0 0
    %234 = vmatprep.subr.bf16.mxu0 0
    %235 = vmatpush1.bf16.xpose.msra.mxu0 0
    %236 = vmatprep.subr.bf16.mxu0 0
    %237 = vmatpush1.bf16.xpose.msra.mxu0 0
    %238 = vmatprep.subr.bf16.mxu0 0
    %239 = vmatpush1.bf16.xpose.msra.mxu0 0
    %240 = vmatprep.subr.bf16.mxu0 0
    %241 = vmatpush1.bf16.xpose.msra.mxu0 0
    %242 = vmatprep.subr.bf16.mxu0 0
    %243 = vmatpush1.bf16.xpose.msra.mxu0 0
    %244 = vmatprep.mubr.bf16.mxu0 0
    %245 = vmatmul.mubr.bf16.gmra.mrb[0].mxu0 %v207
    %v246 = vpop.f32.mrb[0].mxu0
    %v247 = vadd.f32 0.0, %v246
    %v248 = vpop.f32.mrb[0].mxu0
    %v249 = vpop.f32.mrb[0].mxu0
    %v250 = vpop.f32.mrb[0].mxu0
    %251 = vdwg.mxu0
    %v252 = vmul.f32 %v247, 0.25
    %vm253 = vcmask 64512
    %v254 = vsel %vm253, %v252, -inf
    %255 = vmax.xlane.f32.xlu0 %v254
    %v256 = vpop.xlane.xlu0 %255
    %v257 = vsub.f32 %v252, %v256
    %v258 = vmul.f32 %v257, 1.442695
    %v259 = vpow.pop %v258
    %v260 = vsel %vm253, %v259, 0.0
    %261 = vadd.xlane.f32.xlu0 %v260
    %v262 = vpop.xlane.xlu0 %261
    %v263 = vrcp.pop %v262
    %v264 = vmul.f32 %v259, %v263
    %265 = vst.msk [vmem:[%s23] sm:$0xff] %vm253, %v264
    %v266 = vpack.c.bf16 %v264, %v264
    %267 = vrot.lane.b32.xlu0 %v201, 64
    %v268 = vpop.permute.xlu0 %267
    %v270 = vsel %vm253, %v266, 0
    %vm272 = vcmask 1043456
    %v274 = vsel %vm272, %v268, 0
    %276 = vmatprep.subr.bf16.mxu0 0
    %277 = vmatpush1.bf16.msra.mxu0 %v274
    %278 = vmatprep.subr.bf16.mxu0 0
    %279 = vmatpush1.bf16.msra.mxu0 0
    %280 = vmatprep.subr.bf16.mxu0 0
    %281 = vmatpush1.bf16.msra.mxu0 0
    %282 = vmatprep.subr.bf16.mxu0 0
    %283 = vmatpush1.bf16.msra.mxu0 0
    %284 = vmatprep.subr.bf16.mxu0 0
    %285 = vmatpush1.bf16.msra.mxu0 0
    %286 = vmatprep.subr.bf16.mxu0 0
    %287 = vmatpush1.bf16.msra.mxu0 0
    %288 = vmatprep.subr.bf16.mxu0 0
    %289 = vmatpush1.bf16.msra.mxu0 0
    %290 = vmatprep.subr.bf16.mxu0 0
    %291 = vmatpush1.bf16.msra.mxu0 0
    %292 = vmatprep.subr.bf16.mxu0 0
    %293 = vmatpush1.bf16.msra.mxu0 0
    %294 = vmatprep.subr.bf16.mxu0 0
    %295 = vmatpush1.bf16.msra.mxu0 0
    %296 = vmatprep.subr.bf16.mxu0 0
    %297 = vmatpush1.bf16.msra.mxu0 0
    %298 = vmatprep.subr.bf16.mxu0 0
    %299 = vmatpush1.bf16.msra.mxu0 0
    %300 = vmatprep.subr.bf16.mxu0 0
    %301 = vmatpush1.bf16.msra.mxu0 0
    %302 = vmatprep.subr.bf16.mxu0 0
    %303 = vmatpush1.bf16.msra.mxu0 0
    %304 = vmatprep.subr.bf16.mxu0 0
    %305 = vmatpush1.bf16.msra.mxu0 0
    %306 = vmatprep.subr.bf16.mxu0 0
    %307 = vmatpush1.bf16.msra.mxu0 0
    %308 = vmatprep.mubr.bf16.mxu0 0
    %309 = vmatmul.mubr.bf16.gmra.mrb[0].mxu0 %v270
    %v310 = vpop.f32.mrb[0].mxu0
    %v311 = vadd.f32 0.0, %v310
    %v312 = vpop.f32.mrb[0].mxu0
    %v313 = vpop.f32.mrb[0].mxu0
    %v314 = vpop.f32.mrb[0].mxu0
    %315 = vdwg.mxu0
    %316 = vrot.lane.b32.xlu0 %v201, 112
    %v317 = vpop.permute.xlu0 %316
    %318 = vrot.lane.b32.xlu0 %v201, 80
    %v319 = vpop.permute.xlu0 %318
    %v321 = vsel %vm205, %v317, 0
    %v324 = vsel %vm205, %v319, 0
    %326 = vmatprep.subr.bf16.mxu0 0
    %327 = vmatpush1.bf16.xpose.msra.mxu0 %v324
    %328 = vmatprep.subr.bf16.mxu0 0
    %329 = vmatpush1.bf16.xpose.msra.mxu0 0
    %330 = vmatprep.subr.bf16.mxu0 0
    %331 = vmatpush1.bf16.xpose.msra.mxu0 0
    %332 = vmatprep.subr.bf16.mxu0 0
    %333 = vmatpush1.bf16.xpose.msra.mxu0 0
    %334 = vmatprep.subr.bf16.mxu0 0
    %335 = vmatpush1.bf16.xpose.msra.mxu0 0
    %336 = vmatprep.subr.bf16.mxu0 0
    %337 = vmatpush1.bf16.xpose.msra.mxu0 0
    %338 = vmatprep.subr.bf16.mxu0 0
    %339 = vmatpush1.bf16.xpose.msra.mxu0 0
    %340 = vmatprep.subr.bf16.mxu0 0
    %341 = vmatpush1.bf16.xpose.msra.mxu0 0
    %342 = vmatprep.subr.bf16.mxu0 0
    %343 = vmatpush1.bf16.xpose.msra.mxu0 0
    %344 = vmatprep.subr.bf16.mxu0 0
    %345 = vmatpush1.bf16.xpose.msra.mxu0 0
    %346 = vmatprep.subr.bf16.mxu0 0
    %347 = vmatpush1.bf16.xpose.msra.mxu0 0
    %348 = vmatprep.subr.bf16.mxu0 0
    %349 = vmatpush1.bf16.xpose.msra.mxu0 0
    %350 = vmatprep.subr.bf16.mxu0 0
    %351 = vmatpush1.bf16.xpose.msra.mxu0 0
    %352 = vmatprep.subr.bf16.mxu0 0
    %353 = vmatpush1.bf16.xpose.msra.mxu0 0
    %354 = vmatprep.subr.bf16.mxu0 0
    %355 = vmatpush1.bf16.xpose.msra.mxu0 0
    %356 = vmatprep.subr.bf16.mxu0 0
    %357 = vmatpush1.bf16.xpose.msra.mxu0 0
    %358 = vmatprep.mubr.bf16.mxu0 0
    %359 = vmatmul.mubr.bf16.gmra.mrb[0].mxu0 %v321
    %v360 = vpop.f32.mrb[0].mxu0
    %v361 = vadd.f32 0.0, %v360
    %v362 = vpop.f32.mrb[0].mxu0
    %v363 = vpop.f32.mrb[0].mxu0
    %v364 = vpop.f32.mrb[0].mxu0
    %365 = vdwg.mxu0
    %v366 = vmul.f32 %v361, 0.25
    %v367 = vsel %vm253, %v366, -inf
    %368 = vmax.xlane.f32.xlu0 %v367
    %v369 = vpop.xlane.xlu0 %368
    %v370 = vsub.f32 %v366, %v369
    %v371 = vmul.f32 %v370, 1.442695
    %v372 = vpow.pop %v371
    %v373 = vsel %vm253, %v372, 0.0
    %374 = vadd.xlane.f32.xlu0 %v373
    %v375 = vpop.xlane.xlu0 %374
    %v376 = vrcp.pop %v375
    %v377 = vmul.f32 %v372, %v376
    %s378 = scalar_lea.vmem %s23, 8
    %379 = vst.msk [vmem:[%s378] sm:$0xff] %vm253, %v377
    %v380 = vpack.c.bf16 %v377, %v377
    %381 = vrot.lane.b32.xlu0 %v201, 48
    %v382 = vpop.permute.xlu0 %381
    %v384 = vsel %vm253, %v380, 0
    %v387 = vsel %vm272, %v382, 0
    %389 = vmatprep.subr.bf16.mxu0 0
    %390 = vmatpush1.bf16.msra.mxu0 %v387
    %391 = vmatprep.subr.bf16.mxu0 0
    %392 = vmatpush1.bf16.msra.mxu0 0
    %393 = vmatprep.subr.bf16.mxu0 0
    %394 = vmatpush1.bf16.msra.mxu0 0
    %395 = vmatprep.subr.bf16.mxu0 0
    %396 = vmatpush1.bf16.msra.mxu0 0
    %397 = vmatprep.subr.bf16.mxu0 0
    %398 = vmatpush1.bf16.msra.mxu0 0
    %399 = vmatprep.subr.bf16.mxu0 0
    %400 = vmatpush1.bf16.msra.mxu0 0
    %401 = vmatprep.subr.bf16.mxu0 0
    %402 = vmatpush1.bf16.msra.mxu0 0
    %403 = vmatprep.subr.bf16.mxu0 0
    %404 = vmatpush1.bf16.msra.mxu0 0
    %405 = vmatprep.subr.bf16.mxu0 0
    %406 = vmatpush1.bf16.msra.mxu0 0
    %407 = vmatprep.subr.bf16.mxu0 0
    %408 = vmatpush1.bf16.msra.mxu0 0
    %409 = vmatprep.subr.bf16.mxu0 0
    %410 = vmatpush1.bf16.msra.mxu0 0
    %411 = vmatprep.subr.bf16.mxu0 0
    %412 = vmatpush1.bf16.msra.mxu0 0
    %413 = vmatprep.subr.bf16.mxu0 0
    %414 = vmatpush1.bf16.msra.mxu0 0
    %415 = vmatprep.subr.bf16.mxu0 0
    %416 = vmatpush1.bf16.msra.mxu0 0
    %417 = vmatprep.subr.bf16.mxu0 0
    %418 = vmatpush1.bf16.msra.mxu0 0
    %419 = vmatprep.subr.bf16.mxu0 0
    %420 = vmatpush1.bf16.msra.mxu0 0
    %421 = vmatprep.mubr.bf16.mxu0 0
    %422 = vmatmul.mubr.bf16.gmra.mrb[0].mxu0 %v384
    %v423 = vpop.f32.mrb[0].mxu0
    %v424 = vadd.f32 0.0, %v423
    %v425 = vpop.f32.mrb[0].mxu0
    %v426 = vpop.f32.mrb[0].mxu0
    %v427 = vpop.f32.mrb[0].mxu0
    %428 = vdwg.mxu0
    %430 = vrot.lane.b32.xlu0 %v424, 16
    %v431 = vpop.permute.xlu0 %430
    %v433 = vsel %vm205, %v311, %v431
    %v434 = vpack.c.bf16 %v198, %v198
    %436 = vrot.lane.b32.xlu0 %v434, 96
    %v437 = vpop.permute.xlu0 %436
    %v439 = vsel %vm205, %v434, 0
    %v442 = vsel %vm205, %v437, 0
    %444 = vmatprep.subr.bf16.mxu0 0
    %445 = vmatpush1.bf16.xpose.msra.mxu0 %v442
    %446 = vmatprep.subr.bf16.mxu0 0
    %447 = vmatpush1.bf16.xpose.msra.mxu0 0
    %448 = vmatprep.subr.bf16.mxu0 0
    %449 = vmatpush1.bf16.xpose.msra.mxu0 0
    %450 = vmatprep.subr.bf16.mxu0 0
    %451 = vmatpush1.bf16.xpose.msra.mxu0 0
    %452 = vmatprep.subr.bf16.mxu0 0
    %453 = vmatpush1.bf16.xpose.msra.mxu0 0
    %454 = vmatprep.subr.bf16.mxu0 0
    %455 = vmatpush1.bf16.xpose.msra.mxu0 0
    %456 = vmatprep.subr.bf16.mxu0 0
    %457 = vmatpush1.bf16.xpose.msra.mxu0 0
    %458 = vmatprep.subr.bf16.mxu0 0
    %459 = vmatpush1.bf16.xpose.msra.mxu0 0
    %460 = vmatprep.subr.bf16.mxu0 0
    %461 = vmatpush1.bf16.xpose.msra.mxu0 0
    %462 = vmatprep.subr.bf16.mxu0 0
    %463 = vmatpush1.bf16.xpose.msra.mxu0 0
    %464 = vmatprep.subr.bf16.mxu0 0
    %465 = vmatpush1.bf16.xpose.msra.mxu0 0
    %466 = vmatprep.subr.bf16.mxu0 0
    %467 = vmatpush1.bf16.xpose.msra.mxu0 0
    %468 = vmatprep.subr.bf16.mxu0 0
    %469 = vmatpush1.bf16.xpose.msra.mxu0 0
    %470 = vmatprep.subr.bf16.mxu0 0
    %471 = vmatpush1.bf16.xpose.msra.mxu0 0
    %472 = vmatprep.subr.bf16.mxu0 0
    %473 = vmatpush1.bf16.xpose.msra.mxu0 0
    %474 = vmatprep.subr.bf16.mxu0 0
    %475 = vmatpush1.bf16.xpose.msra.mxu0 0
    %476 = vmatprep.mubr.bf16.mxu0 0
    %477 = vmatmul.mubr.bf16.gmra.mrb[0].mxu0 %v439
    %v478 = vpop.f32.mrb[0].mxu0
    %v479 = vadd.f32 0.0, %v478
    %v480 = vpop.f32.mrb[0].mxu0
    %v481 = vpop.f32.mrb[0].mxu0
    %v482 = vpop.f32.mrb[0].mxu0
    %483 = vdwg.mxu0
    %v484 = vmul.f32 %v479, 0.25
    %v485 = vsel %vm253, %v484, -inf
    %486 = vmax.xlane.f32.xlu0 %v485
    %v487 = vpop.xlane.xlu0 %486
    %v488 = vsub.f32 %v484, %v487
    %v489 = vmul.f32 %v488, 1.442695
    %v490 = vpow.pop %v489
    %v491 = vsel %vm253, %v490, 0.0
    %492 = vadd.xlane.f32.xlu0 %v491
    %v493 = vpop.xlane.xlu0 %492
    %v494 = vrcp.pop %v493
    %v495 = vmul.f32 %v490, %v494
    %s496 = scalar_lea.vmem %s23, 16
    %497 = vst.msk [vmem:[%s496] sm:$0xff] %vm253, %v495
    %v498 = vpack.c.bf16 %v495, %v495
    %499 = vrot.lane.b32.xlu0 %v434, 64
    %v500 = vpop.permute.xlu0 %499
    %v502 = vsel %vm253, %v498, 0
    %v505 = vsel %vm272, %v500, 0
    %507 = vmatprep.subr.bf16.mxu0 0
    %508 = vmatpush1.bf16.msra.mxu0 %v505
    %509 = vmatprep.subr.bf16.mxu0 0
    %510 = vmatpush1.bf16.msra.mxu0 0
    %511 = vmatprep.subr.bf16.mxu0 0
    %512 = vmatpush1.bf16.msra.mxu0 0
    %513 = vmatprep.subr.bf16.mxu0 0
    %514 = vmatpush1.bf16.msra.mxu0 0
    %515 = vmatprep.subr.bf16.mxu0 0
    %516 = vmatpush1.bf16.msra.mxu0 0
    %517 = vmatprep.subr.bf16.mxu0 0
    %518 = vmatpush1.bf16.msra.mxu0 0
    %519 = vmatprep.subr.bf16.mxu0 0
    %520 = vmatpush1.bf16.msra.mxu0 0
    %521 = vmatprep.subr.bf16.mxu0 0
    %522 = vmatpush1.bf16.msra.mxu0 0
    %523 = vmatprep.subr.bf16.mxu0 0
    %524 = vmatpush1.bf16.msra.mxu0 0
    %525 = vmatprep.subr.bf16.mxu0 0
    %526 = vmatpush1.bf16.msra.mxu0 0
    %527 = vmatprep.subr.bf16.mxu0 0
    %528 = vmatpush1.bf16.msra.mxu0 0
    %529 = vmatprep.subr.bf16.mxu0 0
    %530 = vmatpush1.bf16.msra.mxu0 0
    %531 = vmatprep.subr.bf16.mxu0 0
    %532 = vmatpush1.bf16.msra.mxu0 0
    %533 = vmatprep.subr.bf16.mxu0 0
    %534 = vmatpush1.bf16.msra.mxu0 0
    %535 = vmatprep.subr.bf16.mxu0 0
    %536 = vmatpush1.bf16.msra.mxu0 0
    %537 = vmatprep.subr.bf16.mxu0 0
    %538 = vmatpush1.bf16.msra.mxu0 0
    %539 = vmatprep.mubr.bf16.mxu0 0
    %540 = vmatmul.mubr.bf16.gmra.mrb[0].mxu0 %v502
    %v541 = vpop.f32.mrb[0].mxu0
    %v542 = vadd.f32 0.0, %v541
    %v543 = vpop.f32.mrb[0].mxu0
    %v544 = vpop.f32.mrb[0].mxu0
    %v545 = vpop.f32.mrb[0].mxu0
    %546 = vdwg.mxu0
    %547 = vrot.lane.b32.xlu0 %v434, 112
    %v548 = vpop.permute.xlu0 %547
    %549 = vrot.lane.b32.xlu0 %v434, 80
    %v550 = vpop.permute.xlu0 %549
    %v552 = vsel %vm205, %v548, 0
    %v555 = vsel %vm205, %v550, 0
    %557 = vmatprep.subr.bf16.mxu0 0
    %558 = vmatpush1.bf16.xpose.msra.mxu0 %v555
    %559 = vmatprep.subr.bf16.mxu0 0
    %560 = vmatpush1.bf16.xpose.msra.mxu0 0
    %561 = vmatprep.subr.bf16.mxu0 0
    %562 = vmatpush1.bf16.xpose.msra.mxu0 0
    %563 = vmatprep.subr.bf16.mxu0 0
    %564 = vmatpush1.bf16.xpose.msra.mxu0 0
    %565 = vmatprep.subr.bf16.mxu0 0
    %566 = vmatpush1.bf16.xpose.msra.mxu0 0
    %567 = vmatprep.subr.bf16.mxu0 0
    %568 = vmatpush1.bf16.xpose.msra.mxu0 0
    %569 = vmatprep.subr.bf16.mxu0 0
    %570 = vmatpush1.bf16.xpose.msra.mxu0 0
    %571 = vmatprep.subr.bf16.mxu0 0
    %572 = vmatpush1.bf16.xpose.msra.mxu0 0
    %573 = vmatprep.subr.bf16.mxu0 0
    %574 = vmatpush1.bf16.xpose.msra.mxu0 0
    %575 = vmatprep.subr.bf16.mxu0 0
    %576 = vmatpush1.bf16.xpose.msra.mxu0 0
    %577 = vmatprep.subr.bf16.mxu0 0
    %578 = vmatpush1.bf16.xpose.msra.mxu0 0
    %579 = vmatprep.subr.bf16.mxu0 0
    %580 = vmatpush1.bf16.xpose.msra.mxu0 0
    %581 = vmatprep.subr.bf16.mxu0 0
    %582 = vmatpush1.bf16.xpose.msra.mxu0 0
    %583 = vmatprep.subr.bf16.mxu0 0
    %584 = vmatpush1.bf16.xpose.msra.mxu0 0
    %585 = vmatprep.subr.bf16.mxu0 0
    %586 = vmatpush1.bf16.xpose.msra.mxu0 0
    %587 = vmatprep.subr.bf16.mxu0 0
    %588 = vmatpush1.bf16.xpose.msra.mxu0 0
    %589 = vmatprep.mubr.bf16.mxu0 0
    %590 = vmatmul.mubr.bf16.gmra.mrb[0].mxu0 %v552
    %v591 = vpop.f32.mrb[0].mxu0
    %v592 = vadd.f32 0.0, %v591
    %v593 = vpop.f32.mrb[0].mxu0
    %v594 = vpop.f32.mrb[0].mxu0
    %v595 = vpop.f32.mrb[0].mxu0
    %596 = vdwg.mxu0
    %v597 = vmul.f32 %v592, 0.25
    %v598 = vsel %vm253, %v597, -inf
    %599 = vmax.xlane.f32.xlu0 %v598
    %v600 = vpop.xlane.xlu0 %599
    %v601 = vsub.f32 %v597, %v600
    %v602 = vmul.f32 %v601, 1.442695
    %v603 = vpow.pop %v602
    %v604 = vsel %vm253, %v603, 0.0
    %605 = vadd.xlane.f32.xlu0 %v604
    %v606 = vpop.xlane.xlu0 %605
    %v607 = vrcp.pop %v606
    %v608 = vmul.f32 %v603, %v607
    %s609 = scalar_lea.vmem %s23, 24
    %610 = vst.msk [vmem:[%s609] sm:$0xff] %vm253, %v608
    %v611 = vpack.c.bf16 %v608, %v608
    %612 = vrot.lane.b32.xlu0 %v434, 48
    %v613 = vpop.permute.xlu0 %612
    %v615 = vsel %vm253, %v611, 0
    %v618 = vsel %vm272, %v613, 0
    %620 = vmatprep.subr.bf16.mxu0 0
    %621 = vmatpush1.bf16.msra.mxu0 %v618
    %622 = vmatprep.subr.bf16.mxu0 0
    %623 = vmatpush1.bf16.msra.mxu0 0
    %624 = vmatprep.subr.bf16.mxu0 0
    %625 = vmatpush1.bf16.msra.mxu0 0
    %626 = vmatprep.subr.bf16.mxu0 0
    %627 = vmatpush1.bf16.msra.mxu0 0
    %628 = vmatprep.subr.bf16.mxu0 0
    %629 = vmatpush1.bf16.msra.mxu0 0
    %630 = vmatprep.subr.bf16.mxu0 0
    %631 = vmatpush1.bf16.msra.mxu0 0
    %632 = vmatprep.subr.bf16.mxu0 0
    %633 = vmatpush1.bf16.msra.mxu0 0
    %634 = vmatprep.subr.bf16.mxu0 0
    %635 = vmatpush1.bf16.msra.mxu0 0
    %636 = vmatprep.subr.bf16.mxu0 0
    %637 = vmatpush1.bf16.msra.mxu0 0
    %638 = vmatprep.subr.bf16.mxu0 0
    %639 = vmatpush1.bf16.msra.mxu0 0
    %640 = vmatprep.subr.bf16.mxu0 0
    %641 = vmatpush1.bf16.msra.mxu0 0
    %642 = vmatprep.subr.bf16.mxu0 0
    %643 = vmatpush1.bf16.msra.mxu0 0
    %644 = vmatprep.subr.bf16.mxu0 0
    %645 = vmatpush1.bf16.msra.mxu0 0
    %646 = vmatprep.subr.bf16.mxu0 0
    %647 = vmatpush1.bf16.msra.mxu0 0
    %648 = vmatprep.subr.bf16.mxu0 0
    %649 = vmatpush1.bf16.msra.mxu0 0
    %650 = vmatprep.subr.bf16.mxu0 0
    %651 = vmatpush1.bf16.msra.mxu0 0
    %652 = vmatprep.mubr.bf16.mxu0 0
    %653 = vmatmul.mubr.bf16.gmra.mrb[0].mxu0 %v615
    %v654 = vpop.f32.mrb[0].mxu0
    %v655 = vadd.f32 0.0, %v654
    %v656 = vpop.f32.mrb[0].mxu0
    %v657 = vpop.f32.mrb[0].mxu0
    %v658 = vpop.f32.mrb[0].mxu0
    %659 = vdwg.mxu0
    %661 = vrot.lane.b32.xlu0 %v655, 16
    %v662 = vpop.permute.xlu0 %661
    %v664 = vsel %vm205, %v542, %v662
    %v665 = vpack.c.bf16 %v664, %v433
    %v666 = vld [vmem:[%s5] sm:$0xf]
    %v667 = vld [vmem:[%s5 + $0x4] sm:$0xf]
    %v668 = vld [vmem:[%s5 + $0x8] sm:$0xf]
    %v669 = vld [vmem:[%s5 + $0xc] sm:$0xf]
    %v670 = vld [vmem:[%s6] sm:$0x1]
    %v672 = vlaneseq
    %v673 = vshrl.u32 %v672, 7
    %v674 = vsub.s32 0, %v673
    %v675 = vrot.slane %v670, %v674
    %v681 = vunpack.c.l.b16 %v666
    %v682 = vunpack.c.l.b16 %v667
    %v683 = vunpack.c.l.b16 %v668
    %v684 = vunpack.c.l.b16 %v669
    %v685 = vpack.c.b16 %v682, %v681
    %v686 = vpack.c.b16 %v684, %v683
    %v690 = vsel %vm89, %v665, 0
    %692 = vmatprep.subr.bf16.mxu0 0
    %693 = vmatpush1.bf16.msra.mxu0 %v685
    %694 = vmatprep.subr.bf16.mxu0 0
    %695 = vmatpush1.bf16.msra.mxu0 %v686
    %696 = vmatprep.subr.bf16.mxu0 0
    %697 = vmatpush1.bf16.msra.mxu0 0
    %698 = vmatprep.subr.bf16.mxu0 0
    %699 = vmatpush1.bf16.msra.mxu0 0
    %700 = vmatprep.subr.bf16.mxu0 0
    %701 = vmatpush1.bf16.msra.mxu0 0
    %702 = vmatprep.subr.bf16.mxu0 0
    %703 = vmatpush1.bf16.msra.mxu0 0
    %704 = vmatprep.subr.bf16.mxu0 0
    %705 = vmatpush1.bf16.msra.mxu0 0
    %706 = vmatprep.subr.bf16.mxu0 0
    %707 = vmatpush1.bf16.msra.mxu0 0
    %708 = vmatprep.subr.bf16.mxu0 0
    %709 = vmatpush1.bf16.msra.mxu0 0
    %710 = vmatprep.subr.bf16.mxu0 0
    %711 = vmatpush1.bf16.msra.mxu0 0
    %712 = vmatprep.subr.bf16.mxu0 0
    %713 = vmatpush1.bf16.msra.mxu0 0
    %714 = vmatprep.subr.bf16.mxu0 0
    %715 = vmatpush1.bf16.msra.mxu0 0
    %716 = vmatprep.subr.bf16.mxu0 0
    %717 = vmatpush1.bf16.msra.mxu0 0
    %718 = vmatprep.subr.bf16.mxu0 0
    %719 = vmatpush1.bf16.msra.mxu0 0
    %720 = vmatprep.subr.bf16.mxu0 0
    %721 = vmatpush1.bf16.msra.mxu0 0
    %722 = vmatprep.subr.bf16.mxu0 0
    %723 = vmatpush1.bf16.msra.mxu0 0
    %724 = vmatprep.mubr.bf16.mxu0 0
    %725 = vmatmul.mubr.bf16.gmra.mrb[0].mxu0 %v690
    %v726 = vpop.f32.mrb[0].mxu0
    %v727 = vadd.f32 %v675, %v726
    %v728 = vpop.f32.mrb[0].mxu0
    %v729 = vpop.f32.mrb[0].mxu0
    %v730 = vadd.f32 %v675, %v729
    %v731 = vpop.f32.mrb[0].mxu0
    %732 = vdwg.mxu0
    %v733 = vadd.f32 %v727, %v131
    %v734 = vadd.f32 %v730, %v132
    %v735 = vld [vmem:[%s7] sm:$0x1]
    %v736 = vld [vmem:[%s8] sm:$0x1]
    %v737 = vsel %vm89, %v733, 0.0
    %738 = vadd.xlane.f32.xlu0 %v737
    %v739 = vpop.xlane.xlu0 %738
    %v740 = vsel %vm89, %v734, 0.0
    %741 = vadd.xlane.f32.xlu0 %v740
    %v742 = vpop.xlane.xlu0 %741
    %v743 = vmul.f32 %v739, %v96
    %v744 = vmul.f32 %v742, %v96
    %v745 = vsub.f32 %v733, %v743
    %v746 = vsub.f32 %v734, %v744
    %v747 = vmul.f32 %v745, %v745
    %v748 = vmul.f32 %v746, %v746
    %v749 = vsel %vm89, %v747, 0.0
    %750 = vadd.xlane.f32.xlu0 %v749
    %v751 = vpop.xlane.xlu0 %750
    %v752 = vsel %vm89, %v748, 0.0
    %753 = vadd.xlane.f32.xlu0 %v752
    %v754 = vpop.xlane.xlu0 %753
    %v755 = vmul.f32 %v751, %v96
    %v756 = vmul.f32 %v754, %v96
    %v757 = vadd.f32 %v755, 1e-12
    %v758 = vadd.f32 %v756, 1e-12
    %v759 = vrsqrt.pop %v757
    %v760 = vrsqrt.pop %v758
    %v761 = vmul.f32 %v745, %v759
    %v762 = vmul.f32 %v746, %v760
    %v764 = vlaneseq
    %v765 = vshrl.u32 %v764, 7
    %v766 = vsub.s32 0, %v765
    %v767 = vrot.slane %v735, %v766
    %v769 = vmul.f32 %v761, %v767
    %v770 = vmul.f32 %v762, %v767
    %v772 = vlaneseq
    %v773 = vshrl.u32 %v772, 7
    %v774 = vsub.s32 0, %v773
    %v775 = vrot.slane %v736, %v774
    %v777 = vadd.f32 %v769, %v775
    %v778 = vadd.f32 %v770, %v775
    %v779 = vpack.c.bf16 %v778, %v777
    %v780 = vld [vmem:[%s9] sm:$0xf]
    %v781 = vld [vmem:[%s9 + $0x4] sm:$0xf]
    %v782 = vld [vmem:[%s9 + $0x8] sm:$0xf]
    %v783 = vld [vmem:[%s9 + $0xc] sm:$0xf]
    %v784 = vld [vmem:[%s10] sm:$0x1]
    %v786 = vlaneseq
    %v787 = vshrl.u32 %v786, 7
    %v788 = vsub.s32 0, %v787
    %v789 = vrot.slane %v784, %v788
    %v795 = vunpack.c.l.b16 %v780
    %v796 = vunpack.c.l.b16 %v781
    %v797 = vunpack.c.l.b16 %v782
    %v798 = vunpack.c.l.b16 %v783
    %v799 = vpack.c.b16 %v796, %v795
    %v800 = vpack.c.b16 %v798, %v797
    %v804 = vsel %vm89, %v779, 0
    %806 = vmatprep.subr.bf16.mxu0 0
    %807 = vmatpush1.bf16.msra.mxu0 %v799
    %808 = vmatprep.subr.bf16.mxu0 0
    %809 = vmatpush1.bf16.msra.mxu0 %v800
    %810 = vmatprep.subr.bf16.mxu0 0
    %811 = vmatpush1.bf16.msra.mxu0 0
    %812 = vmatprep.subr.bf16.mxu0 0
    %813 = vmatpush1.bf16.msra.mxu0 0
    %814 = vmatprep.subr.bf16.mxu0 0
    %815 = vmatpush1.bf16.msra.mxu0 0
    %816 = vmatprep.subr.bf16.mxu0 0
    %817 = vmatpush1.bf16.msra.mxu0 0
    %818 = vmatprep.subr.bf16.mxu0 0
    %819 = vmatpush1.bf16.msra.mxu0 0
    %820 = vmatprep.subr.bf16.mxu0 0
    %821 = vmatpush1.bf16.msra.mxu0 0
    %822 = vmatprep.subr.bf16.mxu0 0
    %823 = vmatpush1.bf16.msra.mxu0 0
    %824 = vmatprep.subr.bf16.mxu0 0
    %825 = vmatpush1.bf16.msra.mxu0 0
    %826 = vmatprep.subr.bf16.mxu0 0
    %827 = vmatpush1.bf16.msra.mxu0 0
    %828 = vmatprep.subr.bf16.mxu0 0
    %829 = vmatpush1.bf16.msra.mxu0 0
    %830 = vmatprep.subr.bf16.mxu0 0
    %831 = vmatpush1.bf16.msra.mxu0 0
    %832 = vmatprep.subr.bf16.mxu0 0
    %833 = vmatpush1.bf16.msra.mxu0 0
    %834 = vmatprep.subr.bf16.mxu0 0
    %835 = vmatpush1.bf16.msra.mxu0 0
    %836 = vmatprep.subr.bf16.mxu0 0
    %837 = vmatpush1.bf16.msra.mxu0 0
    %838 = vmatprep.mubr.bf16.mxu0 0
    %839 = vmatmul.mubr.bf16.gmra.mrb[0].mxu0 %v804
    %v840 = vpop.f32.mrb[0].mxu0
    %v841 = vadd.f32 %v789, %v840
    %v842 = vpop.f32.mrb[0].mxu0
    %v843 = vpop.f32.mrb[0].mxu0
    %v844 = vadd.f32 %v789, %v843
    %v845 = vpop.f32.mrb[0].mxu0
    %846 = vdwg.mxu0
    %v847 = vmul.f32 %v841, 0.5
    %v848 = vmul.f32 %v844, 0.5
    %v849 = vmul.f32 %v841, 0.044715
    %v850 = vmul.f32 %v844, 0.044715
    %v851 = vmul.f32 %v849, %v841
    %v852 = vmul.f32 %v850, %v844
    %v853 = vmul.f32 %v851, %v841
    %v854 = vmul.f32 %v852, %v844
    %v855 = vadd.f32 %v841, %v853
    %v856 = vadd.f32 %v844, %v854
    %v857 = vmul.f32 %v855, 0.7978846
    %v858 = vmul.f32 %v856, 0.7978846
    %v859 = vtanh.pop %v857
    %v860 = vtanh.pop %v858
    %v861 = vadd.f32 %v859, 1.0
    %v862 = vadd.f32 %v860, 1.0
    %v863 = vmul.f32 %v847, %v861
    %v864 = vmul.f32 %v848, %v862
    %v865 = vpack.c.bf16 %v864, %v863
    %v866 = vld [vmem:[%s11] sm:$0xf]
    %v867 = vld [vmem:[%s11 + $0x4] sm:$0xf]
    %v868 = vld [vmem:[%s11 + $0x8] sm:$0xf]
    %v869 = vld [vmem:[%s11 + $0xc] sm:$0xf]
    %v870 = vld [vmem:[%s11 + $0x10] sm:$0xf]
    %v871 = vld [vmem:[%s11 + $0x14] sm:$0xf]
    %v872 = vld [vmem:[%s11 + $0x18] sm:$0xf]
    %v873 = vld [vmem:[%s11 + $0x1c] sm:$0xf]
    %v874 = vld [vmem:[%s12] sm:$0x1]
    %v876 = vlaneseq
    %v877 = vshrl.u32 %v876, 7
    %v878 = vsub.s32 0, %v877
    %v879 = vrot.slane %v874, %v878
    %v889 = vunpack.c.l.b16 %v866
    %v890 = vunpack.c.l.b16 %v867
    %v891 = vunpack.c.l.b16 %v868
    %v892 = vunpack.c.l.b16 %v869
    %v893 = vunpack.c.l.b16 %v870
    %v894 = vunpack.c.l.b16 %v871
    %v895 = vunpack.c.l.b16 %v872
    %v896 = vunpack.c.l.b16 %v873
    %v897 = vpack.c.b16 %v890, %v889
    %v898 = vpack.c.b16 %v892, %v891
    %v899 = vpack.c.b16 %v894, %v893
    %v900 = vpack.c.b16 %v896, %v895
    %vm905 = vcmask 523264
    %v907 = vsel %vm905, %v865, 0
    %909 = vmatprep.subr.bf16.mxu0 0
    %910 = vmatpush1.bf16.msra.mxu0 %v897
    %911 = vmatprep.subr.bf16.mxu0 0
    %912 = vmatpush1.bf16.msra.mxu0 %v898
    %913 = vmatprep.subr.bf16.mxu0 0
    %914 = vmatpush1.bf16.msra.mxu0 %v899
    %915 = vmatprep.subr.bf16.mxu0 0
    %916 = vmatpush1.bf16.msra.mxu0 %v900
    %917 = vmatprep.subr.bf16.mxu0 0
    %918 = vmatpush1.bf16.msra.mxu0 0
    %919 = vmatprep.subr.bf16.mxu0 0
    %920 = vmatpush1.bf16.msra.mxu0 0
    %921 = vmatprep.subr.bf16.mxu0 0
    %922 = vmatpush1.bf16.msra.mxu0 0
    %923 = vmatprep.subr.bf16.mxu0 0
    %924 = vmatpush1.bf16.msra.mxu0 0
    %925 = vmatprep.subr.bf16.mxu0 0
    %926 = vmatpush1.bf16.msra.mxu0 0
    %927 = vmatprep.subr.bf16.mxu0 0
    %928 = vmatpush1.bf16.msra.mxu0 0
    %929 = vmatprep.subr.bf16.mxu0 0
    %930 = vmatpush1.bf16.msra.mxu0 0
    %931 = vmatprep.subr.bf16.mxu0 0
    %932 = vmatpush1.bf16.msra.mxu0 0
    %933 = vmatprep.subr.bf16.mxu0 0
    %934 = vmatpush1.bf16.msra.mxu0 0
    %935 = vmatprep.subr.bf16.mxu0 0
    %936 = vmatpush1.bf16.msra.mxu0 0
    %937 = vmatprep.subr.bf16.mxu0 0
    %938 = vmatpush1.bf16.msra.mxu0 0
    %939 = vmatprep.subr.bf16.mxu0 0
    %940 = vmatpush1.bf16.msra.mxu0 0
    %941 = vmatprep.mubr.bf16.mxu0 0
    %942 = vmatmul.mubr.bf16.gmra.mrb[0].mxu0 %v907
    %v943 = vpop.f32.mrb[0].mxu0
    %v944 = vadd.f32 %v879, %v943
    %v945 = vpop.f32.mrb[0].mxu0
    %v946 = vpop.f32.mrb[0].mxu0
    %v947 = vadd.f32 %v879, %v946
    %v948 = vpop.f32.mrb[0].mxu0
    %949 = vdwg.mxu0
    %v950 = vadd.f32 %v944, %v777
    %v951 = vadd.f32 %v947, %v778
    %v952 = vld [vmem:[%s13] sm:$0x1]
    %v953 = vld [vmem:[%s14] sm:$0x1]
    %v954 = vsel %vm89, %v950, 0.0
    %955 = vadd.xlane.f32.xlu0 %v954
    %v956 = vpop.xlane.xlu0 %955
    %v957 = vsel %vm89, %v951, 0.0
    %958 = vadd.xlane.f32.xlu0 %v957
    %v959 = vpop.xlane.xlu0 %958
    %v960 = vmul.f32 %v956, %v96
    %v961 = vmul.f32 %v959, %v96
    %v962 = vsub.f32 %v950, %v960
    %v963 = vsub.f32 %v951, %v961
    %v964 = vmul.f32 %v962, %v962
    %v965 = vmul.f32 %v963, %v963
    %v966 = vsel %vm89, %v964, 0.0
    %967 = vadd.xlane.f32.xlu0 %v966
    %v968 = vpop.xlane.xlu0 %967
    %v969 = vsel %vm89, %v965, 0.0
    %970 = vadd.xlane.f32.xlu0 %v969
    %v971 = vpop.xlane.xlu0 %970
    %v972 = vmul.f32 %v968, %v96
    %v973 = vmul.f32 %v971, %v96
    %v974 = vadd.f32 %v972, 1e-12
    %v975 = vadd.f32 %v973, 1e-12
    %v976 = vrsqrt.pop %v974
    %v977 = vrsqrt.pop %v975
    %v978 = vmul.f32 %v962, %v976
    %v979 = vmul.f32 %v963, %v977
    %v981 = vlaneseq
    %v982 = vshrl.u32 %v981, 7
    %v983 = vsub.s32 0, %v982
    %v984 = vrot.slane %v952, %v983
    %v986 = vmul.f32 %v978, %v984
    %v987 = vmul.f32 %v979, %v984
    %v989 = vlaneseq
    %v990 = vshrl.u32 %v989, 7
    %v991 = vsub.s32 0, %v990
    %v992 = vrot.slane %v953, %v991
    %v994 = vadd.f32 %v986, %v992
    %v995 = vadd.f32 %v987, %v992
    %v996 = vpack.c.bf16 %v995, %v994
    %s997 = scalar_lea.vmem %s3, 16
    %v998 = vld [vmem:[%s997] sm:$0xf]
    %v999 = vld [vmem:[%s997 + $0x4] sm:$0xf]
    %v1000 = vld [vmem:[%s997 + $0x8] sm:$0xf]
    %v1001 = vld [vmem:[%s997 + $0xc] sm:$0xf]
    %s1002 = scalar_lea.vmem %s4, 1
    %v1003 = vld [vmem:[%s1002] sm:$0x1]
    %v1005 = vlaneseq
    %v1006 = vshrl.u32 %v1005, 7
    %v1007 = vsub.s32 0, %v1006
    %v1008 = vrot.slane %v1003, %v1007
    %v1014 = vunpack.c.l.b16 %v998
    %v1015 = vunpack.c.l.b16 %v999
    %v1016 = vunpack.c.l.b16 %v1000
    %v1017 = vunpack.c.l.b16 %v1001
    %v1018 = vpack.c.b16 %v1015, %v1014
    %v1019 = vpack.c.b16 %v1017, %v1016
    %v1023 = vsel %vm89, %v996, 0
    %1025 = vmatprep.subr.bf16.mxu0 0
    %1026 = vmatpush1.bf16.msra.mxu0 %v1018
    %1027 = vmatprep.subr.bf16.mxu0 0
    %1028 = vmatpush1.bf16.msra.mxu0 %v1019
    %1029 = vmatprep.subr.bf16.mxu0 0
    %1030 = vmatpush1.bf16.msra.mxu0 0
    %1031 = vmatprep.subr.bf16.mxu0 0
    %1032 = vmatpush1.bf16.msra.mxu0 0
    %1033 = vmatprep.subr.bf16.mxu0 0
    %1034 = vmatpush1.bf16.msra.mxu0 0
    %1035 = vmatprep.subr.bf16.mxu0 0
    %1036 = vmatpush1.bf16.msra.mxu0 0
    %1037 = vmatprep.subr.bf16.mxu0 0
    %1038 = vmatpush1.bf16.msra.mxu0 0
    %1039 = vmatprep.subr.bf16.mxu0 0
    %1040 = vmatpush1.bf16.msra.mxu0 0
    %1041 = vmatprep.subr.bf16.mxu0 0
    %1042 = vmatpush1.bf16.msra.mxu0 0
    %1043 = vmatprep.subr.bf16.mxu0 0
    %1044 = vmatpush1.bf16.msra.mxu0 0
    %1045 = vmatprep.subr.bf16.mxu0 0
    %1046 = vmatpush1.bf16.msra.mxu0 0
    %1047 = vmatprep.subr.bf16.mxu0 0
    %1048 = vmatpush1.bf16.msra.mxu0 0
    %1049 = vmatprep.subr.bf16.mxu0 0
    %1050 = vmatpush1.bf16.msra.mxu0 0
    %1051 = vmatprep.subr.bf16.mxu0 0
    %1052 = vmatpush1.bf16.msra.mxu0 0
    %1053 = vmatprep.subr.bf16.mxu0 0
    %1054 = vmatpush1.bf16.msra.mxu0 0
    %1055 = vmatprep.subr.bf16.mxu0 0
    %1056 = vmatpush1.bf16.msra.mxu0 0
    %1057 = vmatprep.mubr.bf16.mxu0 0
    %1058 = vmatmul.mubr.bf16.gmra.mrb[0].mxu0 %v1023
    %v1059 = vpop.f32.mrb[0].mxu0
    %v1060 = vadd.f32 %v1008, %v1059
    %v1061 = vpop.f32.mrb[0].mxu0
    %v1062 = vpop.f32.mrb[0].mxu0
    %v1063 = vadd.f32 %v1008, %v1062
    %v1064 = vpop.f32.mrb[0].mxu0
    %1065 = vdwg.mxu0
    %v1066 = vpack.c.bf16 %v1060, %v1060
    %1068 = vrot.lane.b32.xlu0 %v1066, 96
    %v1069 = vpop.permute.xlu0 %1068
    %v1071 = vsel %vm205, %v1066, 0
    %v1074 = vsel %vm205, %v1069, 0
    %1076 = vmatprep.subr.bf16.mxu0 0
    %1077 = vmatpush1.bf16.xpose.msra.mxu0 %v1074
    %1078 = vmatprep.subr.bf16.mxu0 0
    %1079 = vmatpush1.bf16.xpose.msra.mxu0 0
    %1080 = vmatprep.subr.bf16.mxu0 0
    %1081 = vmatpush1.bf16.xpose.msra.mxu0 0
    %1082 = vmatprep.subr.bf16.mxu0 0
    %1083 = vmatpush1.bf16.xpose.msra.mxu0 0
    %1084 = vmatprep.subr.bf16.mxu0 0
    %1085 = vmatpush1.bf16.xpose.msra.mxu0 0
    %1086 = vmatprep.subr.bf16.mxu0 0
    %1087 = vmatpush1.bf16.xpose.msra.mxu0 0
    %1088 = vmatprep.subr.bf16.mxu0 0
    %1089 = vmatpush1.bf16.xpose.msra.mxu0 0
    %1090 = vmatprep.subr.bf16.mxu0 0
    %1091 = vmatpush1.bf16.xpose.msra.mxu0 0
    %1092 = vmatprep.subr.bf16.mxu0 0
    %1093 = vmatpush1.bf16.xpose.msra.mxu0 0
    %1094 = vmatprep.subr.bf16.mxu0 0
    %1095 = vmatpush1.bf16.xpose.msra.mxu0 0
    %1096 = vmatprep.subr.bf16.mxu0 0
    %1097 = vmatpush1.bf16.xpose.msra.mxu0 0
    %1098 = vmatprep.subr.bf16.mxu0 0
    %1099 = vmatpush1.bf16.xpose.msra.mxu0 0
    %1100 = vmatprep.subr.bf16.mxu0 0
    %1101 = vmatpush1.bf16.xpose.msra.mxu0 0
    %1102 = vmatprep.subr.bf16.mxu0 0
    %1103 = vmatpush1.bf16.xpose.msra.mxu0 0
    %1104 = vmatprep.subr.bf16.mxu0 0
    %1105 = vmatpush1.bf16.xpose.msra.mxu0 0
    %1106 = vmatprep.subr.bf16.mxu0 0
    %1107 = vmatpush1.bf16.xpose.msra.mxu0 0
    %1108 = vmatprep.mubr.bf16.mxu0 0
    %1109 = vmatmul.mubr.bf16.gmra.mrb[0].mxu0 %v1071
    %v1110 = vpop.f32.mrb[0].mxu0
    %v1111 = vadd.f32 0.0, %v1110
    %v1112 = vpop.f32.mrb[0].mxu0
    %v1113 = vpop.f32.mrb[0].mxu0
    %v1114 = vpop.f32.mrb[0].mxu0
    %1115 = vdwg.mxu0
    %v1116 = vmul.f32 %v1111, 0.25
    %v1117 = vsel %vm253, %v1116, -inf
    %1118 = vmax.xlane.f32.xlu0 %v1117
    %v1119 = vpop.xlane.xlu0 %1118
    %v1120 = vsub.f32 %v1116, %v1119
    %v1121 = vmul.f32 %v1120, 1.442695
    %v1122 = vpow.pop %v1121
    %v1123 = vsel %vm253, %v1122, 0.0
    %1124 = vadd.xlane.f32.xlu0 %v1123
    %v1125 = vpop.xlane.xlu0 %1124
    %v1126 = vrcp.pop %v1125
    %v1127 = vmul.f32 %v1122, %v1126
    %s1128 = scalar_lea.vmem %s23, 32
    %1129 = vst.msk [vmem:[%s1128] sm:$0xff] %vm253, %v1127
    %v1130 = vpack.c.bf16 %v1127, %v1127
    %1131 = vrot.lane.b32.xlu0 %v1066, 64
    %v1132 = vpop.permute.xlu0 %1131
    %v1134 = vsel %vm253, %v1130, 0
    %v1137 = vsel %vm272, %v1132, 0
    %1139 = vmatprep.subr.bf16.mxu0 0
    %1140 = vmatpush1.bf16.msra.mxu0 %v1137
    %1141 = vmatprep.subr.bf16.mxu0 0
    %1142 = vmatpush1.bf16.msra.mxu0 0
    %1143 = vmatprep.subr.bf16.mxu0 0
    %1144 = vmatpush1.bf16.msra.mxu0 0
    %1145 = vmatprep.subr.bf16.mxu0 0
    %1146 = vmatpush1.bf16.msra.mxu0 0
    %1147 = vmatprep.subr.bf16.mxu0 0
    %1148 = vmatpush1.bf16.msra.mxu0 0
    %1149 = vmatprep.subr.bf16.mxu0 0
    %1150 = vmatpush1.bf16.msra.mxu0 0
    %1151 = vmatprep.subr.bf16.mxu0 0
    %1152 = vmatpush1.bf16.msra.mxu0 0
    %1153 = vmatprep.subr.bf16.mxu0 0
    %1154 = vmatpush1.bf16.msra.mxu0 0
    %1155 = vmatprep.subr.bf16.mxu0 0
    %1156 = vmatpush1.bf16.msra.mxu0 0
    %1157 = vmatprep.subr.bf16.mxu0 0
    %1158 = vmatpush1.bf16.msra.mxu0 0
    %1159 = vmatprep.subr.bf16.mxu0 0
    %1160 = vmatpush1.bf16.msra.mxu0 0
    %1161 = vmatprep.subr.bf16.mxu0 0
    %1162 = vmatpush1.bf16.msra.mxu0 0
    %1163 = vmatprep.subr.bf16.mxu0 0
    %1164 = vmatpush1.bf16.msra.mxu0 0
    %1165 = vmatprep.subr.bf16.mxu0 0
    %1166 = vmatpush1.bf16.msra.mxu0 0
    %1167 = vmatprep.subr.bf16.mxu0 0
    %1168 = vmatpush1.bf16.msra.mxu0 0
    %1169 = vmatprep.subr.bf16.mxu0 0
    %1170 = vmatpush1.bf16.msra.mxu0 0
    %1171 = vmatprep.mubr.bf16.mxu0 0
    %1172 = vmatmul.mubr.bf16.gmra.mrb[0].mxu0 %v1134
    %v1173 = vpop.f32.mrb[0].mxu0
    %v1174 = vadd.f32 0.0, %v1173
    %v1175 = vpop.f32.mrb[0].mxu0
    %v1176 = vpop.f32.mrb[0].mxu0
    %v1177 = vpop.f32.mrb[0].mxu0
    %1178 = vdwg.mxu0
    %1179 = vrot.lane.b32.xlu0 %v1066, 112
    %v1180 = vpop.permute.xlu0 %1179
    %1181 = vrot.lane.b32.xlu0 %v1066, 80
    %v1182 = vpop.permute.xlu0 %1181
    %v1184 = vsel %vm205, %v1180, 0
    %v1187 = vsel %vm205, %v1182, 0
    %1189 = vmatprep.subr.bf16.mxu0 0
    %1190 = vmatpush1.bf16.xpose.msra.mxu0 %v1187
    %1191 = vmatprep.subr.bf16.mxu0 0
    %1192 = vmatpush1.bf16.xpose.msra.mxu0 0
    %1193 = vmatprep.subr.bf16.mxu0 0
    %1194 = vmatpush1.bf16.xpose.msra.mxu0 0
    %1195 = vmatprep.subr.bf16.mxu0 0
    %1196 = vmatpush1.bf16.xpose.msra.mxu0 0
    %1197 = vmatprep.subr.bf16.mxu0 0
    %1198 = vmatpush1.bf16.xpose.msra.mxu0 0
    %1199 = vmatprep.subr.bf16.mxu0 0
    %1200 = vmatpush1.bf16.xpose.msra.mxu0 0
    %1201 = vmatprep.subr.bf16.mxu0 0
    %1202 = vmatpush1.bf16.xpose.msra.mxu0 0
    %1203 = vmatprep.subr.bf16.mxu0 0
    %1204 = vmatpush1.bf16.xpose.msra.mxu0 0
    %1205 = vmatprep.subr.bf16.mxu0 0
    %1206 = vmatpush1.bf16.xpose.msra.mxu0 0
    %1207 = vmatprep.subr.bf16.mxu0 0
    %1208 = vmatpush1.bf16.xpose.msra.mxu0 0
    %1209 = vmatprep.subr.bf16.mxu0 0
    %1210 = vmatpush1.bf16.xpose.msra.mxu0 0
    %1211 = vmatprep.subr.bf16.mxu0 0
    %1212 = vmatpush1.bf16.xpose.msra.mxu0 0
    %1213 = vmatprep.subr.bf16.mxu0 0
    %1214 = vmatpush1.bf16.xpose.msra.mxu0 0
    %1215 = vmatprep.subr.bf16.mxu0 0
    %1216 = vmatpush1.bf16.xpose.msra.mxu0 0
    %1217 = vmatprep.subr.bf16.mxu0 0
    %1218 = vmatpush1.bf16.xpose.msra.mxu0 0
    %1219 = vmatprep.subr.bf16.mxu0 0
    %1220 = vmatpush1.bf16.xpose.msra.mxu0 0
    %1221 = vmatprep.mubr.bf16.mxu0 0
    %1222 = vmatmul.mubr.bf16.gmra.mrb[0].mxu0 %v1184
    %v1223 = vpop.f32.mrb[0].mxu0
    %v1224 = vadd.f32 0.0, %v1223
    %v1225 = vpop.f32.mrb[0].mxu0
    %v1226 = vpop.f32.mrb[0].mxu0
    %v1227 = vpop.f32.mrb[0].mxu0
    %1228 = vdwg.mxu0
    %v1229 = vmul.f32 %v1224, 0.25
    %v1230 = vsel %vm253, %v1229, -inf
    %1231 = vmax.xlane.f32.xlu0 %v1230
    %v1232 = vpop.xlane.xlu0 %1231
    %v1233 = vsub.f32 %v1229, %v1232
    %v1234 = vmul.f32 %v1233, 1.442695
    %v1235 = vpow.pop %v1234
    %v1236 = vsel %vm253, %v1235, 0.0
    %1237 = vadd.xlane.f32.xlu0 %v1236
    %v1238 = vpop.xlane.xlu0 %1237
    %v1239 = vrcp.pop %v1238
    %v1240 = vmul.f32 %v1235, %v1239
    %s1241 = scalar_lea.vmem %s23, 40
    %1242 = vst.msk [vmem:[%s1241] sm:$0xff] %vm253, %v1240
    %v1243 = vpack.c.bf16 %v1240, %v1240
    %1244 = vrot.lane.b32.xlu0 %v1066, 48
    %v1245 = vpop.permute.xlu0 %1244
    %v1247 = vsel %vm253, %v1243, 0
    %v1250 = vsel %vm272, %v1245, 0
    %1252 = vmatprep.subr.bf16.mxu0 0
    %1253 = vmatpush1.bf16.msra.mxu0 %v1250
    %1254 = vmatprep.subr.bf16.mxu0 0
    %1255 = vmatpush1.bf16.msra.mxu0 0
    %1256 = vmatprep.subr.bf16.mxu0 0
    %1257 = vmatpush1.bf16.msra.mxu0 0
    %1258 = vmatprep.subr.bf16.mxu0 0
    %1259 = vmatpush1.bf16.msra.mxu0 0
    %1260 = vmatprep.subr.bf16.mxu0 0
    %1261 = vmatpush1.bf16.msra.mxu0 0
    %1262 = vmatprep.subr.bf16.mxu0 0
    %1263 = vmatpush1.bf16.msra.mxu0 0
    %1264 = vmatprep.subr.bf16.mxu0 0
    %1265 = vmatpush1.bf16.msra.mxu0 0
    %1266 = vmatprep.subr.bf16.mxu0 0
    %1267 = vmatpush1.bf16.msra.mxu0 0
    %1268 = vmatprep.subr.bf16.mxu0 0
    %1269 = vmatpush1.bf16.msra.mxu0 0
    %1270 = vmatprep.subr.bf16.mxu0 0
    %1271 = vmatpush1.bf16.msra.mxu0 0
    %1272 = vmatprep.subr.bf16.mxu0 0
    %1273 = vmatpush1.bf16.msra.mxu0 0
    %1274 = vmatprep.subr.bf16.mxu0 0
    %1275 = vmatpush1.bf16.msra.mxu0 0
    %1276 = vmatprep.subr.bf16.mxu0 0
    %1277 = vmatpush1.bf16.msra.mxu0 0
    %1278 = vmatprep.subr.bf16.mxu0 0
    %1279 = vmatpush1.bf16.msra.mxu0 0
    %1280 = vmatprep.subr.bf16.mxu0 0
    %1281 = vmatpush1.bf16.msra.mxu0 0
    %1282 = vmatprep.subr.bf16.mxu0 0
    %1283 = vmatpush1.bf16.msra.mxu0 0
    %1284 = vmatprep.mubr.bf16.mxu0 0
    %1285 = vmatmul.mubr.bf16.gmra.mrb[0].mxu0 %v1247
    %v1286 = vpop.f32.mrb[0].mxu0
    %v1287 = vadd.f32 0.0, %v1286
    %v1288 = vpop.f32.mrb[0].mxu0
    %v1289 = vpop.f32.mrb[0].mxu0
    %v1290 = vpop.f32.mrb[0].mxu0
    %1291 = vdwg.mxu0
    %1293 = vrot.lane.b32.xlu0 %v1287, 16
    %v1294 = vpop.permute.xlu0 %1293
    %v1296 = vsel %vm205, %v1174, %v1294
    %v1297 = vpack.c.bf16 %v1063, %v1063
    %1299 = vrot.lane.b32.xlu0 %v1297, 96
    %v1300 = vpop.permute.xlu0 %1299
    %v1302 = vsel %vm205, %v1297, 0
    %v1305 = vsel %vm205, %v1300, 0
    %1307 = vmatprep.subr.bf16.mxu0 0
    %1308 = vmatpush1.bf16.xpose.msra.mxu0 %v1305
    %1309 = vmatprep.subr.bf16.mxu0 0
    %1310 = vmatpush1.bf16.xpose.msra.mxu0 0
    %1311 = vmatprep.subr.bf16.mxu0 0
    %1312 = vmatpush1.bf16.xpose.msra.mxu0 0
    %1313 = vmatprep.subr.bf16.mxu0 0
    %1314 = vmatpush1.bf16.xpose.msra.mxu0 0
    %1315 = vmatprep.subr.bf16.mxu0 0
    %1316 = vmatpush1.bf16.xpose.msra.mxu0 0
    %1317 = vmatprep.subr.bf16.mxu0 0
    %1318 = vmatpush1.bf16.xpose.msra.mxu0 0
    %1319 = vmatprep.subr.bf16.mxu0 0
    %1320 = vmatpush1.bf16.xpose.msra.mxu0 0
    %1321 = vmatprep.subr.bf16.mxu0 0
    %1322 = vmatpush1.bf16.xpose.msra.mxu0 0
    %1323 = vmatprep.subr.bf16.mxu0 0
    %1324 = vmatpush1.bf16.xpose.msra.mxu0 0
    %1325 = vmatprep.subr.bf16.mxu0 0
    %1326 = vmatpush1.bf16.xpose.msra.mxu0 0
    %1327 = vmatprep.subr.bf16.mxu0 0
    %1328 = vmatpush1.bf16.xpose.msra.mxu0 0
    %1329 = vmatprep.subr.bf16.mxu0 0
    %1330 = vmatpush1.bf16.xpose.msra.mxu0 0
    %1331 = vmatprep.subr.bf16.mxu0 0
    %1332 = vmatpush1.bf16.xpose.msra.mxu0 0
    %1333 = vmatprep.subr.bf16.mxu0 0
    %1334 = vmatpush1.bf16.xpose.msra.mxu0 0
    %1335 = vmatprep.subr.bf16.mxu0 0
    %1336 = vmatpush1.bf16.xpose.msra.mxu0 0
    %1337 = vmatprep.subr.bf16.mxu0 0
    %1338 = vmatpush1.bf16.xpose.msra.mxu0 0
    %1339 = vmatprep.mubr.bf16.mxu0 0
    %1340 = vmatmul.mubr.bf16.gmra.mrb[0].mxu0 %v1302
    %v1341 = vpop.f32.mrb[0].mxu0
    %v1342 = vadd.f32 0.0, %v1341
    %v1343 = vpop.f32.mrb[0].mxu0
    %v1344 = vpop.f32.mrb[0].mxu0
    %v1345 = vpop.f32.mrb[0].mxu0
    %1346 = vdwg.mxu0
    %v1347 = vmul.f32 %v1342, 0.25
    %v1348 = vsel %vm253, %v1347, -inf
    %1349 = vmax.xlane.f32.xlu0 %v1348
    %v1350 = vpop.xlane.xlu0 %1349
    %v1351 = vsub.f32 %v1347, %v1350
    %v1352 = vmul.f32 %v1351, 1.442695
    %v1353 = vpow.pop %v1352
    %v1354 = vsel %vm253, %v1353, 0.0
    %1355 = vadd.xlane.f32.xlu0 %v1354
    %v1356 = vpop.xlane.xlu0 %1355
    %v1357 = vrcp.pop %v1356
    %v1358 = vmul.f32 %v1353, %v1357
    %s1359 = scalar_lea.vmem %s23, 48
    %1360 = vst.msk [vmem:[%s1359] sm:$0xff] %vm253, %v1358
    %v1361 = vpack.c.bf16 %v1358, %v1358
    %1362 = vrot.lane.b32.xlu0 %v1297, 64
    %v1363 = vpop.permute.xlu0 %1362
    %v1365 = vsel %vm253, %v1361, 0
    %v1368 = vsel %vm272, %v1363, 0
    %1370 = vmatprep.subr.bf16.mxu0 0
    %1371 = vmatpush1.bf16.msra.mxu0 %v1368
    %1372 = vmatprep.subr.bf16.mxu0 0
    %1373 = vmatpush1.bf16.msra.mxu0 0
    %1374 = vmatprep.subr.bf16.mxu0 0
    %1375 = vmatpush1.bf16.msra.mxu0 0
    %1376 = vmatprep.subr.bf16.mxu0 0
    %1377 = vmatpush1.bf16.msra.mxu0 0
    %1378 = vmatprep.subr.bf16.mxu0 0
    %1379 = vmatpush1.bf16.msra.mxu0 0
    %1380 = vmatprep.subr.bf16.mxu0 0
    %1381 = vmatpush1.bf16.msra.mxu0 0
    %1382 = vmatprep.subr.bf16.mxu0 0
    %1383 = vmatpush1.bf16.msra.mxu0 0
    %1384 = vmatprep.subr.bf16.mxu0 0
    %1385 = vmatpush1.bf16.msra.mxu0 0
    %1386 = vmatprep.subr.bf16.mxu0 0
    %1387 = vmatpush1.bf16.msra.mxu0 0
    %1388 = vmatprep.subr.bf16.mxu0 0
    %1389 = vmatpush1.bf16.msra.mxu0 0
    %1390 = vmatprep.subr.bf16.mxu0 0
    %1391 = vmatpush1.bf16.msra.mxu0 0
    %1392 = vmatprep.subr.bf16.mxu0 0
    %1393 = vmatpush1.bf16.msra.mxu0 0
    %1394 = vmatprep.subr.bf16.mxu0 0
    %1395 = vmatpush1.bf16.msra.mxu0 0
    %1396 = vmatprep.subr.bf16.mxu0 0
    %1397 = vmatpush1.bf16.msra.mxu0 0
    %1398 = vmatprep.subr.bf16.mxu0 0
    %1399 = vmatpush1.bf16.msra.mxu0 0
    %1400 = vmatprep.subr.bf16.mxu0 0
    %1401 = vmatpush1.bf16.msra.mxu0 0
    %1402 = vmatprep.mubr.bf16.mxu0 0
    %1403 = vmatmul.mubr.bf16.gmra.mrb[0].mxu0 %v1365
    %v1404 = vpop.f32.mrb[0].mxu0
    %v1405 = vadd.f32 0.0, %v1404
    %v1406 = vpop.f32.mrb[0].mxu0
    %v1407 = vpop.f32.mrb[0].mxu0
    %v1408 = vpop.f32.mrb[0].mxu0
    %1409 = vdwg.mxu0
    %1410 = vrot.lane.b32.xlu0 %v1297, 112
    %v1411 = vpop.permute.xlu0 %1410
    %1412 = vrot.lane.b32.xlu0 %v1297, 80
    %v1413 = vpop.permute.xlu0 %1412
    %v1415 = vsel %vm205, %v1411, 0
    %v1418 = vsel %vm205, %v1413, 0
    %1420 = vmatprep.subr.bf16.mxu0 0
    %1421 = vmatpush1.bf16.xpose.msra.mxu0 %v1418
    %1422 = vmatprep.subr.bf16.mxu0 0
    %1423 = vmatpush1.bf16.xpose.msra.mxu0 0
    %1424 = vmatprep.subr.bf16.mxu0 0
    %1425 = vmatpush1.bf16.xpose.msra.mxu0 0
    %1426 = vmatprep.subr.bf16.mxu0 0
    %1427 = vmatpush1.bf16.xpose.msra.mxu0 0
    %1428 = vmatprep.subr.bf16.mxu0 0
    %1429 = vmatpush1.bf16.xpose.msra.mxu0 0
    %1430 = vmatprep.subr.bf16.mxu0 0
    %1431 = vmatpush1.bf16.xpose.msra.mxu0 0
    %1432 = vmatprep.subr.bf16.mxu0 0
    %1433 = vmatpush1.bf16.xpose.msra.mxu0 0
    %1434 = vmatprep.subr.bf16.mxu0 0
    %1435 = vmatpush1.bf16.xpose.msra.mxu0 0
    %1436 = vmatprep.subr.bf16.mxu0 0
    %1437 = vmatpush1.bf16.xpose.msra.mxu0 0
    %1438 = vmatprep.subr.bf16.mxu0 0
    %1439 = vmatpush1.bf16.xpose.msra.mxu0 0
    %1440 = vmatprep.subr.bf16.mxu0 0
    %1441 = vmatpush1.bf16.xpose.msra.mxu0 0
    %1442 = vmatprep.subr.bf16.mxu0 0
    %1443 = vmatpush1.bf16.xpose.msra.mxu0 0
    %1444 = vmatprep.subr.bf16.mxu0 0
    %1445 = vmatpush1.bf16.xpose.msra.mxu0 0
    %1446 = vmatprep.subr.bf16.mxu0 0
    %1447 = vmatpush1.bf16.xpose.msra.mxu0 0
    %1448 = vmatprep.subr.bf16.mxu0 0
    %1449 = vmatpush1.bf16.xpose.msra.mxu0 0
    %1450 = vmatprep.subr.bf16.mxu0 0
    %1451 = vmatpush1.bf16.xpose.msra.mxu0 0
    %1452 = vmatprep.mubr.bf16.mxu0 0
    %1453 = vmatmul.mubr.bf16.gmra.mrb[0].mxu0 %v1415
    %v1454 = vpop.f32.mrb[0].mxu0
    %v1455 = vadd.f32 0.0, %v1454
    %v1456 = vpop.f32.mrb[0].mxu0
    %v1457 = vpop.f32.mrb[0].mxu0
    %v1458 = vpop.f32.mrb[0].mxu0
    %1459 = vdwg.mxu0
    %v1460 = vmul.f32 %v1455, 0.25
    %v1461 = vsel %vm253, %v1460, -inf
    %1462 = vmax.xlane.f32.xlu0 %v1461
    %v1463 = vpop.xlane.xlu0 %1462
    %v1464 = vsub.f32 %v1460, %v1463
    %v1465 = vmul.f32 %v1464, 1.442695
    %v1466 = vpow.pop %v1465
    %v1467 = vsel %vm253, %v1466, 0.0
    %1468 = vadd.xlane.f32.xlu0 %v1467
    %v1469 = vpop.xlane.xlu0 %1468
    %v1470 = vrcp.pop %v1469
    %v1471 = vmul.f32 %v1466, %v1470
    %s1472 = scalar_lea.vmem %s23, 56
    %1473 = vst.msk [vmem:[%s1472] sm:$0xff] %vm253, %v1471
    %v1474 = vpack.c.bf16 %v1471, %v1471
    %1475 = vrot.lane.b32.xlu0 %v1297, 48
    %v1476 = vpop.permute.xlu0 %1475
    %v1478 = vsel %vm253, %v1474, 0
    %v1481 = vsel %vm272, %v1476, 0
    %1483 = vmatprep.subr.bf16.mxu0 0
    %1484 = vmatpush1.bf16.msra.mxu0 %v1481
    %1485 = vmatprep.subr.bf16.mxu0 0
    %1486 = vmatpush1.bf16.msra.mxu0 0
    %1487 = vmatprep.subr.bf16.mxu0 0
    %1488 = vmatpush1.bf16.msra.mxu0 0
    %1489 = vmatprep.subr.bf16.mxu0 0
    %1490 = vmatpush1.bf16.msra.mxu0 0
    %1491 = vmatprep.subr.bf16.mxu0 0
    %1492 = vmatpush1.bf16.msra.mxu0 0
    %1493 = vmatprep.subr.bf16.mxu0 0
    %1494 = vmatpush1.bf16.msra.mxu0 0
    %1495 = vmatprep.subr.bf16.mxu0 0
    %1496 = vmatpush1.bf16.msra.mxu0 0
    %1497 = vmatprep.subr.bf16.mxu0 0
    %1498 = vmatpush1.bf16.msra.mxu0 0
    %1499 = vmatprep.subr.bf16.mxu0 0
    %1500 = vmatpush1.bf16.msra.mxu0 0
    %1501 = vmatprep.subr.bf16.mxu0 0
    %1502 = vmatpush1.bf16.msra.mxu0 0
    %1503 = vmatprep.subr.bf16.mxu0 0
    %1504 = vmatpush1.bf16.msra.mxu0 0
    %1505 = vmatprep.subr.bf16.mxu0 0
    %1506 = vmatpush1.bf16.msra.mxu0 0
    %1507 = vmatprep.subr.bf16.mxu0 0
    %1508 = vmatpush1.bf16.msra.mxu0 0
    %1509 = vmatprep.subr.bf16.mxu0 0
    %1510 = vmatpush1.bf16.msra.mxu0 0
    %1511 = vmatprep.subr.bf16.mxu0 0
    %1512 = vmatpush1.bf16.msra.mxu0 0
    %1513 = vmatprep.subr.bf16.mxu0 0
    %1514 = vmatpush1.bf16.msra.mxu0 0
    %1515 = vmatprep.mubr.bf16.mxu0 0
    %1516 = vmatmul.mubr.bf16.gmra.mrb[0].mxu0 %v1478
    %v1517 = vpop.f32.mrb[0].mxu0
    %v1518 = vadd.f32 0.0, %v1517
    %v1519 = vpop.f32.mrb[0].mxu0
    %v1520 = vpop.f32.mrb[0].mxu0
    %v1521 = vpop.f32.mrb[0].mxu0
    %1522 = vdwg.mxu0
    %1524 = vrot.lane.b32.xlu0 %v1518, 16
    %v1525 = vpop.permute.xlu0 %1524
    %v1527 = vsel %vm205, %v1405, %v1525
    %v1528 = vpack.c.bf16 %v1527, %v1296
    %s1529 = scalar_lea.vmem %s5, 16
    %v1530 = vld [vmem:[%s1529] sm:$0xf]
    %v1531 = vld [vmem:[%s1529 + $0x4] sm:$0xf]
    %v1532 = vld [vmem:[%s1529 + $0x8] sm:$0xf]
    %v1533 = vld [vmem:[%s1529 + $0xc] sm:$0xf]
    %s1534 = scalar_lea.vmem %s6, 1
    %v1535 = vld [vmem:[%s1534] sm:$0x1]
    %v1537 = vlaneseq
    %v1538 = vshrl.u32 %v1537, 7
    %v1539 = vsub.s32 0, %v1538
    %v1540 = vrot.slane %v1535, %v1539
    %v1546 = vunpack.c.l.b16 %v1530
    %v1547 = vunpack.c.l.b16 %v1531
    %v1548 = vunpack.c.l.b16 %v1532
    %v1549 = vunpack.c.l.b16 %v1533
    %v1550 = vpack.c.b16 %v1547, %v1546
    %v1551 = vpack.c.b16 %v1549, %v1548
    %v1555 = vsel %vm89, %v1528, 0
    %1557 = vmatprep.subr.bf16.mxu0 0
    %1558 = vmatpush1.bf16.msra.mxu0 %v1550
    %1559 = vmatprep.subr.bf16.mxu0 0
    %1560 = vmatpush1.bf16.msra.mxu0 %v1551
    %1561 = vmatprep.subr.bf16.mxu0 0
    %1562 = vmatpush1.bf16.msra.mxu0 0
    %1563 = vmatprep.subr.bf16.mxu0 0
    %1564 = vmatpush1.bf16.msra.mxu0 0
    %1565 = vmatprep.subr.bf16.mxu0 0
    %1566 = vmatpush1.bf16.msra.mxu0 0
    %1567 = vmatprep.subr.bf16.mxu0 0
    %1568 = vmatpush1.bf16.msra.mxu0 0
    %1569 = vmatprep.subr.bf16.mxu0 0
    %1570 = vmatpush1.bf16.msra.mxu0 0
    %1571 = vmatprep.subr.bf16.mxu0 0
    %1572 = vmatpush1.bf16.msra.mxu0 0
    %1573 = vmatprep.subr.bf16.mxu0 0
    %1574 = vmatpush1.bf16.msra.mxu0 0
    %1575 = vmatprep.subr.bf16.mxu0 0
    %1576 = vmatpush1.bf16.msra.mxu0 0
    %1577 = vmatprep.subr.bf16.mxu0 0
    %1578 = vmatpush1.bf16.msra.mxu0 0
    %1579 = vmatprep.subr.bf16.mxu0 0
    %1580 = vmatpush1.bf16.msra.mxu0 0
    %1581 = vmatprep.subr.bf16.mxu0 0
    %1582 = vmatpush1.bf16.msra.mxu0 0
    %1583 = vmatprep.subr.bf16.mxu0 0
    %1584 = vmatpush1.bf16.msra.mxu0 0
    %1585 = vmatprep.subr.bf16.mxu0 0
    %1586 = vmatpush1.bf16.msra.mxu0 0
    %1587 = vmatprep.subr.bf16.mxu0 0
    %1588 = vmatpush1.bf16.msra.mxu0 0
    %1589 = vmatprep.mubr.bf16.mxu0 0
    %1590 = vmatmul.mubr.bf16.gmra.mrb[0].mxu0 %v1555
    %v1591 = vpop.f32.mrb[0].mxu0
    %v1592 = vadd.f32 %v1540, %v1591
    %v1593 = vpop.f32.mrb[0].mxu0
    %v1594 = vpop.f32.mrb[0].mxu0
    %v1595 = vadd.f32 %v1540, %v1594
    %v1596 = vpop.f32.mrb[0].mxu0
    %1597 = vdwg.mxu0
    %v1598 = vadd.f32 %v1592, %v994
    %v1599 = vadd.f32 %v1595, %v995
    %s1600 = scalar_lea.vmem %s7, 1
    %v1601 = vld [vmem:[%s1600] sm:$0x1]
    %s1602 = scalar_lea.vmem %s8, 1
    %v1603 = vld [vmem:[%s1602] sm:$0x1]
    %v1604 = vsel %vm89, %v1598, 0.0
    %1605 = vadd.xlane.f32.xlu0 %v1604
    %v1606 = vpop.xlane.xlu0 %1605
    %v1607 = vsel %vm89, %v1599, 0.0
    %1608 = vadd.xlane.f32.xlu0 %v1607
    %v1609 = vpop.xlane.xlu0 %1608
    %v1610 = vmul.f32 %v1606, %v96
    %v1611 = vmul.f32 %v1609, %v96
    %v1612 = vsub.f32 %v1598, %v1610
    %v1613 = vsub.f32 %v1599, %v1611
    %v1614 = vmul.f32 %v1612, %v1612
    %v1615 = vmul.f32 %v1613, %v1613
    %v1616 = vsel %vm89, %v1614, 0.0
    %1617 = vadd.xlane.f32.xlu0 %v1616
    %v1618 = vpop.xlane.xlu0 %1617
    %v1619 = vsel %vm89, %v1615, 0.0
    %1620 = vadd.xlane.f32.xlu0 %v1619
    %v1621 = vpop.xlane.xlu0 %1620
    %v1622 = vmul.f32 %v1618, %v96
    %v1623 = vmul.f32 %v1621, %v96
    %v1624 = vadd.f32 %v1622, 1e-12
    %v1625 = vadd.f32 %v1623, 1e-12
    %v1626 = vrsqrt.pop %v1624
    %v1627 = vrsqrt.pop %v1625
    %v1628 = vmul.f32 %v1612, %v1626
    %v1629 = vmul.f32 %v1613, %v1627
    %v1631 = vlaneseq
    %v1632 = vshrl.u32 %v1631, 7
    %v1633 = vsub.s32 0, %v1632
    %v1634 = vrot.slane %v1601, %v1633
    %v1636 = vmul.f32 %v1628, %v1634
    %v1637 = vmul.f32 %v1629, %v1634
    %v1639 = vlaneseq
    %v1640 = vshrl.u32 %v1639, 7
    %v1641 = vsub.s32 0, %v1640
    %v1642 = vrot.slane %v1603, %v1641
    %v1644 = vadd.f32 %v1636, %v1642
    %v1645 = vadd.f32 %v1637, %v1642
    %v1646 = vpack.c.bf16 %v1645, %v1644
    %s1647 = scalar_lea.vmem %s9, 16
    %v1648 = vld [vmem:[%s1647] sm:$0xf]
    %v1649 = vld [vmem:[%s1647 + $0x4] sm:$0xf]
    %v1650 = vld [vmem:[%s1647 + $0x8] sm:$0xf]
    %v1651 = vld [vmem:[%s1647 + $0xc] sm:$0xf]
    %s1652 = scalar_lea.vmem %s10, 1
    %v1653 = vld [vmem:[%s1652] sm:$0x1]
    %v1655 = vlaneseq
    %v1656 = vshrl.u32 %v1655, 7
    %v1657 = vsub.s32 0, %v1656
    %v1658 = vrot.slane %v1653, %v1657
    %v1664 = vunpack.c.l.b16 %v1648
    %v1665 = vunpack.c.l.b16 %v1649
    %v1666 = vunpack.c.l.b16 %v1650
    %v1667 = vunpack.c.l.b16 %v1651
    %v1668 = vpack.c.b16 %v1665, %v1664
    %v1669 = vpack.c.b16 %v1667, %v1666
    %v1673 = vsel %vm89, %v1646, 0
    %1675 = vmatprep.subr.bf16.mxu0 0
    %1676 = vmatpush1.bf16.msra.mxu0 %v1668
    %1677 = vmatprep.subr.bf16.mxu0 0
    %1678 = vmatpush1.bf16.msra.mxu0 %v1669
    %1679 = vmatprep.subr.bf16.mxu0 0
    %1680 = vmatpush1.bf16.msra.mxu0 0
    %1681 = vmatprep.subr.bf16.mxu0 0
    %1682 = vmatpush1.bf16.msra.mxu0 0
    %1683 = vmatprep.subr.bf16.mxu0 0
    %1684 = vmatpush1.bf16.msra.mxu0 0
    %1685 = vmatprep.subr.bf16.mxu0 0
    %1686 = vmatpush1.bf16.msra.mxu0 0
    %1687 = vmatprep.subr.bf16.mxu0 0
    %1688 = vmatpush1.bf16.msra.mxu0 0
    %1689 = vmatprep.subr.bf16.mxu0 0
    %1690 = vmatpush1.bf16.msra.mxu0 0
    %1691 = vmatprep.subr.bf16.mxu0 0
    %1692 = vmatpush1.bf16.msra.mxu0 0
    %1693 = vmatprep.subr.bf16.mxu0 0
    %1694 = vmatpush1.bf16.msra.mxu0 0
    %1695 = vmatprep.subr.bf16.mxu0 0
    %1696 = vmatpush1.bf16.msra.mxu0 0
    %1697 = vmatprep.subr.bf16.mxu0 0
    %1698 = vmatpush1.bf16.msra.mxu0 0
    %1699 = vmatprep.subr.bf16.mxu0 0
    %1700 = vmatpush1.bf16.msra.mxu0 0
    %1701 = vmatprep.subr.bf16.mxu0 0
    %1702 = vmatpush1.bf16.msra.mxu0 0
    %1703 = vmatprep.subr.bf16.mxu0 0
    %1704 = vmatpush1.bf16.msra.mxu0 0
    %1705 = vmatprep.subr.bf16.mxu0 0
    %1706 = vmatpush1.bf16.msra.mxu0 0
    %1707 = vmatprep.mubr.bf16.mxu0 0
    %1708 = vmatmul.mubr.bf16.gmra.mrb[0].mxu0 %v1673
    %v1709 = vpop.f32.mrb[0].mxu0
    %v1710 = vadd.f32 %v1658, %v1709
    %v1711 = vpop.f32.mrb[0].mxu0
    %v1712 = vpop.f32.mrb[0].mxu0
    %v1713 = vadd.f32 %v1658, %v1712
    %v1714 = vpop.f32.mrb[0].mxu0
    %1715 = vdwg.mxu0
    %v1716 = vmul.f32 %v1710, 0.5
    %v1717 = vmul.f32 %v1713, 0.5
    %v1718 = vmul.f32 %v1710, 0.044715
    %v1719 = vmul.f32 %v1713, 0.044715
    %v1720 = vmul.f32 %v1718, %v1710
    %v1721 = vmul.f32 %v1719, %v1713
    %v1722 = vmul.f32 %v1720, %v1710
    %v1723 = vmul.f32 %v1721, %v1713
    %v1724 = vadd.f32 %v1710, %v1722
    %v1725 = vadd.f32 %v1713, %v1723
    %v1726 = vmul.f32 %v1724, 0.7978846
    %v1727 = vmul.f32 %v1725, 0.7978846
    %v1728 = vtanh.pop %v1726
    %v1729 = vtanh.pop %v1727
    %v1730 = vadd.f32 %v1728, 1.0
    %v1731 = vadd.f32 %v1729, 1.0
    %v1732 = vmul.f32 %v1716, %v1730
    %v1733 = vmul.f32 %v1717, %v1731
    %v1734 = vpack.c.bf16 %v1733, %v1732
    %s1735 = scalar_lea.vmem %s11, 32
    %v1736 = vld [vmem:[%s1735] sm:$0xf]
    %v1737 = vld [vmem:[%s1735 + $0x4] sm:$0xf]
    %v1738 = vld [vmem:[%s1735 + $0x8] sm:$0xf]
    %v1739 = vld [vmem:[%s1735 + $0xc] sm:$0xf]
    %v1740 = vld [vmem:[%s1735 + $0x10] sm:$0xf]
    %v1741 = vld [vmem:[%s1735 + $0x14] sm:$0xf]
    %v1742 = vld [vmem:[%s1735 + $0x18] sm:$0xf]
    %v1743 = vld [vmem:[%s1735 + $0x1c] sm:$0xf]
    %s1744 = scalar_lea.vmem %s12, 1
    %v1745 = vld [vmem:[%s1744] sm:$0x1]
    %v1747 = vlaneseq
    %v1748 = vshrl.u32 %v1747, 7
    %v1749 = vsub.s32 0, %v1748
    %v1750 = vrot.slane %v1745, %v1749
    %v1760 = vunpack.c.l.b16 %v1736
    %v1761 = vunpack.c.l.b16 %v1737
    %v1762 = vunpack.c.l.b16 %v1738
    %v1763 = vunpack.c.l.b16 %v1739
    %v1764 = vunpack.c.l.b16 %v1740
    %v1765 = vunpack.c.l.b16 %v1741
    %v1766 = vunpack.c.l.b16 %v1742
    %v1767 = vunpack.c.l.b16 %v1743
    %v1768 = vpack.c.b16 %v1761, %v1760
    %v1769 = vpack.c.b16 %v1763, %v1762
    %v1770 = vpack.c.b16 %v1765, %v1764
    %v1771 = vpack.c.b16 %v1767, %v1766
    %v1777 = vsel %vm905, %v1734, 0
    %1779 = vmatprep.subr.bf16.mxu0 0
    %1780 = vmatpush1.bf16.msra.mxu0 %v1768
    %1781 = vmatprep.subr.bf16.mxu0 0
    %1782 = vmatpush1.bf16.msra.mxu0 %v1769
    %1783 = vmatprep.subr.bf16.mxu0 0
    %1784 = vmatpush1.bf16.msra.mxu0 %v1770
    %1785 = vmatprep.subr.bf16.mxu0 0
    %1786 = vmatpush1.bf16.msra.mxu0 %v1771
    %1787 = vmatprep.subr.bf16.mxu0 0
    %1788 = vmatpush1.bf16.msra.mxu0 0
    %1789 = vmatprep.subr.bf16.mxu0 0
    %1790 = vmatpush1.bf16.msra.mxu0 0
    %1791 = vmatprep.subr.bf16.mxu0 0
    %1792 = vmatpush1.bf16.msra.mxu0 0
    %1793 = vmatprep.subr.bf16.mxu0 0
    %1794 = vmatpush1.bf16.msra.mxu0 0
    %1795 = vmatprep.subr.bf16.mxu0 0
    %1796 = vmatpush1.bf16.msra.mxu0 0
    %1797 = vmatprep.subr.bf16.mxu0 0
    %1798 = vmatpush1.bf16.msra.mxu0 0
    %1799 = vmatprep.subr.bf16.mxu0 0
    %1800 = vmatpush1.bf16.msra.mxu0 0
    %1801 = vmatprep.subr.bf16.mxu0 0
    %1802 = vmatpush1.bf16.msra.mxu0 0
    %1803 = vmatprep.subr.bf16.mxu0 0
    %1804 = vmatpush1.bf16.msra.mxu0 0
    %1805 = vmatprep.subr.bf16.mxu0 0
    %1806 = vmatpush1.bf16.msra.mxu0 0
    %1807 = vmatprep.subr.bf16.mxu0 0
    %1808 = vmatpush1.bf16.msra.mxu0 0
    %1809 = vmatprep.subr.bf16.mxu0 0
    %1810 = vmatpush1.bf16.msra.mxu0 0
    %1811 = vmatprep.mubr.bf16.mxu0 0
    %1812 = vmatmul.mubr.bf16.gmra.mrb[0].mxu0 %v1777
    %v1813 = vpop.f32.mrb[0].mxu0
    %v1814 = vadd.f32 %v1750, %v1813
    %v1815 = vpop.f32.mrb[0].mxu0
    %v1816 = vpop.f32.mrb[0].mxu0
    %v1817 = vadd.f32 %v1750, %v1816
    %v1818 = vpop.f32.mrb[0].mxu0
    %1819 = vdwg.mxu0
    %v1820 = vadd.f32 %v1814, %v1644
    %v1821 = vadd.f32 %v1817, %v1645
    %s1822 = scalar_lea.vmem %s13, 1
    %v1823 = vld [vmem:[%s1822] sm:$0x1]
    %s1824 = scalar_lea.vmem %s14, 1
    %v1825 = vld [vmem:[%s1824] sm:$0x1]
    %v1826 = vsel %vm89, %v1820, 0.0
    %1827 = vadd.xlane.f32.xlu0 %v1826
    %v1828 = vpop.xlane.xlu0 %1827
    %v1829 = vsel %vm89, %v1821, 0.0
    %1830 = vadd.xlane.f32.xlu0 %v1829
    %v1831 = vpop.xlane.xlu0 %1830
    %v1832 = vmul.f32 %v1828, %v96
    %v1833 = vmul.f32 %v1831, %v96
    %v1834 = vsub.f32 %v1820, %v1832
    %v1835 = vsub.f32 %v1821, %v1833
    %v1836 = vmul.f32 %v1834, %v1834
    %v1837 = vmul.f32 %v1835, %v1835
    %v1838 = vsel %vm89, %v1836, 0.0
    %1839 = vadd.xlane.f32.xlu0 %v1838
    %v1840 = vpop.xlane.xlu0 %1839
    %v1841 = vsel %vm89, %v1837, 0.0
    %1842 = vadd.xlane.f32.xlu0 %v1841
    %v1843 = vpop.xlane.xlu0 %1842
    %v1844 = vmul.f32 %v1840, %v96
    %v1845 = vmul.f32 %v1843, %v96
    %v1846 = vadd.f32 %v1844, 1e-12
    %v1847 = vadd.f32 %v1845, 1e-12
    %v1848 = vrsqrt.pop %v1846
    %v1849 = vrsqrt.pop %v1847
    %v1850 = vmul.f32 %v1834, %v1848
    %v1851 = vmul.f32 %v1835, %v1849
    %v1853 = vlaneseq
    %v1854 = vshrl.u32 %v1853, 7
    %v1855 = vsub.s32 0, %v1854
    %v1856 = vrot.slane %v1823, %v1855
    %v1858 = vmul.f32 %v1850, %v1856
    %v1859 = vmul.f32 %v1851, %v1856
    %v1861 = vlaneseq
    %v1862 = vshrl.u32 %v1861, 7
    %v1863 = vsub.s32 0, %v1862
    %v1864 = vrot.slane %v1825, %v1863
    %v1866 = vadd.f32 %v1858, %v1864
    %v1867 = vadd.f32 %v1859, %v1864
    %v1869 = vrot.slane %v1867, 7
    %vm1871 = vcmask 1040384
    %v1872 = vsel %vm1871, %v1866, %v1869
    %vm1873 = vcmask 254976
    %1874 = vst.msk [vmem:[#allocation8] sm:$0x3] %vm1873, %v1872
    %v1875 = vpack.c.bf16 %v1872, %v1872
    %v1876 = vld [vmem:[%s15] sm:$0xf]
    %v1877 = vld [vmem:[%s15 + $0x4] sm:$0xf]
    %v1878 = vld [vmem:[%s15 + $0x8] sm:$0xf]
    %v1879 = vld [vmem:[%s15 + $0xc] sm:$0xf]
    %v1880 = vld [vmem:[%s16] sm:$0x1]
    %v1882 = vlaneseq
    %v1883 = vshrl.u32 %v1882, 7
    %v1884 = vsub.s32 0, %v1883
    %v1885 = vrot.slane %v1880, %v1884
    %v1891 = vunpack.c.l.b16 %v1876
    %v1892 = vunpack.c.l.b16 %v1877
    %v1893 = vunpack.c.l.b16 %v1878
    %v1894 = vunpack.c.l.b16 %v1879
    %v1895 = vpack.c.b16 %v1892, %v1891
    %v1896 = vpack.c.b16 %v1894, %v1893
    %v1900 = vsel %vm89, %v1875, 0
    %1902 = vmatprep.subr.bf16.mxu0 0
    %1903 = vmatpush1.bf16.msra.mxu0 %v1895
    %1904 = vmatprep.subr.bf16.mxu0 0
    %1905 = vmatpush1.bf16.msra.mxu0 %v1896
    %1906 = vmatprep.subr.bf16.mxu0 0
    %1907 = vmatpush1.bf16.msra.mxu0 0
    %1908 = vmatprep.subr.bf16.mxu0 0
    %1909 = vmatpush1.bf16.msra.mxu0 0
    %1910 = vmatprep.subr.bf16.mxu0 0
    %1911 = vmatpush1.bf16.msra.mxu0 0
    %1912 = vmatprep.subr.bf16.mxu0 0
    %1913 = vmatpush1.bf16.msra.mxu0 0
    %1914 = vmatprep.subr.bf16.mxu0 0
    %1915 = vmatpush1.bf16.msra.mxu0 0
    %1916 = vmatprep.subr.bf16.mxu0 0
    %1917 = vmatpush1.bf16.msra.mxu0 0
    %1918 = vmatprep.subr.bf16.mxu0 0
    %1919 = vmatpush1.bf16.msra.mxu0 0
    %1920 = vmatprep.subr.bf16.mxu0 0
    %1921 = vmatpush1.bf16.msra.mxu0 0
    %1922 = vmatprep.subr.bf16.mxu0 0
    %1923 = vmatpush1.bf16.msra.mxu0 0
    %1924 = vmatprep.subr.bf16.mxu0 0
    %1925 = vmatpush1.bf16.msra.mxu0 0
    %1926 = vmatprep.subr.bf16.mxu0 0
    %1927 = vmatpush1.bf16.msra.mxu0 0
    %1928 = vmatprep.subr.bf16.mxu0 0
    %1929 = vmatpush1.bf16.msra.mxu0 0
    %1930 = vmatprep.subr.bf16.mxu0 0
    %1931 = vmatpush1.bf16.msra.mxu0 0
    %1932 = vmatprep.subr.bf16.mxu0 0
    %1933 = vmatpush1.bf16.msra.mxu0 0
    %1934 = vmatprep.mubr.bf16.mxu0 0
    %1935 = vmatmul.mubr.bf16.gmra.mrb[0].mxu0 %v1900
    %v1936 = vpop.f32.mrb[0].mxu0
    %v1937 = vadd.f32 %v1885, %v1936
    %v1938 = vpop.f32.mrb[0].mxu0
    %v1939 = vpop.f32.mrb[0].mxu0
    %v1940 = vpop.f32.mrb[0].mxu0
    %1941 = vdwg.mxu0
    %v1942 = vtanh.pop %v1937
    %v1943 = vpack.c.bf16 %v1942, %v1942
    %v1944 = vld [vmem:[%s17] sm:$0xf]
    %v1945 = vld [vmem:[%s17 + $0x4] sm:$0xf]
    %v1946 = vld [vmem:[%s17 + $0x8] sm:$0xf]
    %v1947 = vld [vmem:[%s17 + $0xc] sm:$0xf]
    %v1948 = vld [vmem:[%s18] sm:$0x1]
    %v1950 = vlaneseq
    %v1951 = vshrl.u32 %v1950, 7
    %v1952 = vsub.s32 0, %v1951
    %v1953 = vrot.slane %v1948, %v1952
    %v1959 = vunpack.c.l.b16 %v1944
    %v1960 = vunpack.c.l.b16 %v1945
    %v1961 = vunpack.c.l.b16 %v1946
    %v1962 = vunpack.c.l.b16 %v1947
    %v1963 = vpack.c.b16 %v1960, %v1959
    %v1964 = vpack.c.b16 %v1962, %v1961
    %v1968 = vsel %vm89, %v1943, 0
    %1970 = vmatprep.subr.bf16.mxu0 0
    %1971 = vmatpush1.bf16.msra.mxu0 %v1963
    %1972 = vmatprep.subr.bf16.mxu0 0
    %1973 = vmatpush1.bf16.msra.mxu0 %v1964
    %1974 = vmatprep.subr.bf16.mxu0 0
    %1975 = vmatpush1.bf16.msra.mxu0 0
    %1976 = vmatprep.subr.bf16.mxu0 0
    %1977 = vmatpush1.bf16.msra.mxu0 0
    %1978 = vmatprep.subr.bf16.mxu0 0
    %1979 = vmatpush1.bf16.msra.mxu0 0
    %1980 = vmatprep.subr.bf16.mxu0 0
    %1981 = vmatpush1.bf16.msra.mxu0 0
    %1982 = vmatprep.subr.bf16.mxu0 0
    %1983 = vmatpush1.bf16.msra.mxu0 0
    %1984 = vmatprep.subr.bf16.mxu0 0
    %1985 = vmatpush1.bf16.msra.mxu0 0
    %1986 = vmatprep.subr.bf16.mxu0 0
    %1987 = vmatpush1.bf16.msra.mxu0 0
    %1988 = vmatprep.subr.bf16.mxu0 0
    %1989 = vmatpush1.bf16.msra.mxu0 0
    %1990 = vmatprep.subr.bf16.mxu0 0
    %1991 = vmatpush1.bf16.msra.mxu0 0
    %1992 = vmatprep.subr.bf16.mxu0 0
    %1993 = vmatpush1.bf16.msra.mxu0 0
    %1994 = vmatprep.subr.bf16.mxu0 0
    %1995 = vmatpush1.bf16.msra.mxu0 0
    %1996 = vmatprep.subr.bf16.mxu0 0
    %1997 = vmatpush1.bf16.msra.mxu0 0
    %1998 = vmatprep.subr.bf16.mxu0 0
    %1999 = vmatpush1.bf16.msra.mxu0 0
    %2000 = vmatprep.subr.bf16.mxu0 0
    %2001 = vmatpush1.bf16.msra.mxu0 0
    %2002 = vmatprep.mubr.bf16.mxu0 0
    %2003 = vmatmul.mubr.bf16.gmra.mrb[0].mxu0 %v1968
    %v2004 = vpop.f32.mrb[0].mxu0
    %v2005 = vadd.f32 %v1953, %v2004
    %v2006 = vpop.f32.mrb[0].mxu0
    %v2007 = vpop.f32.mrb[0].mxu0
    %v2008 = vpop.f32.mrb[0].mxu0
    %2009 = vdwg.mxu0
    %vm2010 = vcmask 9216
    %2011 = vst.msk [vmem:[#allocation5] sm:$0x3] %vm2010, %v2005
    %v2012 = vsel %vm2010, %v2005, -inf
    %2013 = vmax.xlane.f32.xlu0 %v2012
    %v2014 = vpop.xlane.xlu0 %2013
    %v2015 = vsub.f32 %v2005, %v2014
    %v2016 = vmul.f32 %v2015, 1.442695
    %v2017 = vpow.pop %v2016
    %v2018 = vsel %vm2010, %v2017, 0.0
    %2019 = vadd.xlane.f32.xlu0 %v2018
    %v2020 = vpop.xlane.xlu0 %2019
    %v2021 = vlog2.pop %v2020
    %v2022 = vmul.f32 %v2021, 0.6931472
    %v2023 = vadd.f32 %v2014, %v2022
    %v2024 = vsub.f32 %v2005, %v2023
    %v2025 = vlaneseq
    %v2026 = vand.u32 %v2025, 127
    %v2027 = vlaneseq
    %v2028 = vshrl.u32 %v2027, 7
    %vm2029 = vcmp.eq.s32.totalorder %v2028, 0
    %s2030 = sld [smem:[#allocation2]]
    %v2031 = vstv %s2030
    %vm2032 = vcmp.eq.s32.totalorder %v2026, %v2031
    %vm2033 = vmand %vm2029, %vm2032
    %v2034 = vsel %vm2033, 1.0, 0.0
    %vm2035 = vcmp.eq.s32.totalorder %v2028, 1
    %s2036 = sld [smem:[#allocation2 + $0x1]]
    %v2037 = vstv %s2036
    %vm2038 = vcmp.eq.s32.totalorder %v2026, %v2037
    %vm2039 = vmand %vm2035, %vm2038
    %v2040 = vsel %vm2039, 1.0, %v2034
    %v2041 = vmul.f32 %v2040, %v2024
    %v2042 = vsel %vm2010, %v2041, 0.0
    %2043 = vadd.xlane.f32.xlu0 %v2042
    %v2044 = vpop.xlane.xlu0 %2043
    %v2045 = vsub.f32 0.0, %v2044
    %vm2046 = vcmask 1041408
    %v2047 = vsel %vm2046, %v2045, 0.0
    %v2048 = vrot.slane %v2047, 4
    %v2049 = vadd.f32 %v2047, %v2048
    %v2050 = vrot.slane %v2049, 2
    %v2051 = vadd.f32 %v2049, %v2050
    %v2052 = vrot.slane %v2051, 1
    %v2053 = vadd.f32 %v2051, %v2052
    %v2054 = vmul.f32 %v2053, 0.5
    %vm2055 = vcmask 0
    %2056 = vst.msk [vmem:[#allocation6] sm:$0x1] %vm2055, %v2054
    // Predicated region
    $region86: #{_forward.1} parent=1 // pred_check
      _
    $region87: #{_forward.1} parent=1 // pred_check_branch
      %2058 = sbr.rel (0) target = $region89
    $region88: #{_forward.1} parent=1 // pred_region
      %s2060 = ssub.s32 32, 32
      %2061 = vsyncadd [#allocation3], %s2060
      %s2063 = sshll.u32 [#allocation5], 4
      %s2064 = int_to_ptr.vmem [resolvable:$true] %s2063
      %2066 = dma.vmem_to_hbm [thread:$0]  %s2064, 32, %s20, [#allocation3]
    $region89: #{_forward.1} parent=1 // pred_fallthru
      _
    // Predicated region
    $region90: #{_forward.1} parent=1 // pred_check
      _
    $region91: #{_forward.1} parent=1 // pred_check_branch
      %2068 = sbr.rel (0) target = $region93
    $region92: #{_forward.1} parent=1 // pred_region
      %s2070 = ssub.s32 16, 16
      %2071 = vsyncadd [#allocation7], %s2070
      %s2073 = sshll.u32 [#allocation6], 4
      %s2074 = int_to_ptr.vmem [resolvable:$true] %s2073
      %2076 = dma.vmem_to_hbm [thread:$0]  %s2074, 16, %s21, [#allocation7]
    $region93: #{_forward.1} parent=1 // pred_fallthru
      _
    // Predicated region
    $region94: #{_forward.1} parent=1 // pred_check
      _
    $region95: #{_forward.1} parent=1 // pred_check_branch
      %2078 = sbr.rel (0) target = $region97
    $region96: #{_forward.1} parent=1 // pred_region
      %s2080 = ssub.s32 32, 32
      %2081 = vsyncadd [#allocation7], %s2080
      %s2083 = sshll.u32 [#allocation8], 4
      %s2084 = int_to_ptr.vmem [resolvable:$true] %s2083
      %2086 = dma.vmem_to_hbm [thread:$0]  %s2084, 32, %s22, [#allocation7]
    $region97: #{_forward.1} parent=1 // pred_fallthru
      _
    // Predicated region
    $region98: #{_forward.1} parent=1 // pred_check
      _
    $region99: #{_forward.1} parent=1 // pred_check_branch
      %2088 = sbr.rel (0) target = $region101
    $region100: #{_forward.1} parent=1 // pred_region
      _
    $region101: #{_forward.1} parent=1 // pred_fallthru
      _
    // Predicated region
    $region102: #{_forward.1} parent=1 // pred_check
      _
    $region103: #{_forward.1} parent=1 // pred_check_branch
      %2090 = sbr.rel (0) target = $region105
    $region104: #{_forward.1} parent=1 // pred_region
      %2091 = dma.done [#allocation3], 32
    $region105: #{_forward.1} parent=1 // pred_fallthru
      _
    // Predicated region
    $region106: #{_forward.1} parent=1 // pred_check
      _
    $region107: #{_forward.1} parent=1 // pred_check_branch
      %2093 = sbr.rel (0) target = $region109
    $region108: #{_forward.1} parent=1 // pred_region
      %2094 = dma.done [#allocation7], 16
    $region109: #{_forward.1} parent=1 // pred_fallthru
      _
    // Predicated region
    $region110: #{_forward.1} parent=1 // pred_check
      _
    $region111: #{_forward.1} parent=1 // pred_check_branch
      %2096 = sbr.rel (0) target = $region113
    $region112: #{_forward.1} parent=1 // pred_region
      %2097 = dma.done [#allocation7], 32
    $region113: #{_forward.1} parent=1 // pred_fallthru
      _
    // Predicated region
    $region114: #{_forward.1} parent=1 // pred_check
      _
    $region115: #{_forward.1} parent=1 // pred_check_branch
      %2099 = sbr.rel (0) target = $region117
    $region116: #{_forward.1} parent=1 // pred_region
      _
    $region117: #{_forward.1} parent=1 // pred_fallthru
      _
    %2100 = vsyncpa [#allocation3], 1
    %2101 = vsyncpa [#allocation7], 1
    %2102 = vsyncpa [#allocation4], 1

</llo_original>
